<compile_context>
chip_gen: v6e
topology: v6e:2x2x1
jax: 0.10.0
libtpu: 0.0.40
codegen_flags: <defaults>
</compile_context>

<pallas_src>
import math
import functools

import numpy as np
import jax
import jax.numpy as jnp
from jax import lax
from jax.experimental import pallas as pl
from jax.experimental.pallas import tpu as pltpu

LN_EPS = 1e-5  # torch.nn.LayerNorm default


def _layernorm_f32(x, g, b):
    """LayerNorm over the last dim with f32 statistics (g, b are (1, E) f32)."""
    xf = x.astype(jnp.float32)
    mu = jnp.mean(xf, axis=-1, keepdims=True)
    var = jnp.mean((xf - mu) ** 2, axis=-1, keepdims=True)
    return (xf - mu) * lax.rsqrt(var + LN_EPS) * g + b


# ---------------- kernel A: LayerNorm1 + fused QKV projection (row tiled) ----------------

def ln_qkv_kernel(x_ref, g_ref, b_ref, wqkv_ref, bqkv_ref, qkv_ref, *, compute_dtype):
    # x: (TM, E) f32;  wqkv: (E, 3E) pre-transposed compute dtype;  out: (TM, 3E) cdt
    xn = _layernorm_f32(x_ref[...], g_ref[...], b_ref[...])
    acc = jnp.dot(xn.astype(compute_dtype), wqkv_ref[...],
                  preferred_element_type=jnp.float32) + bqkv_ref[...]
    qkv_ref[...] = acc.astype(qkv_ref.dtype)


# ---------------- kernel B: flash-style attention, one batch per step ----------------

def attn_kernel(q_ref, k_ref, v_ref, o_ref, m_sc, l_sc, acc_sc, *,
                scale, num_heads, head_dim, seq_len, kv_tile):
    # q_ref: (L, H, Dh); k_ref/v_ref: (TKV, H, Dh); o_ref: (L, E=H*Dh) lane-dense
    # scratch (f32): m_sc (L, H), l_sc (L, H), acc_sc (L, E)
    j = pl.program_id(1)

    @pl.when(j == 0)
    def _init():
        m_sc[...] = jnp.full(m_sc.shape, -jnp.inf, m_sc.dtype)
        l_sc[...] = jnp.zeros(l_sc.shape, l_sc.dtype)
        acc_sc[...] = jnp.zeros(acc_sc.shape, acc_sc.dtype)

    needs_mask = (seq_len % kv_tile) != 0
    if needs_mask:  # static: only emitted when the KV tile does not divide L
        base = j * kv_tile
        s_valid = (base + lax.broadcasted_iota(jnp.int32, (1, kv_tile), 1)) < seq_len
        v_valid = (base + lax.broadcasted_iota(jnp.int32, (kv_tile, 1), 0)) < seq_len

    # Online softmax per head (unrolled static loop; per-head matmuls hit the MXU the
    # same way a batched dot_general would, without 3-D relayouts).
    for h in range(num_heads):
        q = q_ref[:, h, :]                                 # (L, Dh)
        k = k_ref[:, h, :]                                 # (TKV, Dh)
        v = v_ref[:, h, :]                                 # (TKV, Dh)
        if needs_mask:
            v = jnp.where(v_valid, v, jnp.zeros((), v.dtype))
        # q @ k^T without an explicit transpose (contract last dims of both).
        s = lax.dot_general(q, k, (((1,), (1,)), ((), ())),
                            preferred_element_type=jnp.float32) * scale   # (L, TKV) f32
        if needs_mask:
            s = jnp.where(s_valid, s, -jnp.inf)
        m_prev = m_sc[:, h:h + 1]                          # (L, 1)
        m_new = jnp.maximum(m_prev, jnp.max(s, axis=-1, keepdims=True))
        alpha = jnp.exp(m_prev - m_new)                    # f32 softmax math
        p = jnp.exp(s - m_new)
        l_sc[:, h:h + 1] = alpha * l_sc[:, h:h + 1] + jnp.sum(p, axis=-1, keepdims=True)
        m_sc[:, h:h + 1] = m_new
        cs = slice(h * head_dim, (h + 1) * head_dim)
        acc_sc[:, cs] = alpha * acc_sc[:, cs] + jnp.dot(
            p.astype(v.dtype), v, preferred_element_type=jnp.float32)

    @pl.when(j == pl.num_programs(1) - 1)
    def _finish():
        for h in range(num_heads):
            cs = slice(h * head_dim, (h + 1) * head_dim)
            inv = pl.reciprocal(l_sc[:, h:h + 1], approx=True)   # EUP reciprocal
            o_ref[:, cs] = (acc_sc[:, cs] * inv).astype(o_ref.dtype)
    # TODO(synk): for very long L also tile the query dim (extra grid axis) and, if
    # profiling shows exposed K/V DMA, bump the K/V specs to pipeline_mode=pl.Buffered(3).


# ---------------- kernel C: out_proj + residual + LN2 + MLP + residual ----------------

def proj_mlp_kernel(a_ref, res_ref, wo_ref, bo_ref, g2_ref, b2_ref,
                    w1_ref, fb1_ref, w2_ref, fb2_ref, out_ref, *, compute_dtype):
    a = a_ref[...].astype(compute_dtype)
    proj = jnp.dot(a, wo_ref[...], preferred_element_type=jnp.float32) + bo_ref[...]
    x1 = proj + res_ref[...].astype(jnp.float32)            # residual 1 (dropout=0)
    y = _layernorm_f32(x1, g2_ref[...], b2_ref[...])         # norm2 (f32 stats)
    h = jnp.maximum(
        jnp.dot(y.astype(compute_dtype), w1_ref[...],
                preferred_element_type=jnp.float32) + fb1_ref[...],
        0.0,
    )                                                        # fc1 + ReLU
    out = (jnp.dot(h.astype(compute_dtype), w2_ref[...],
                   preferred_element_type=jnp.float32) + fb2_ref[...]) + x1
    out_ref[...] = out.astype(out_ref.dtype)                 # fc2 + residual 2
    # TODO(synk): on v7x (64 MiB VMEM, 32 MiB default scoped) with large E, mark the
    # grid-invariant weight specs pipeline_mode=pl.Buffered(1) and/or split the MLP into
    # an M-tiled pallas_call so resident weights stop competing with row-tile buffers.


# ---------------- helpers ----------------

def _row_tile(T, row_tile, min_steps=2):
    """Row tile: as big as requested, but keep >=2 grid steps (v7x megacore sharding)."""
    tm = max(8, min(row_tile, T))
    if pl.cdiv(T, tm) < min_steps and T >= 16 * min_steps:
        tm = -(-T // min_steps)          # ceil
        tm = -(-tm // 16) * 16           # round up to a sublane/bf16-friendly multiple
    return tm


def _vmem_limit_bytes(*, E, M, T_tile, L, TKV, H, cdt_bytes):
    """Rough per-kernel VMEM footprint -> explicit vmem_limit_bytes hint."""
    f32 = 4
    a = (E * 3 * E * cdt_bytes                       # resident qkv weight
         + 2 * (T_tile * E * f32 + T_tile * 3 * E * cdt_bytes))
    b = (L * E * cdt_bytes                           # resident q (one batch, all heads)
         + 2 * 2 * TKV * E * cdt_bytes               # double-buffered k, v tiles
         + 2 * L * E * cdt_bytes                     # output block
         + L * E * f32 + 2 * L * H * f32             # acc / m / l scratch
         + 2 * L * TKV * f32)                        # per-head score temporaries
    c = ((E * E + E * M + M * E) * cdt_bytes         # resident wo / w1 / w2
         + 2 * (T_tile * E * cdt_bytes + 2 * T_tile * E * f32)
         + T_tile * M * f32)                         # fc1 activation
    need = 2 * max(a, b, c) + (4 << 20)              # weight double-buffer + headroom
    try:
        cap = int(pltpu.get_tpu_info().vmem_capacity_bytes)
    except Exception:
        cap = 64 << 20                               # v7x-safe fallback
    return int(min(max(need, 32 << 20), (cap * 3) // 4))


# ---------------- one-time weight preparation (hoisted out of the per-call path) ----------------

def prepare_params(params, compute_dtype=jnp.bfloat16):
    """Pre-transpose (K-major for the MXU) and pre-cast the matmul weights once."""
    cdt = compute_dtype
    f32 = jnp.float32
    return dict(
        g1=params["g1"].astype(f32), b1=params["b1"].astype(f32),
        wqkv_t=params["w_qkv"].T.astype(cdt), b_qkv=params["b_qkv"].astype(f32),
        wo_t=params["w_o"].T.astype(cdt), b_o=params["b_o"].astype(f32),
        g2=params["g2"].astype(f32), b2=params["b2"].astype(f32),
        w1_t=params["w1"].T.astype(cdt), fb1=params["fb1"].astype(f32),
        w2_t=params["w2"].T.astype(cdt), fb2=params["fb2"].astype(f32),
    )


# ---------------- wrapper ----------------

def encoder_block(x, prepared, num_heads, *, row_tile=512, kv_tile=256):
    L, N, E = x.shape
    T = L * N
    H = num_heads
    assert E % H == 0, "embed dim must be divisible by num_heads"
    Dh = E // H
    # Lane-dense attention output (block width E over a (L, N*E) buffer) needs E % 128 == 0
    # unless there is a single batch (then the block spans the full last dim).
    assert (E % 128 == 0) or (N == 1), "E must be a multiple of 128 (lane width) when N > 1"
    scale = 1.0 / math.sqrt(Dh)

    cdt = prepared["wqkv_t"].dtype
    cdt_bytes = jnp.dtype(cdt).itemsize
    M = prepared["w1_t"].shape[1]

    x2 = x.reshape(T, E).astype(jnp.float32)

    TM = _row_tile(T, row_tile)
    TKV = min(kv_tile, L)

    vmem_limit = _vmem_limit_bytes(E=E, M=M, T_tile=TM, L=L, TKV=TKV, H=H,
                                   cdt_bytes=cdt_bytes)
    cp_rows = pltpu.CompilerParams(dimension_semantics=("parallel",),
                                   vmem_limit_bytes=vmem_limit)
    cp_attn = pltpu.CompilerParams(dimension_semantics=("parallel", "arbitrary"),
                                   vmem_limit_bytes=vmem_limit)

    def row_spec(cols):
        return pl.BlockSpec((TM, cols), lambda i: (i, 0))

    def const_spec(shape):
        return pl.BlockSpec(shape, lambda i: (0,) * len(shape))   # resident weight / bias

    # --- kernel A: LayerNorm1 + fused QKV projection ---
    qkv = pl.pallas_call(
        functools.partial(ln_qkv_kernel, compute_dtype=cdt),
        out_shape=jax.ShapeDtypeStruct((T, 3 * E), cdt),
        grid=(pl.cdiv(T, TM),),
        in_specs=[row_spec(E), const_spec((1, E)), const_spec((1, E)),
                  const_spec((E, 3 * E)), const_spec((1, 3 * E))],
        out_specs=row_spec(3 * E),
        compiler_params=cp_rows,
    )(x2, prepared["g1"], prepared["b1"], prepared["wqkv_t"], prepared["b_qkv"])

    # Free reshape (no HBM transpose): (T, 3E) -> (L, N, 3, H, Dh)
    qkv5 = qkv.reshape(L, N, 3, H, Dh)

    # --- kernel B: per-batch flash attention over KV tiles ---
    q_spec = pl.BlockSpec((L, None, None, H, Dh), lambda n, j: (0, n, 0, 0, 0))
    k_spec = pl.BlockSpec((TKV, None, None, H, Dh), lambda n, j: (j, n, 1, 0, 0))
    v_spec = pl.BlockSpec((TKV, None, None, H, Dh), lambda n, j: (j, n, 2, 0, 0))
    o_spec = pl.BlockSpec((L, E), lambda n, j: (0, n))    # lane-dense (L, E) per batch

    attn = pl.pallas_call(
        functools.partial(attn_kernel, scale=scale, num_heads=H, head_dim=Dh,
                          seq_len=L, kv_tile=TKV),
        out_shape=jax.ShapeDtypeStruct((L, N * E), cdt),
        grid=(N, pl.cdiv(L, TKV)),
        in_specs=[q_spec, k_spec, v_spec],
        out_specs=o_spec,
        scratch_shapes=[pltpu.VMEM((L, H), jnp.float32),
                        pltpu.VMEM((L, H), jnp.float32),
                        pltpu.VMEM((L, E), jnp.float32)],
        compiler_params=cp_attn,
    )(qkv5, qkv5, qkv5)

    # Free reshape: (L, N*E) -> (T, E)  (head merge already lane-dense, no transpose)
    attn2 = attn.reshape(T, E)

    # --- kernel C: out_proj + residual + LayerNorm2 + MLP + residual ---
    out2 = pl.pallas_call(
        functools.partial(proj_mlp_kernel, compute_dtype=cdt),
        out_shape=jax.ShapeDtypeStruct((T, E), jnp.float32),
        grid=(pl.cdiv(T, TM),),
        in_specs=[row_spec(E), row_spec(E),
                  const_spec((E, E)), const_spec((1, E)),
                  const_spec((1, E)), const_spec((1, E)),
                  const_spec((E, M)), const_spec((1, M)),
                  const_spec((M, E)), const_spec((1, E))],
        out_specs=row_spec(E),
        compiler_params=cp_rows,
    )(attn2, x2, prepared["wo_t"], prepared["b_o"], prepared["g2"], prepared["b2"],
      prepared["w1_t"], prepared["fb1"], prepared["w2_t"], prepared["fb2"])

    return out2.reshape(L, N, E)


# ---------------- deterministic parameter init ----------------

def init_params(key, E, mlp_dim):
    ks = jax.random.split(key, 4)

    def kaiming(k, shape):  # kaiming_normal_: std = sqrt(2 / fan_in), fan_in = shape[1]
        return jax.random.normal(k, shape, jnp.float32) * np.float32(np.sqrt(2.0 / shape[1]))

    w_qkv = jax.random.normal(ks[0], (3 * E, E), jnp.float32) * np.float32(np.sqrt(1.0 / E))
    w_o = jax.random.normal(ks[1], (E, E), jnp.float32) * np.float32(np.sqrt(1.0 / E))
    return dict(
        g1=jnp.ones((1, E), jnp.float32), b1=jnp.zeros((1, E), jnp.float32),
        w_qkv=w_qkv, b_qkv=jnp.zeros((1, 3 * E), jnp.float32),
        w_o=w_o, b_o=jnp.zeros((1, E), jnp.float32),
        g2=jnp.ones((1, E), jnp.float32), b2=jnp.zeros((1, E), jnp.float32),
        w1=kaiming(ks[2], (mlp_dim, E)), fb1=jnp.zeros((1, mlp_dim), jnp.float32),
        w2=kaiming(ks[3], (E, mlp_dim)), fb2=jnp.zeros((1, E), jnp.float32),
    )


# ---------------- pure-JAX reference (for correctness check) ----------------

def reference(x, params, num_heads):
    L, N, E = x.shape
    H = num_heads
    Dh = E // H

    def ln(v, g, b):
        mu = v.mean(-1, keepdims=True)
        var = ((v - mu) ** 2).mean(-1, keepdims=True)
        return (v - mu) / jnp.sqrt(var + LN_EPS) * g[0] + b[0]

    res = x
    xn = ln(x, params["g1"], params["b1"])
    qkv = xn @ params["w_qkv"].T + params["b_qkv"][0]
    q, k, v = jnp.split(qkv, 3, axis=-1)
    qh = q.reshape(L, N, H, Dh).transpose(1, 2, 0, 3)
    kh = k.reshape(L, N, H, Dh).transpose(1, 2, 0, 3)
    vh = v.reshape(L, N, H, Dh).transpose(1, 2, 0, 3)
    s = jnp.einsum('nhld,nhmd->nhlm', qh, kh) / math.sqrt(Dh)
    p = jax.nn.softmax(s, axis=-1)
    o = jnp.einsum('nhlm,nhmd->nhld', p, vh).transpose(2, 0, 1, 3).reshape(L, N, E)
    proj = o @ params["w_o"].T + params["b_o"][0]
    x1 = proj + res
    y = ln(x1, params["g2"], params["b2"])
    h = jax.nn.relu(y @ params["w1"].T + params["fb1"][0])
    return h @ params["w2"].T + params["fb2"][0] + x1


if __name__ == "__main__":
    # seq=16, batch=4, hidden=128, 4 heads (Dh=32), mlp=256  ->  T=64 tokens
    L, N, E, H, MLP = 16, 4, 128, 4, 256
    key = jax.random.PRNGKey(0)
    kx, kp = jax.random.split(key)
    x = jax.random.normal(kx, (L, N, E), jnp.float32)
    params = init_params(kp, E, MLP)

    ref = jax.block_until_ready(reference(x, params, H))

    # f32 compute path; small tiles exercise the multi-step row grid and 2 KV steps.
    prep_f32 = prepare_params(params, jnp.float32)
    f32_fn = jax.jit(functools.partial(encoder_block, num_heads=H, row_tile=32, kv_tile=8))
    out_f32 = jax.block_until_ready(f32_fn(x, prep_f32))
    assert out_f32.shape == (L, N, E)
    err = float(np.max(np.abs(np.asarray(out_f32) - np.asarray(ref))))
    assert np.allclose(np.asarray(out_f32), np.asarray(ref), atol=5e-3, rtol=5e-3), err

    # f32 path with a KV tile that does NOT divide L (exercises the tail-mask path).
    mask_fn = jax.jit(functools.partial(encoder_block, num_heads=H, row_tile=32, kv_tile=12))
    out_mask = jax.block_until_ready(mask_fn(x, prep_f32))
    err_m = float(np.max(np.abs(np.asarray(out_mask) - np.asarray(ref))))
    assert np.allclose(np.asarray(out_mask), np.asarray(ref), atol=5e-3, rtol=5e-3), err_m

    # Default path: bf16 matmul inputs (f32 accumulation / LN / softmax); loose tolerance.
    prep_bf16 = prepare_params(params)                     # bf16 is the default
    bf16_fn = jax.jit(functools.partial(encoder_block, num_heads=H))
    out_bf16 = jax.block_until_ready(bf16_fn(x, prep_bf16))
    err_bf = float(np.max(np.abs(np.asarray(out_bf16) - np.asarray(ref))))
    assert np.allclose(np.asarray(out_bf16), np.asarray(ref), atol=3e-1, rtol=1e-1), err_bf

    print("KERNEL_OK")
</pallas_src>

<mosaic_0001>
module attributes {stable_mosaic.version = 11 : i64} {
  func.func @attn_kernel(%arg0: i32, %arg1: i32, %arg2: memref<16x1x1x4x32xf32, #tpu.memory_space<vmem>>, %arg3: memref<8x1x1x4x32xf32, #tpu.memory_space<vmem>>, %arg4: memref<8x1x1x4x32xf32, #tpu.memory_space<vmem>>, %arg5: memref<16x128xf32, #tpu.memory_space<vmem>>, %arg6: memref<16x4xf32, #tpu.memory_space<vmem>>, %arg7: memref<16x4xf32, #tpu.memory_space<vmem>>, %arg8: memref<16x128xf32, #tpu.memory_space<vmem>>) attributes {dimension_semantics = [#tpu.dimension_semantics<parallel>, #tpu.dimension_semantics<arbitrary>], iteration_bounds = array<i64: 4, 2>, scalar_prefetch = 0 : i64, scratch_operands = 3 : i64, tpu.core_type = #tpu.core_type<tc>, window_params = [{transform_indices = @transform_0, window_bounds = array<i64: 16, 1, 1, 4, 32>}, {transform_indices = @transform_1, window_bounds = array<i64: 8, 1, 1, 4, 32>}, {transform_indices = @transform_2, window_bounds = array<i64: 8, 1, 1, 4, 32>}, {transform_indices = @transform_3, window_bounds = array<i64: 16, 128>}]} {
    %c0_i32 = arith.constant 0 : i32
    %0 = arith.cmpi eq, %arg1, %c0_i32 : i32
    %1 = arith.extui %0 : i1 to i32
    %c0_i32_0 = arith.constant 0 : i32
    %2 = arith.cmpi ne, %1, %c0_i32_0 : i32
    scf.if %2 {
      %cst_122 = arith.constant 0xFF800000 : f32
      %130 = vector.broadcast %cst_122 : f32 to vector<16x4xf32>
      %c0_123 = arith.constant 0 : index
      %c0_124 = arith.constant 0 : index
      %131 = vector.load %arg6[%c0_123, %c0_124] : memref<16x4xf32, #tpu.memory_space<vmem>>, vector<16x4xf32>
      tpu.vector_store %arg6[%c0_123, %c0_124], %130 {strides = array<i32>} : memref<16x4xf32, #tpu.memory_space<vmem>>, vector<16x4xf32>,
      %cst_125 = arith.constant 0.000000e+00 : f32
      %132 = vector.broadcast %cst_125 : f32 to vector<16x4xf32>
      %c0_126 = arith.constant 0 : index
      %c0_127 = arith.constant 0 : index
      %133 = vector.load %arg7[%c0_126, %c0_127] : memref<16x4xf32, #tpu.memory_space<vmem>>, vector<16x4xf32>
      tpu.vector_store %arg7[%c0_126, %c0_127], %132 {strides = array<i32>} : memref<16x4xf32, #tpu.memory_space<vmem>>, vector<16x4xf32>,
      %cst_128 = arith.constant 0.000000e+00 : f32
      %134 = vector.broadcast %cst_128 : f32 to vector<16x128xf32>
      %c0_129 = arith.constant 0 : index
      %c0_130 = arith.constant 0 : index
      %135 = vector.load %arg8[%c0_129, %c0_130] : memref<16x128xf32, #tpu.memory_space<vmem>>, vector<16x128xf32>
      tpu.vector_store %arg8[%c0_129, %c0_130], %134 {strides = array<i32>} : memref<16x128xf32, #tpu.memory_space<vmem>>, vector<16x128xf32>,
    } else {
    }
    %c0 = arith.constant 0 : index
    %c0_1 = arith.constant 0 : index
    %c0_2 = arith.constant 0 : index
    %c0_3 = arith.constant 0 : index
    %c0_4 = arith.constant 0 : index
    %3 = vector.load %arg2[%c0, %c0_1, %c0_2, %c0_3, %c0_4] : memref<16x1x1x4x32xf32, #tpu.memory_space<vmem>>, vector<16x1x1x1x32xf32>
    %4 = vector.shape_cast %3 : vector<16x1x1x1x32xf32> to vector<16x32xf32>
    %c0_5 = arith.constant 0 : index
    %c0_6 = arith.constant 0 : index
    %c0_7 = arith.constant 0 : index
    %c0_8 = arith.constant 0 : index
    %c0_9 = arith.constant 0 : index
    %5 = vector.load %arg3[%c0_5, %c0_6, %c0_7, %c0_8, %c0_9] : memref<8x1x1x4x32xf32, #tpu.memory_space<vmem>>, vector<8x1x1x1x32xf32>
    %6 = vector.shape_cast %5 : vector<8x1x1x1x32xf32> to vector<8x32xf32>
    %c0_10 = arith.constant 0 : index
    %c0_11 = arith.constant 0 : index
    %c0_12 = arith.constant 0 : index
    %c0_13 = arith.constant 0 : index
    %c0_14 = arith.constant 0 : index
    %7 = vector.load %arg4[%c0_10, %c0_11, %c0_12, %c0_13, %c0_14] : memref<8x1x1x4x32xf32, #tpu.memory_space<vmem>>, vector<8x1x1x1x32xf32>
    %8 = vector.shape_cast %7 : vector<8x1x1x1x32xf32> to vector<8x32xf32>
    %cst = arith.constant dense<0.000000e+00> : vector<16x8xf32>
    %9 = tpu.matmul %4, %6, %cst {dimension_numbers = #tpu.dot_dimension_numbers<[1], [1], [0], [0], [0, 0, 1, 0], [], []>} : vector<16x32xf32>, vector<8x32xf32>, vector<16x8xf32> -> vector<16x8xf32>
    %cst_15 = arith.constant 0.176776692 : f32
    %10 = vector.broadcast %cst_15 : f32 to vector<16x8xf32>
    %11 = arith.mulf %9, %10 : vector<16x8xf32>
    %c0_16 = arith.constant 0 : index
    %c0_17 = arith.constant 0 : index
    %12 = vector.load %arg6[%c0_16, %c0_17] : memref<16x4xf32, #tpu.memory_space<vmem>>, vector<16x1xf32>
    %cst_18 = arith.constant dense<0xFF800000> : vector<16xf32>
    %13 = vector.multi_reduction <maximumf>, %11, %cst_18 [1] : vector<16x8xf32> to vector<16xf32>
    %14 = vector.shape_cast %13 : vector<16xf32> to vector<16x1xf32>
    %15 = arith.maximumf %12, %14 : vector<16x1xf32>
    %16 = arith.subf %12, %15 : vector<16x1xf32>
    %17 = math.exp %16 : vector<16x1xf32>
    %18 = vector.broadcast %15 : vector<16x1xf32> to vector<16x8xf32>
    %19 = arith.subf %11, %18 : vector<16x8xf32>
    %20 = math.exp %19 : vector<16x8xf32>
    %c0_19 = arith.constant 0 : index
    %c0_20 = arith.constant 0 : index
    %21 = vector.load %arg7[%c0_19, %c0_20] : memref<16x4xf32, #tpu.memory_space<vmem>>, vector<16x1xf32>
    %22 = arith.mulf %17, %21 : vector<16x1xf32>
    %cst_21 = arith.constant dense<0.000000e+00> : vector<16xf32>
    %23 = vector.multi_reduction <add>, %20, %cst_21 [1] : vector<16x8xf32> to vector<16xf32>
    %24 = vector.shape_cast %23 : vector<16xf32> to vector<16x1xf32>
    %25 = arith.addf %22, %24 : vector<16x1xf32>
    %c0_22 = arith.constant 0 : index
    %c0_23 = arith.constant 0 : index
    %26 = vector.load %arg7[%c0_22, %c0_23] : memref<16x4xf32, #tpu.memory_space<vmem>>, vector<16x1xf32>
    tpu.vector_store %arg7[%c0_22, %c0_23], %25 {strides = array<i32>} : memref<16x4xf32, #tpu.memory_space<vmem>>, vector<16x1xf32>,
    %c0_24 = arith.constant 0 : index
    %c0_25 = arith.constant 0 : index
    %27 = vector.load %arg6[%c0_24, %c0_25] : memref<16x4xf32, #tpu.memory_space<vmem>>, vector<16x1xf32>
    tpu.vector_store %arg6[%c0_24, %c0_25], %15 {strides = array<i32>} : memref<16x4xf32, #tpu.memory_space<vmem>>, vector<16x1xf32>,
    %c0_26 = arith.constant 0 : index
    %c0_27 = arith.constant 0 : index
    %28 = vector.load %arg8[%c0_26, %c0_27] : memref<16x128xf32, #tpu.memory_space<vmem>>, vector<16x32xf32>
    %29 = vector.broadcast %17 : vector<16x1xf32> to vector<16x32xf32>
    %30 = arith.mulf %29, %28 : vector<16x32xf32>
    %cst_28 = arith.constant dense<0.000000e+00> : vector<16x32xf32>
    %31 = tpu.matmul %20, %8, %cst_28 {dimension_numbers = #tpu.dot_dimension_numbers<[1], [0], [0], [1], [0, 0, 1, 1], [], []>} : vector<16x8xf32>, vector<8x32xf32>, vector<16x32xf32> -> vector<16x32xf32>
    %32 = arith.addf %30, %31 : vector<16x32xf32>
    %c0_29 = arith.constant 0 : index
    %c0_30 = arith.constant 0 : index
    %33 = vector.load %arg8[%c0_29, %c0_30] : memref<16x128xf32, #tpu.memory_space<vmem>>, vector<16x32xf32>
    tpu.vector_store %arg8[%c0_29, %c0_30], %32 {strides = array<i32>} : memref<16x128xf32, #tpu.memory_space<vmem>>, vector<16x32xf32>,
    %c0_31 = arith.constant 0 : index
    %c0_32 = arith.constant 0 : index
    %c0_33 = arith.constant 0 : index
    %c1 = arith.constant 1 : index
    %c0_34 = arith.constant 0 : index
    %34 = vector.load %arg2[%c0_31, %c0_32, %c0_33, %c1, %c0_34] : memref<16x1x1x4x32xf32, #tpu.memory_space<vmem>>, vector<16x1x1x1x32xf32>
    %35 = vector.shape_cast %34 : vector<16x1x1x1x32xf32> to vector<16x32xf32>
    %c0_35 = arith.constant 0 : index
    %c0_36 = arith.constant 0 : index
    %c0_37 = arith.constant 0 : index
    %c1_38 = arith.constant 1 : index
    %c0_39 = arith.constant 0 : index
    %36 = vector.load %arg3[%c0_35, %c0_36, %c0_37, %c1_38, %c0_39] : memref<8x1x1x4x32xf32, #tpu.memory_space<vmem>>, vector<8x1x1x1x32xf32>
    %37 = vector.shape_cast %36 : vector<8x1x1x1x32xf32> to vector<8x32xf32>
    %c0_40 = arith.constant 0 : index
    %c0_41 = arith.constant 0 : index
    %c0_42 = arith.constant 0 : index
    %c1_43 = arith.constant 1 : index
    %c0_44 = arith.constant 0 : index
    %38 = vector.load %arg4[%c0_40, %c0_41, %c0_42, %c1_43, %c0_44] : memref<8x1x1x4x32xf32, #tpu.memory_space<vmem>>, vector<8x1x1x1x32xf32>
    %39 = vector.shape_cast %38 : vector<8x1x1x1x32xf32> to vector<8x32xf32>
    %cst_45 = arith.constant dense<0.000000e+00> : vector<16x8xf32>
    %40 = tpu.matmul %35, %37, %cst_45 {dimension_numbers = #tpu.dot_dimension_numbers<[1], [1], [0], [0], [0, 0, 1, 0], [], []>} : vector<16x32xf32>, vector<8x32xf32>, vector<16x8xf32> -> vector<16x8xf32>
    %cst_46 = arith.constant 0.176776692 : f32
    %41 = vector.broadcast %cst_46 : f32 to vector<16x8xf32>
    %42 = arith.mulf %40, %41 : vector<16x8xf32>
    %c0_47 = arith.constant 0 : index
    %c1_48 = arith.constant 1 : index
    %43 = vector.load %arg6[%c0_47, %c1_48] : memref<16x4xf32, #tpu.memory_space<vmem>>, vector<16x1xf32>
    %cst_49 = arith.constant dense<0xFF800000> : vector<16xf32>
    %44 = vector.multi_reduction <maximumf>, %42, %cst_49 [1] : vector<16x8xf32> to vector<16xf32>
    %45 = vector.shape_cast %44 : vector<16xf32> to vector<16x1xf32>
    %46 = arith.maximumf %43, %45 : vector<16x1xf32>
    %47 = arith.subf %43, %46 : vector<16x1xf32>
    %48 = math.exp %47 : vector<16x1xf32>
    %49 = vector.broadcast %46 : vector<16x1xf32> to vector<16x8xf32>
    %50 = arith.subf %42, %49 : vector<16x8xf32>
    %51 = math.exp %50 : vector<16x8xf32>
    %c0_50 = arith.constant 0 : index
    %c1_51 = arith.constant 1 : index
    %52 = vector.load %arg7[%c0_50, %c1_51] : memref<16x4xf32, #tpu.memory_space<vmem>>, vector<16x1xf32>
    %53 = arith.mulf %48, %52 : vector<16x1xf32>
    %cst_52 = arith.constant dense<0.000000e+00> : vector<16xf32>
    %54 = vector.multi_reduction <add>, %51, %cst_52 [1] : vector<16x8xf32> to vector<16xf32>
    %55 = vector.shape_cast %54 : vector<16xf32> to vector<16x1xf32>
    %56 = arith.addf %53, %55 : vector<16x1xf32>
    %c0_53 = arith.constant 0 : index
    %c1_54 = arith.constant 1 : index
    %57 = vector.load %arg7[%c0_53, %c1_54] : memref<16x4xf32, #tpu.memory_space<vmem>>, vector<16x1xf32>
    tpu.vector_store %arg7[%c0_53, %c1_54], %56 {strides = array<i32>} : memref<16x4xf32, #tpu.memory_space<vmem>>, vector<16x1xf32>,
    %c0_55 = arith.constant 0 : index
    %c1_56 = arith.constant 1 : index
    %58 = vector.load %arg6[%c0_55, %c1_56] : memref<16x4xf32, #tpu.memory_space<vmem>>, vector<16x1xf32>
    tpu.vector_store %arg6[%c0_55, %c1_56], %46 {strides = array<i32>} : memref<16x4xf32, #tpu.memory_space<vmem>>, vector<16x1xf32>,
    %c0_57 = arith.constant 0 : index
    %c32 = arith.constant 32 : index
    %59 = vector.load %arg8[%c0_57, %c32] : memref<16x128xf32, #tpu.memory_space<vmem>>, vector<16x32xf32>
    %60 = vector.broadcast %48 : vector<16x1xf32> to vector<16x32xf32>
    %61 = arith.mulf %60, %59 : vector<16x32xf32>
    %cst_58 = arith.constant dense<0.000000e+00> : vector<16x32xf32>
    %62 = tpu.matmul %51, %39, %cst_58 {dimension_numbers = #tpu.dot_dimension_numbers<[1], [0], [0], [1], [0, 0, 1, 1], [], []>} : vector<16x8xf32>, vector<8x32xf32>, vector<16x32xf32> -> vector<16x32xf32>
    %63 = arith.addf %61, %62 : vector<16x32xf32>
    %c0_59 = arith.constant 0 : index
    %c32_60 = arith.constant 32 : index
    %64 = vector.load %arg8[%c0_59, %c32_60] : memref<16x128xf32, #tpu.memory_space<vmem>>, vector<16x32xf32>
    tpu.vector_store %arg8[%c0_59, %c32_60], %63 {strides = array<i32>} : memref<16x128xf32, #tpu.memory_space<vmem>>, vector<16x32xf32>,
    %c0_61 = arith.constant 0 : index
    %c0_62 = arith.constant 0 : index
    %c0_63 = arith.constant 0 : index
    %c2 = arith.constant 2 : index
    %c0_64 = arith.constant 0 : index
    %65 = vector.load %arg2[%c0_61, %c0_62, %c0_63, %c2, %c0_64] : memref<16x1x1x4x32xf32, #tpu.memory_space<vmem>>, vector<16x1x1x1x32xf32>
    %66 = vector.shape_cast %65 : vector<16x1x1x1x32xf32> to vector<16x32xf32>
    %c0_65 = arith.constant 0 : index
    %c0_66 = arith.constant 0 : index
    %c0_67 = arith.constant 0 : index
    %c2_68 = arith.constant 2 : index
    %c0_69 = arith.constant 0 : index
    %67 = vector.load %arg3[%c0_65, %c0_66, %c0_67, %c2_68, %c0_69] : memref<8x1x1x4x32xf32, #tpu.memory_space<vmem>>, vector<8x1x1x1x32xf32>
    %68 = vector.shape_cast %67 : vector<8x1x1x1x32xf32> to vector<8x32xf32>
    %c0_70 = arith.constant 0 : index
    %c0_71 = arith.constant 0 : index
    %c0_72 = arith.constant 0 : index
    %c2_73 = arith.constant 2 : index
    %c0_74 = arith.constant 0 : index
    %69 = vector.load %arg4[%c0_70, %c0_71, %c0_72, %c2_73, %c0_74] : memref<8x1x1x4x32xf32, #tpu.memory_space<vmem>>, vector<8x1x1x1x32xf32>
    %70 = vector.shape_cast %69 : vector<8x1x1x1x32xf32> to vector<8x32xf32>
    %cst_75 = arith.constant dense<0.000000e+00> : vector<16x8xf32>
    %71 = tpu.matmul %66, %68, %cst_75 {dimension_numbers = #tpu.dot_dimension_numbers<[1], [1], [0], [0], [0, 0, 1, 0], [], []>} : vector<16x32xf32>, vector<8x32xf32>, vector<16x8xf32> -> vector<16x8xf32>
    %cst_76 = arith.constant 0.176776692 : f32
    %72 = vector.broadcast %cst_76 : f32 to vector<16x8xf32>
    %73 = arith.mulf %71, %72 : vector<16x8xf32>
    %c0_77 = arith.constant 0 : index
    %c2_78 = arith.constant 2 : index
    %74 = vector.load %arg6[%c0_77, %c2_78] : memref<16x4xf32, #tpu.memory_space<vmem>>, vector<16x1xf32>
    %cst_79 = arith.constant dense<0xFF800000> : vector<16xf32>
    %75 = vector.multi_reduction <maximumf>, %73, %cst_79 [1] : vector<16x8xf32> to vector<16xf32>
    %76 = vector.shape_cast %75 : vector<16xf32> to vector<16x1xf32>
    %77 = arith.maximumf %74, %76 : vector<16x1xf32>
    %78 = arith.subf %74, %77 : vector<16x1xf32>
    %79 = math.exp %78 : vector<16x1xf32>
    %80 = vector.broadcast %77 : vector<16x1xf32> to vector<16x8xf32>
    %81 = arith.subf %73, %80 : vector<16x8xf32>
    %82 = math.exp %81 : vector<16x8xf32>
    %c0_80 = arith.constant 0 : index
    %c2_81 = arith.constant 2 : index
    %83 = vector.load %arg7[%c0_80, %c2_81] : memref<16x4xf32, #tpu.memory_space<vmem>>, vector<16x1xf32>
    %84 = arith.mulf %79, %83 : vector<16x1xf32>
    %cst_82 = arith.constant dense<0.000000e+00> : vector<16xf32>
    %85 = vector.multi_reduction <add>, %82, %cst_82 [1] : vector<16x8xf32> to vector<16xf32>
    %86 = vector.shape_cast %85 : vector<16xf32> to vector<16x1xf32>
    %87 = arith.addf %84, %86 : vector<16x1xf32>
    %c0_83 = arith.constant 0 : index
    %c2_84 = arith.constant 2 : index
    %88 = vector.load %arg7[%c0_83, %c2_84] : memref<16x4xf32, #tpu.memory_space<vmem>>, vector<16x1xf32>
    tpu.vector_store %arg7[%c0_83, %c2_84], %87 {strides = array<i32>} : memref<16x4xf32, #tpu.memory_space<vmem>>, vector<16x1xf32>,
    %c0_85 = arith.constant 0 : index
    %c2_86 = arith.constant 2 : index
    %89 = vector.load %arg6[%c0_85, %c2_86] : memref<16x4xf32, #tpu.memory_space<vmem>>, vector<16x1xf32>
    tpu.vector_store %arg6[%c0_85, %c2_86], %77 {strides = array<i32>} : memref<16x4xf32, #tpu.memory_space<vmem>>, vector<16x1xf32>,
    %c0_87 = arith.constant 0 : index
    %c64 = arith.constant 64 : index
    %90 = vector.load %arg8[%c0_87, %c64] : memref<16x128xf32, #tpu.memory_space<vmem>>, vector<16x32xf32>
    %91 = vector.broadcast %79 : vector<16x1xf32> to vector<16x32xf32>
    %92 = arith.mulf %91, %90 : vector<16x32xf32>
    %cst_88 = arith.constant dense<0.000000e+00> : vector<16x32xf32>
    %93 = tpu.matmul %82, %70, %cst_88 {dimension_numbers = #tpu.dot_dimension_numbers<[1], [0], [0], [1], [0, 0, 1, 1], [], []>} : vector<16x8xf32>, vector<8x32xf32>, vector<16x32xf32> -> vector<16x32xf32>
    %94 = arith.addf %92, %93 : vector<16x32xf32>
    %c0_89 = arith.constant 0 : index
    %c64_90 = arith.constant 64 : index
    %95 = vector.load %arg8[%c0_89, %c64_90] : memref<16x128xf32, #tpu.memory_space<vmem>>, vector<16x32xf32>
    tpu.vector_store %arg8[%c0_89, %c64_90], %94 {strides = array<i32>} : memref<16x128xf32, #tpu.memory_space<vmem>>, vector<16x32xf32>,
    %c0_91 = arith.constant 0 : index
    %c0_92 = arith.constant 0 : index
    %c0_93 = arith.constant 0 : index
    %c3 = arith.constant 3 : index
    %c0_94 = arith.constant 0 : index
    %96 = vector.load %arg2[%c0_91, %c0_92, %c0_93, %c3, %c0_94] : memref<16x1x1x4x32xf32, #tpu.memory_space<vmem>>, vector<16x1x1x1x32xf32>
    %97 = vector.shape_cast %96 : vector<16x1x1x1x32xf32> to vector<16x32xf32>
    %c0_95 = arith.constant 0 : index
    %c0_96 = arith.constant 0 : index
    %c0_97 = arith.constant 0 : index
    %c3_98 = arith.constant 3 : index
    %c0_99 = arith.constant 0 : index
    %98 = vector.load %arg3[%c0_95, %c0_96, %c0_97, %c3_98, %c0_99] : memref<8x1x1x4x32xf32, #tpu.memory_space<vmem>>, vector<8x1x1x1x32xf32>
    %99 = vector.shape_cast %98 : vector<8x1x1x1x32xf32> to vector<8x32xf32>
    %c0_100 = arith.constant 0 : index
    %c0_101 = arith.constant 0 : index
    %c0_102 = arith.constant 0 : index
    %c3_103 = arith.constant 3 : index
    %c0_104 = arith.constant 0 : index
    %100 = vector.load %arg4[%c0_100, %c0_101, %c0_102, %c3_103, %c0_104] : memref<8x1x1x4x32xf32, #tpu.memory_space<vmem>>, vector<8x1x1x1x32xf32>
    %101 = vector.shape_cast %100 : vector<8x1x1x1x32xf32> to vector<8x32xf32>
    %cst_105 = arith.constant dense<0.000000e+00> : vector<16x8xf32>
    %102 = tpu.matmul %97, %99, %cst_105 {dimension_numbers = #tpu.dot_dimension_numbers<[1], [1], [0], [0], [0, 0, 1, 0], [], []>} : vector<16x32xf32>, vector<8x32xf32>, vector<16x8xf32> -> vector<16x8xf32>
    %cst_106 = arith.constant 0.176776692 : f32
    %103 = vector.broadcast %cst_106 : f32 to vector<16x8xf32>
    %104 = arith.mulf %102, %103 : vector<16x8xf32>
    %c0_107 = arith.constant 0 : index
    %c3_108 = arith.constant 3 : index
    %105 = vector.load %arg6[%c0_107, %c3_108] : memref<16x4xf32, #tpu.memory_space<vmem>>, vector<16x1xf32>
    %cst_109 = arith.constant dense<0xFF800000> : vector<16xf32>
    %106 = vector.multi_reduction <maximumf>, %104, %cst_109 [1] : vector<16x8xf32> to vector<16xf32>
    %107 = vector.shape_cast %106 : vector<16xf32> to vector<16x1xf32>
    %108 = arith.maximumf %105, %107 : vector<16x1xf32>
    %109 = arith.subf %105, %108 : vector<16x1xf32>
    %110 = math.exp %109 : vector<16x1xf32>
    %111 = vector.broadcast %108 : vector<16x1xf32> to vector<16x8xf32>
    %112 = arith.subf %104, %111 : vector<16x8xf32>
    %113 = math.exp %112 : vector<16x8xf32>
    %c0_110 = arith.constant 0 : index
    %c3_111 = arith.constant 3 : index
    %114 = vector.load %arg7[%c0_110, %c3_111] : memref<16x4xf32, #tpu.memory_space<vmem>>, vector<16x1xf32>
    %115 = arith.mulf %110, %114 : vector<16x1xf32>
    %cst_112 = arith.constant dense<0.000000e+00> : vector<16xf32>
    %116 = vector.multi_reduction <add>, %113, %cst_112 [1] : vector<16x8xf32> to vector<16xf32>
    %117 = vector.shape_cast %116 : vector<16xf32> to vector<16x1xf32>
    %118 = arith.addf %115, %117 : vector<16x1xf32>
    %c0_113 = arith.constant 0 : index
    %c3_114 = arith.constant 3 : index
    %119 = vector.load %arg7[%c0_113, %c3_114] : memref<16x4xf32, #tpu.memory_space<vmem>>, vector<16x1xf32>
    tpu.vector_store %arg7[%c0_113, %c3_114], %118 {strides = array<i32>} : memref<16x4xf32, #tpu.memory_space<vmem>>, vector<16x1xf32>,
    %c0_115 = arith.constant 0 : index
    %c3_116 = arith.constant 3 : index
    %120 = vector.load %arg6[%c0_115, %c3_116] : memref<16x4xf32, #tpu.memory_space<vmem>>, vector<16x1xf32>
    tpu.vector_store %arg6[%c0_115, %c3_116], %108 {strides = array<i32>} : memref<16x4xf32, #tpu.memory_space<vmem>>, vector<16x1xf32>,
    %c0_117 = arith.constant 0 : index
    %c96 = arith.constant 96 : index
    %121 = vector.load %arg8[%c0_117, %c96] : memref<16x128xf32, #tpu.memory_space<vmem>>, vector<16x32xf32>
    %122 = vector.broadcast %110 : vector<16x1xf32> to vector<16x32xf32>
    %123 = arith.mulf %122, %121 : vector<16x32xf32>
    %cst_118 = arith.constant dense<0.000000e+00> : vector<16x32xf32>
    %124 = tpu.matmul %113, %101, %cst_118 {dimension_numbers = #tpu.dot_dimension_numbers<[1], [0], [0], [1], [0, 0, 1, 1], [], []>} : vector<16x8xf32>, vector<8x32xf32>, vector<16x32xf32> -> vector<16x32xf32>
    %125 = arith.addf %123, %124 : vector<16x32xf32>
    %c0_119 = arith.constant 0 : index
    %c96_120 = arith.constant 96 : index
    %126 = vector.load %arg8[%c0_119, %c96_120] : memref<16x128xf32, #tpu.memory_space<vmem>>, vector<16x32xf32>
    tpu.vector_store %arg8[%c0_119, %c96_120], %125 {strides = array<i32>} : memref<16x128xf32, #tpu.memory_space<vmem>>, vector<16x32xf32>,
    %c1_i32 = arith.constant 1 : i32
    %127 = arith.cmpi eq, %arg1, %c1_i32 : i32
    %128 = arith.extui %127 : i1 to i32
    %c0_i32_121 = arith.constant 0 : i32
    %129 = arith.cmpi ne, %128, %c0_i32_121 : i32
    scf.if %129 {
      %c0_122 = arith.constant 0 : index
      %c0_123 = arith.constant 0 : index
      %130 = vector.load %arg7[%c0_122, %c0_123] : memref<16x4xf32, #tpu.memory_space<vmem>>, vector<16x1xf32>
      %131 = tpu.reciprocal %130 {approx = true} : vector<16x1xf32> -> vector<16x1xf32>
      %c0_124 = arith.constant 0 : index
      %c0_125 = arith.constant 0 : index
      %132 = vector.load %arg8[%c0_124, %c0_125] : memref<16x128xf32, #tpu.memory_space<vmem>>, vector<16x32xf32>
      %133 = vector.broadcast %131 : vector<16x1xf32> to vector<16x32xf32>
      %134 = arith.mulf %132, %133 : vector<16x32xf32>
      %c0_126 = arith.constant 0 : index
      %c0_127 = arith.constant 0 : index
      %135 = vector.load %arg5[%c0_126, %c0_127] : memref<16x128xf32, #tpu.memory_space<vmem>>, vector<16x32xf32>
      tpu.vector_store %arg5[%c0_126, %c0_127], %134 {strides = array<i32>} : memref<16x128xf32, #tpu.memory_space<vmem>>, vector<16x32xf32>,
      %c0_128 = arith.constant 0 : index
      %c1_129 = arith.constant 1 : index
      %136 = vector.load %arg7[%c0_128, %c1_129] : memref<16x4xf32, #tpu.memory_space<vmem>>, vector<16x1xf32>
      %137 = tpu.reciprocal %136 {approx = true} : vector<16x1xf32> -> vector<16x1xf32>
      %c0_130 = arith.constant 0 : index
      %c32_131 = arith.constant 32 : index
      %138 = vector.load %arg8[%c0_130, %c32_131] : memref<16x128xf32, #tpu.memory_space<vmem>>, vector<16x32xf32>
      %139 = vector.broadcast %137 : vector<16x1xf32> to vector<16x32xf32>
      %140 = arith.mulf %138, %139 : vector<16x32xf32>
      %c0_132 = arith.constant 0 : index
      %c32_133 = arith.constant 32 : index
      %141 = vector.load %arg5[%c0_132, %c32_133] : memref<16x128xf32, #tpu.memory_space<vmem>>, vector<16x32xf32>
      tpu.vector_store %arg5[%c0_132, %c32_133], %140 {strides = array<i32>} : memref<16x128xf32, #tpu.memory_space<vmem>>, vector<16x32xf32>,
      %c0_134 = arith.constant 0 : index
      %c2_135 = arith.constant 2 : index
      %142 = vector.load %arg7[%c0_134, %c2_135] : memref<16x4xf32, #tpu.memory_space<vmem>>, vector<16x1xf32>
      %143 = tpu.reciprocal %142 {approx = true} : vector<16x1xf32> -> vector<16x1xf32>
      %c0_136 = arith.constant 0 : index
      %c64_137 = arith.constant 64 : index
      %144 = vector.load %arg8[%c0_136, %c64_137] : memref<16x128xf32, #tpu.memory_space<vmem>>, vector<16x32xf32>
      %145 = vector.broadcast %143 : vector<16x1xf32> to vector<16x32xf32>
      %146 = arith.mulf %144, %145 : vector<16x32xf32>
      %c0_138 = arith.constant 0 : index
      %c64_139 = arith.constant 64 : index
      %147 = vector.load %arg5[%c0_138, %c64_139] : memref<16x128xf32, #tpu.memory_space<vmem>>, vector<16x32xf32>
      tpu.vector_store %arg5[%c0_138, %c64_139], %146 {strides = array<i32>} : memref<16x128xf32, #tpu.memory_space<vmem>>, vector<16x32xf32>,
      %c0_140 = arith.constant 0 : index
      %c3_141 = arith.constant 3 : index
      %148 = vector.load %arg7[%c0_140, %c3_141] : memref<16x4xf32, #tpu.memory_space<vmem>>, vector<16x1xf32>
      %149 = tpu.reciprocal %148 {approx = true} : vector<16x1xf32> -> vector<16x1xf32>
      %c0_142 = arith.constant 0 : index
      %c96_143 = arith.constant 96 : index
      %150 = vector.load %arg8[%c0_142, %c96_143] : memref<16x128xf32, #tpu.memory_space<vmem>>, vector<16x32xf32>
      %151 = vector.broadcast %149 : vector<16x1xf32> to vector<16x32xf32>
      %152 = arith.mulf %150, %151 : vector<16x32xf32>
      %c0_144 = arith.constant 0 : index
      %c96_145 = arith.constant 96 : index
      %153 = vector.load %arg5[%c0_144, %c96_145] : memref<16x128xf32, #tpu.memory_space<vmem>>, vector<16x32xf32>
      tpu.vector_store %arg5[%c0_144, %c96_145], %152 {strides = array<i32>} : memref<16x128xf32, #tpu.memory_space<vmem>>, vector<16x32xf32>,
    } else {
    }
    return
  }
  func.func @transform_0(%arg0: i32, %arg1: i32) -> (i32, i32, i32, i32, i32) {
    %c0_i32 = arith.constant 0 : i32
    %c0_i32_0 = arith.constant 0 : i32
    %c0_i32_1 = arith.constant 0 : i32
    %c0_i32_2 = arith.constant 0 : i32
    %c0_i32_3 = arith.constant 0 : i32
    return %c0_i32, %arg0, %c0_i32_0, %c0_i32_1, %c0_i32_2 : i32, i32, i32, i32, i32
  }
  func.func @transform_1(%arg0: i32, %arg1: i32) -> (i32, i32, i32, i32, i32) {
    %c1_i32 = arith.constant 1 : i32
    %c0_i32 = arith.constant 0 : i32
    %c0_i32_0 = arith.constant 0 : i32
    %c0_i32_1 = arith.constant 0 : i32
    return %arg1, %arg0, %c1_i32, %c0_i32, %c0_i32_0 : i32, i32, i32, i32, i32
  }
  func.func @transform_2(%arg0: i32, %arg1: i32) -> (i32, i32, i32, i32, i32) {
    %c2_i32 = arith.constant 2 : i32
    %c0_i32 = arith.constant 0 : i32
    %c0_i32_0 = arith.constant 0 : i32
    %c0_i32_1 = arith.constant 0 : i32
    return %arg1, %arg0, %c2_i32, %c0_i32, %c0_i32_0 : i32, i32, i32, i32, i32
  }
  func.func @transform_3(%arg0: i32, %arg1: i32) -> (i32, i32) {
    %c0_i32 = arith.constant 0 : i32
    %c0_i32_0 = arith.constant 0 : i32
    return %c0_i32, %arg0 : i32, i32
  }
}

module attributes {stable_mosaic.version = 11 : i64} {
  func.func @ln_qkv_kernel(%arg0: i32, %arg1: memref<32x128xf32, #tpu.memory_space<vmem>>, %arg2: memref<1x128xf32, #tpu.memory_space<vmem>>, %arg3: memref<1x128xf32, #tpu.memory_space<vmem>>, %arg4: memref<128x384xf32, #tpu.memory_space<vmem>>, %arg5: memref<1x384xf32, #tpu.memory_space<vmem>>, %arg6: memref<32x384xf32, #tpu.memory_space<vmem>>) attributes {dimension_semantics = [#tpu.dimension_semantics<parallel>], iteration_bounds = array<i64: 2>, scalar_prefetch = 0 : i64, scratch_operands = 0 : i64, tpu.core_type = #tpu.core_type<tc>, window_params = [{transform_indices = @transform_0, window_bounds = array<i64: 32, 128>}, {pipeline_mode = #tpu.pipeline_mode<synchronous>, transform_indices = @transform_1, window_bounds = array<i64: 1, 128>}, {pipeline_mode = #tpu.pipeline_mode<synchronous>, transform_indices = @transform_2, window_bounds = array<i64: 1, 128>}, {pipeline_mode = #tpu.pipeline_mode<synchronous>, transform_indices = @transform_3, window_bounds = array<i64: 128, 384>}, {pipeline_mode = #tpu.pipeline_mode<synchronous>, transform_indices = @transform_4, window_bounds = array<i64: 1, 384>}, {transform_indices = @transform_5, window_bounds = array<i64: 32, 384>}]} {
    %c0 = arith.constant 0 : index
    %c0_0 = arith.constant 0 : index
    %0 = vector.load %arg1[%c0, %c0_0] : memref<32x128xf32, #tpu.memory_space<vmem>>, vector<32x128xf32>
    %c0_1 = arith.constant 0 : index
    %c0_2 = arith.constant 0 : index
    %1 = vector.load %arg2[%c0_1, %c0_2] : memref<1x128xf32, #tpu.memory_space<vmem>>, vector<1x128xf32>
    %c0_3 = arith.constant 0 : index
    %c0_4 = arith.constant 0 : index
    %2 = vector.load %arg3[%c0_3, %c0_4] : memref<1x128xf32, #tpu.memory_space<vmem>>, vector<1x128xf32>
    %cst = arith.constant dense<0.000000e+00> : vector<32xf32>
    %3 = vector.multi_reduction <add>, %0, %cst [1] : vector<32x128xf32> to vector<32xf32>
    %4 = vector.shape_cast %3 : vector<32xf32> to vector<32x1xf32>
    %cst_5 = arith.constant 1.280000e+02 : f32
    %5 = vector.broadcast %cst_5 : f32 to vector<32x1xf32>
    %6 = arith.divf %4, %5 : vector<32x1xf32>
    %7 = vector.broadcast %6 : vector<32x1xf32> to vector<32x128xf32>
    %8 = arith.subf %0, %7 : vector<32x128xf32>
    %9 = arith.mulf %8, %8 : vector<32x128xf32>
    %cst_6 = arith.constant dense<0.000000e+00> : vector<32xf32>
    %10 = vector.multi_reduction <add>, %9, %cst_6 [1] : vector<32x128xf32> to vector<32xf32>
    %11 = vector.shape_cast %10 : vector<32xf32> to vector<32x1xf32>
    %cst_7 = arith.constant 1.280000e+02 : f32
    %12 = vector.broadcast %cst_7 : f32 to vector<32x1xf32>
    %13 = arith.divf %11, %12 : vector<32x1xf32>
    %14 = vector.broadcast %6 : vector<32x1xf32> to vector<32x128xf32>
    %15 = arith.subf %0, %14 : vector<32x128xf32>
    %cst_8 = arith.constant 9.99999974E-6 : f32
    %16 = vector.broadcast %cst_8 : f32 to vector<32x1xf32>
    %17 = arith.addf %13, %16 : vector<32x1xf32>
    %18 = math.rsqrt %17 : vector<32x1xf32>
    %19 = vector.broadcast %18 : vector<32x1xf32> to vector<32x128xf32>
    %20 = arith.mulf %15, %19 : vector<32x128xf32>
    %21 = vector.broadcast %1 : vector<1x128xf32> to vector<32x128xf32>
    %22 = arith.mulf %20, %21 : vector<32x128xf32>
    %23 = vector.broadcast %2 : vector<1x128xf32> to vector<32x128xf32>
    %24 = arith.addf %22, %23 : vector<32x128xf32>
    %c0_9 = arith.constant 0 : index
    %c0_10 = arith.constant 0 : index
    %25 = vector.load %arg4[%c0_9, %c0_10] : memref<128x384xf32, #tpu.memory_space<vmem>>, vector<128x384xf32>
    %cst_11 = arith.constant dense<0.000000e+00> : vector<32x384xf32>
    %26 = tpu.matmul %24, %25, %cst_11 {dimension_numbers = #tpu.dot_dimension_numbers<[1], [0], [0], [1], [0, 0, 1, 1], [], []>} : vector<32x128xf32>, vector<128x384xf32>, vector<32x384xf32> -> vector<32x384xf32>
    %c0_12 = arith.constant 0 : index
    %c0_13 = arith.constant 0 : index
    %27 = vector.load %arg5[%c0_12, %c0_13] : memref<1x384xf32, #tpu.memory_space<vmem>>, vector<1x384xf32>
    %28 = vector.broadcast %27 : vector<1x384xf32> to vector<32x384xf32>
    %29 = arith.addf %26, %28 : vector<32x384xf32>
    %c0_14 = arith.constant 0 : index
    %c0_15 = arith.constant 0 : index
    %30 = vector.load %arg6[%c0_14, %c0_15] : memref<32x384xf32, #tpu.memory_space<vmem>>, vector<32x384xf32>
    tpu.vector_store %arg6[%c0_14, %c0_15], %29 {strides = array<i32>} : memref<32x384xf32, #tpu.memory_space<vmem>>, vector<32x384xf32>,
    return
  }
  func.func @transform_0(%arg0: i32) -> (i32, i32) {
    %c0_i32 = arith.constant 0 : i32
    %c0_i32_0 = arith.constant 0 : i32
    return %arg0, %c0_i32 : i32, i32
  }
  func.func @transform_1(%arg0: i32) -> (i32, i32) {
    %c0_i32 = arith.constant 0 : i32
    %c0_i32_0 = arith.constant 0 : i32
    %c0_i32_1 = arith.constant 0 : i32
    return %c0_i32, %c0_i32_0 : i32, i32
  }
  func.func @transform_2(%arg0: i32) -> (i32, i32) {
    %c0_i32 = arith.constant 0 : i32
    %c0_i32_0 = arith.constant 0 : i32
    %c0_i32_1 = arith.constant 0 : i32
    return %c0_i32, %c0_i32_0 : i32, i32
  }
  func.func @transform_3(%arg0: i32) -> (i32, i32) {
    %c0_i32 = arith.constant 0 : i32
    %c0_i32_0 = arith.constant 0 : i32
    %c0_i32_1 = arith.constant 0 : i32
    return %c0_i32, %c0_i32_0 : i32, i32
  }
  func.func @transform_4(%arg0: i32) -> (i32, i32) {
    %c0_i32 = arith.constant 0 : i32
    %c0_i32_0 = arith.constant 0 : i32
    %c0_i32_1 = arith.constant 0 : i32
    return %c0_i32, %c0_i32_0 : i32, i32
  }
  func.func @transform_5(%arg0: i32) -> (i32, i32) {
    %c0_i32 = arith.constant 0 : i32
    %c0_i32_0 = arith.constant 0 : i32
    return %arg0, %c0_i32 : i32, i32
  }
}

module attributes {stable_mosaic.version = 11 : i64} {
  func.func @proj_mlp_kernel(%arg0: i32, %arg1: memref<32x128xf32, #tpu.memory_space<vmem>>, %arg2: memref<32x128xf32, #tpu.memory_space<vmem>>, %arg3: memref<128x128xf32, #tpu.memory_space<vmem>>, %arg4: memref<1x128xf32, #tpu.memory_space<vmem>>, %arg5: memref<1x128xf32, #tpu.memory_space<vmem>>, %arg6: memref<1x128xf32, #tpu.memory_space<vmem>>, %arg7: memref<128x256xf32, #tpu.memory_space<vmem>>, %arg8: memref<1x256xf32, #tpu.memory_space<vmem>>, %arg9: memref<256x128xf32, #tpu.memory_space<vmem>>, %arg10: memref<1x128xf32, #tpu.memory_space<vmem>>, %arg11: memref<32x128xf32, #tpu.memory_space<vmem>>) attributes {dimension_semantics = [#tpu.dimension_semantics<parallel>], iteration_bounds = array<i64: 2>, scalar_prefetch = 0 : i64, scratch_operands = 0 : i64, tpu.core_type = #tpu.core_type<tc>, window_params = [{transform_indices = @transform_0, window_bounds = array<i64: 32, 128>}, {transform_indices = @transform_1, window_bounds = array<i64: 32, 128>}, {pipeline_mode = #tpu.pipeline_mode<synchronous>, transform_indices = @transform_2, window_bounds = array<i64: 128, 128>}, {pipeline_mode = #tpu.pipeline_mode<synchronous>, transform_indices = @transform_3, window_bounds = array<i64: 1, 128>}, {pipeline_mode = #tpu.pipeline_mode<synchronous>, transform_indices = @transform_4, window_bounds = array<i64: 1, 128>}, {pipeline_mode = #tpu.pipeline_mode<synchronous>, transform_indices = @transform_5, window_bounds = array<i64: 1, 128>}, {pipeline_mode = #tpu.pipeline_mode<synchronous>, transform_indices = @transform_6, window_bounds = array<i64: 128, 256>}, {pipeline_mode = #tpu.pipeline_mode<synchronous>, transform_indices = @transform_7, window_bounds = array<i64: 1, 256>}, {pipeline_mode = #tpu.pipeline_mode<synchronous>, transform_indices = @transform_8, window_bounds = array<i64: 256, 128>}, {pipeline_mode = #tpu.pipeline_mode<synchronous>, transform_indices = @transform_9, window_bounds = array<i64: 1, 128>}, {transform_indices = @transform_10, window_bounds = array<i64: 32, 128>}]} {
    %c0 = arith.constant 0 : index
    %c0_0 = arith.constant 0 : index
    %0 = vector.load %arg1[%c0, %c0_0] : memref<32x128xf32, #tpu.memory_space<vmem>>, vector<32x128xf32>
    %c0_1 = arith.constant 0 : index
    %c0_2 = arith.constant 0 : index
    %1 = vector.load %arg3[%c0_1, %c0_2] : memref<128x128xf32, #tpu.memory_space<vmem>>, vector<128x128xf32>
    %cst = arith.constant dense<0.000000e+00> : vector<32x128xf32>
    %2 = tpu.matmul %0, %1, %cst {dimension_numbers = #tpu.dot_dimension_numbers<[1], [0], [0], [1], [0, 0, 1, 1], [], []>} : vector<32x128xf32>, vector<128x128xf32>, vector<32x128xf32> -> vector<32x128xf32>
    %c0_3 = arith.constant 0 : index
    %c0_4 = arith.constant 0 : index
    %3 = vector.load %arg4[%c0_3, %c0_4] : memref<1x128xf32, #tpu.memory_space<vmem>>, vector<1x128xf32>
    %4 = vector.broadcast %3 : vector<1x128xf32> to vector<32x128xf32>
    %5 = arith.addf %2, %4 : vector<32x128xf32>
    %c0_5 = arith.constant 0 : index
    %c0_6 = arith.constant 0 : index
    %6 = vector.load %arg2[%c0_5, %c0_6] : memref<32x128xf32, #tpu.memory_space<vmem>>, vector<32x128xf32>
    %7 = arith.addf %5, %6 : vector<32x128xf32>
    %c0_7 = arith.constant 0 : index
    %c0_8 = arith.constant 0 : index
    %8 = vector.load %arg5[%c0_7, %c0_8] : memref<1x128xf32, #tpu.memory_space<vmem>>, vector<1x128xf32>
    %c0_9 = arith.constant 0 : index
    %c0_10 = arith.constant 0 : index
    %9 = vector.load %arg6[%c0_9, %c0_10] : memref<1x128xf32, #tpu.memory_space<vmem>>, vector<1x128xf32>
    %cst_11 = arith.constant dense<0.000000e+00> : vector<32xf32>
    %10 = vector.multi_reduction <add>, %7, %cst_11 [1] : vector<32x128xf32> to vector<32xf32>
    %11 = vector.shape_cast %10 : vector<32xf32> to vector<32x1xf32>
    %cst_12 = arith.constant 1.280000e+02 : f32
    %12 = vector.broadcast %cst_12 : f32 to vector<32x1xf32>
    %13 = arith.divf %11, %12 : vector<32x1xf32>
    %14 = vector.broadcast %13 : vector<32x1xf32> to vector<32x128xf32>
    %15 = arith.subf %7, %14 : vector<32x128xf32>
    %16 = arith.mulf %15, %15 : vector<32x128xf32>
    %cst_13 = arith.constant dense<0.000000e+00> : vector<32xf32>
    %17 = vector.multi_reduction <add>, %16, %cst_13 [1] : vector<32x128xf32> to vector<32xf32>
    %18 = vector.shape_cast %17 : vector<32xf32> to vector<32x1xf32>
    %cst_14 = arith.constant 1.280000e+02 : f32
    %19 = vector.broadcast %cst_14 : f32 to vector<32x1xf32>
    %20 = arith.divf %18, %19 : vector<32x1xf32>
    %21 = vector.broadcast %13 : vector<32x1xf32> to vector<32x128xf32>
    %22 = arith.subf %7, %21 : vector<32x128xf32>
    %cst_15 = arith.constant 9.99999974E-6 : f32
    %23 = vector.broadcast %cst_15 : f32 to vector<32x1xf32>
    %24 = arith.addf %20, %23 : vector<32x1xf32>
    %25 = math.rsqrt %24 : vector<32x1xf32>
    %26 = vector.broadcast %25 : vector<32x1xf32> to vector<32x128xf32>
    %27 = arith.mulf %22, %26 : vector<32x128xf32>
    %28 = vector.broadcast %8 : vector<1x128xf32> to vector<32x128xf32>
    %29 = arith.mulf %27, %28 : vector<32x128xf32>
    %30 = vector.broadcast %9 : vector<1x128xf32> to vector<32x128xf32>
    %31 = arith.addf %29, %30 : vector<32x128xf32>
    %c0_16 = arith.constant 0 : index
    %c0_17 = arith.constant 0 : index
    %32 = vector.load %arg7[%c0_16, %c0_17] : memref<128x256xf32, #tpu.memory_space<vmem>>, vector<128x256xf32>
    %cst_18 = arith.constant dense<0.000000e+00> : vector<32x256xf32>
    %33 = tpu.matmul %31, %32, %cst_18 {dimension_numbers = #tpu.dot_dimension_numbers<[1], [0], [0], [1], [0, 0, 1, 1], [], []>} : vector<32x128xf32>, vector<128x256xf32>, vector<32x256xf32> -> vector<32x256xf32>
    %c0_19 = arith.constant 0 : index
    %c0_20 = arith.constant 0 : index
    %34 = vector.load %arg8[%c0_19, %c0_20] : memref<1x256xf32, #tpu.memory_space<vmem>>, vector<1x256xf32>
    %35 = vector.broadcast %34 : vector<1x256xf32> to vector<32x256xf32>
    %36 = arith.addf %33, %35 : vector<32x256xf32>
    %cst_21 = arith.constant 0.000000e+00 : f32
    %37 = vector.broadcast %cst_21 : f32 to vector<32x256xf32>
    %38 = arith.maximumf %36, %37 : vector<32x256xf32>
    %c0_22 = arith.constant 0 : index
    %c0_23 = arith.constant 0 : index
    %39 = vector.load %arg9[%c0_22, %c0_23] : memref<256x128xf32, #tpu.memory_space<vmem>>, vector<256x128xf32>
    %cst_24 = arith.constant dense<0.000000e+00> : vector<32x128xf32>
    %40 = tpu.matmul %38, %39, %cst_24 {dimension_numbers = #tpu.dot_dimension_numbers<[1], [0], [0], [1], [0, 0, 1, 1], [], []>} : vector<32x256xf32>, vector<256x128xf32>, vector<32x128xf32> -> vector<32x128xf32>
    %c0_25 = arith.constant 0 : index
    %c0_26 = arith.constant 0 : index
    %41 = vector.load %arg10[%c0_25, %c0_26] : memref<1x128xf32, #tpu.memory_space<vmem>>, vector<1x128xf32>
    %42 = vector.broadcast %41 : vector<1x128xf32> to vector<32x128xf32>
    %43 = arith.addf %40, %42 : vector<32x128xf32>
    %44 = arith.addf %43, %7 : vector<32x128xf32>
    %c0_27 = arith.constant 0 : index
    %c0_28 = arith.constant 0 : index
    %45 = vector.load %arg11[%c0_27, %c0_28] : memref<32x128xf32, #tpu.memory_space<vmem>>, vector<32x128xf32>
    tpu.vector_store %arg11[%c0_27, %c0_28], %44 {strides = array<i32>} : memref<32x128xf32, #tpu.memory_space<vmem>>, vector<32x128xf32>,
    return
  }
  func.func @transform_0(%arg0: i32) -> (i32, i32) {
    %c0_i32 = arith.constant 0 : i32
    %c0_i32_0 = arith.constant 0 : i32
    return %arg0, %c0_i32 : i32, i32
  }
  func.func @transform_1(%arg0: i32) -> (i32, i32) {
    %c0_i32 = arith.constant 0 : i32
    %c0_i32_0 = arith.constant 0 : i32
    return %arg0, %c0_i32 : i32, i32
  }
  func.func @transform_2(%arg0: i32) -> (i32, i32) {
    %c0_i32 = arith.constant 0 : i32
    %c0_i32_0 = arith.constant 0 : i32
    %c0_i32_1 = arith.constant 0 : i32
    return %c0_i32, %c0_i32_0 : i32, i32
  }
  func.func @transform_3(%arg0: i32) -> (i32, i32) {
    %c0_i32 = arith.constant 0 : i32
    %c0_i32_0 = arith.constant 0 : i32
    %c0_i32_1 = arith.constant 0 : i32
    return %c0_i32, %c0_i32_0 : i32, i32
  }
  func.func @transform_4(%arg0: i32) -> (i32, i32) {
    %c0_i32 = arith.constant 0 : i32
    %c0_i32_0 = arith.constant 0 : i32
    %c0_i32_1 = arith.constant 0 : i32
    return %c0_i32, %c0_i32_0 : i32, i32
  }
  func.func @transform_5(%arg0: i32) -> (i32, i32) {
    %c0_i32 = arith.constant 0 : i32
    %c0_i32_0 = arith.constant 0 : i32
    %c0_i32_1 = arith.constant 0 : i32
    return %c0_i32, %c0_i32_0 : i32, i32
  }
  func.func @transform_6(%arg0: i32) -> (i32, i32) {
    %c0_i32 = arith.constant 0 : i32
    %c0_i32_0 = arith.constant 0 : i32
    %c0_i32_1 = arith.constant 0 : i32
    return %c0_i32, %c0_i32_0 : i32, i32
  }
  func.func @transform_7(%arg0: i32) -> (i32, i32) {
    %c0_i32 = arith.constant 0 : i32
    %c0_i32_0 = arith.constant 0 : i32
    %c0_i32_1 = arith.constant 0 : i32
    return %c0_i32, %c0_i32_0 : i32, i32
  }
  func.func @transform_8(%arg0: i32) -> (i32, i32) {
    %c0_i32 = arith.constant 0 : i32
    %c0_i32_0 = arith.constant 0 : i32
    %c0_i32_1 = arith.constant 0 : i32
    return %c0_i32, %c0_i32_0 : i32, i32
  }
  func.func @transform_9(%arg0: i32) -> (i32, i32) {
    %c0_i32 = arith.constant 0 : i32
    %c0_i32_0 = arith.constant 0 : i32
    %c0_i32_1 = arith.constant 0 : i32
    return %c0_i32, %c0_i32_0 : i32, i32
  }
  func.func @transform_10(%arg0: i32) -> (i32, i32) {
    %c0_i32 = arith.constant 0 : i32
    %c0_i32_0 = arith.constant 0 : i32
    return %arg0, %c0_i32 : i32, i32
  }
}

</mosaic_0001>

<llo_original>
// kernel: encoder_block.3
$region0: #{encoder_block.3}
  #allocation0 [shape = 'u32[]', space=smem, size = 0x4, offset = 0x4, fixed_abs, tag = 'smem constant byte address 0x4 - core index']
  #allocation1 [shape = 'u32[144,128]{1,0:T(1,128)}', space=vmem, size = 0x12000, scoped, tag = 'internal scratch']
  %s0 = inlined_call_operand.hbm [shape: f32[64,128], index: 0, kind: input, shape index: {}]
  %s1 = inlined_call_operand.vmem [shape: f32[1,128], index: 1, kind: input, shape index: {}]
  %s2 = inlined_call_operand.vmem [shape: f32[1,128], index: 2, kind: input, shape index: {}]
  %s3 = inlined_call_operand.hbm [shape: f32[128,384], index: 3, kind: input, shape index: {}]
  %s4 = inlined_call_operand.vmem [shape: f32[1,384], index: 4, kind: input, shape index: {}]
  %s5 = inlined_call_operand.vmem [shape: f32[64,384], index: 5, kind: output, shape index: {}]
  %s6 = sld [smem:[#allocation0]]
  $region61: #{encoder_block.3} parent=0
    _
  %s8 = ssub.s32 1, %s6
  %s9 = scalar_select 0, %s8, %s6
  $region1: #{encoder_block.3} parent=0
    #allocation2 [shape = 'u8[32768]{0}', space=vmem, size = 0x8000, scoped, tag = 'input window, operand 0']
    #allocation3 [shape = 's32[2]{0}', space=sflag, size = 0x8, scoped, tag = 'scoped memory for encoder_block.3']
    #allocation4 [shape = 'u8[196608]{0}', space=vmem, size = 0x30000, scoped, tag = 'input window, operand 3, single buffered']
    #allocation5 [shape = 's32[1]{0}', space=sflag, size = 0x4, scoped, tag = 'scoped memory for encoder_block.3']
    %10 = vsyncpa [#allocation3], 0
    %s11 = scalar_lea.sflag [#allocation3], 1
    %12 = vsyncpa %s11, 0
    %13 = vsyncpa [#allocation5], 0
    loop: start=0, step=1, limit=4
    $region2: #{encoder_block.3} parent=1 // loop_pre_header
      _
    $region3: #{encoder_block.3} parent=1 // loop_header
      %s15 = sphi 0, %s19
      %p16 = scmp.ge.s32.totalorder %s15, 4
      %s25 = sphi 0, %s27
      %s28 = sphi 0, %s25
      %s29 = sphi 0, %s28
      %s45 = sphi 0, %s29
      %s49 = sphi 0, %s49
      %s51 = sphi 0, %s49
      %s52 = sphi 0, %s51
      %s66 = sphi 0, %s52
      %s70 = sphi 0, %s70
      %s72 = sphi 0, %s70
      %s73 = sphi 0, %s72
      %s87 = sphi 0, %s73
      %s91 = sphi 0, %s91
      %s93 = sphi 0, %s91
      %s94 = sphi 0, %s93
      %s108 = sphi 0, %s94
      %s112 = sphi 0, %s112
      %s114 = sphi 0, %s112
      %s115 = sphi 0, %s114
      %s129 = sphi 0, %s115
      %s135 = sphi 0, %s137
      %s138 = sphi 0, %s135
      %s139 = sphi 0, %s138
      %s155 = sphi 0, %s139
    $region4: #{encoder_block.3} parent=1 // loop_header_branch
      %18 = sbr.rel (%p16) target = $region8
    $region5: #{encoder_block.3} parent=1 // loop_body
      %s20 = ssub.s32 %s15, 1
      %s21 = ssub.s32 %s15, 2
      %s22 = sadd.s32 %s15, 1
      %s23 = ssub.s32 %s15, %s22
      %p24 = scmp.eq.s32.totalorder %s23, 0
      %s26 = sadd.s32 %s25, 1
      %s27 = scalar_select %p24, %s25, %s26
      %p30 = pneg %p24
      %p31 = scmp.eq.s32.totalorder %s15, 1
      %p32 = por %p30, %p31
      %p33 = scmp.ne.s32.totalorder %s25, %s28
      %p34 = scmp.eq.s32.totalorder %s15, 0
      %p35 = por %p33, %p34
      %p36 = scmp.ne.s32.totalorder %s25, %s28
      %p37 = scmp.eq.s32.totalorder %s20, 1
      %p38 = por %p36, %p37
      %p39 = scmp.ne.s32.totalorder %s28, %s29
      %p40 = scmp.eq.s32.totalorder %s20, 0
      %p41 = por %p39, %p40
      %p42 = scmp.ne.s32.totalorder %s28, %s29
      %p43 = scmp.eq.s32.totalorder %s21, 1
      %p44 = por %p42, %p43
      %p46 = scmp.ne.s32.totalorder %s29, %s45
      %p47 = scmp.eq.s32.totalorder %s21, 0
      %p48 = por %p46, %p47
      %s50 = sadd.s32 %s49, 1
      %p53 = scmp.eq.s32.totalorder %s15, 1
      %p54 = scmp.ne.s32.totalorder %s49, %s51
      %p55 = scmp.eq.s32.totalorder %s15, 0
      %p56 = por %p54, %p55
      %p57 = scmp.ne.s32.totalorder %s49, %s51
      %p58 = scmp.eq.s32.totalorder %s20, 1
      %p59 = por %p57, %p58
      %p60 = scmp.ne.s32.totalorder %s51, %s52
      %p61 = scmp.eq.s32.totalorder %s20, 0
      %p62 = por %p60, %p61
      %p63 = scmp.ne.s32.totalorder %s51, %s52
      %p64 = scmp.eq.s32.totalorder %s21, 1
      %p65 = por %p63, %p64
      %p67 = scmp.ne.s32.totalorder %s52, %s66
      %p68 = scmp.eq.s32.totalorder %s21, 0
      %p69 = por %p67, %p68
      %s71 = sadd.s32 %s70, 1
      %p74 = scmp.eq.s32.totalorder %s15, 1
      %p75 = scmp.ne.s32.totalorder %s70, %s72
      %p76 = scmp.eq.s32.totalorder %s15, 0
      %p77 = por %p75, %p76
      %p78 = scmp.ne.s32.totalorder %s70, %s72
      %p79 = scmp.eq.s32.totalorder %s20, 1
      %p80 = por %p78, %p79
      %p81 = scmp.ne.s32.totalorder %s72, %s73
      %p82 = scmp.eq.s32.totalorder %s20, 0
      %p83 = por %p81, %p82
      %p84 = scmp.ne.s32.totalorder %s72, %s73
      %p85 = scmp.eq.s32.totalorder %s21, 1
      %p86 = por %p84, %p85
      %p88 = scmp.ne.s32.totalorder %s73, %s87
      %p89 = scmp.eq.s32.totalorder %s21, 0
      %p90 = por %p88, %p89
      %s92 = sadd.s32 %s91, 1
      %p95 = scmp.eq.s32.totalorder %s15, 1
      %p96 = scmp.ne.s32.totalorder %s91, %s93
      %p97 = scmp.eq.s32.totalorder %s15, 0
      %p98 = por %p96, %p97
      %p99 = scmp.ne.s32.totalorder %s91, %s93
      %p100 = scmp.eq.s32.totalorder %s20, 1
      %p101 = por %p99, %p100
      %p102 = scmp.ne.s32.totalorder %s93, %s94
      %p103 = scmp.eq.s32.totalorder %s20, 0
      %p104 = por %p102, %p103
      %p105 = scmp.ne.s32.totalorder %s93, %s94
      %p106 = scmp.eq.s32.totalorder %s21, 1
      %p107 = por %p105, %p106
      %p109 = scmp.ne.s32.totalorder %s94, %s108
      %p110 = scmp.eq.s32.totalorder %s21, 0
      %p111 = por %p109, %p110
      %s113 = sadd.s32 %s112, 1
      %p116 = scmp.eq.s32.totalorder %s15, 1
      %p117 = scmp.ne.s32.totalorder %s112, %s114
      %p118 = scmp.eq.s32.totalorder %s15, 0
      %p119 = por %p117, %p118
      %p120 = scmp.ne.s32.totalorder %s112, %s114
      %p121 = scmp.eq.s32.totalorder %s20, 1
      %p122 = por %p120, %p121
      %p123 = scmp.ne.s32.totalorder %s114, %s115
      %p124 = scmp.eq.s32.totalorder %s20, 0
      %p125 = por %p123, %p124
      %p126 = scmp.ne.s32.totalorder %s114, %s115
      %p127 = scmp.eq.s32.totalorder %s21, 1
      %p128 = por %p126, %p127
      %p130 = scmp.ne.s32.totalorder %s115, %s129
      %p131 = scmp.eq.s32.totalorder %s21, 0
      %p132 = por %p130, %p131
      %s133 = ssub.s32 %s15, %s22
      %p134 = scmp.eq.s32.totalorder %s133, 0
      %s136 = sadd.s32 %s135, 1
      %s137 = scalar_select %p134, %s135, %s136
      %p140 = pneg %p134
      %p141 = scmp.eq.s32.totalorder %s15, 1
      %p142 = por %p140, %p141
      %p143 = scmp.ne.s32.totalorder %s135, %s138
      %p144 = scmp.eq.s32.totalorder %s15, 0
      %p145 = por %p143, %p144
      %p146 = scmp.ne.s32.totalorder %s135, %s138
      %p147 = scmp.eq.s32.totalorder %s20, 1
      %p148 = por %p146, %p147
      %p149 = scmp.ne.s32.totalorder %s138, %s139
      %p150 = scmp.eq.s32.totalorder %s20, 0
      %p151 = por %p149, %p150
      %p152 = scmp.ne.s32.totalorder %s138, %s139
      %p153 = scmp.eq.s32.totalorder %s21, 1
      %p154 = por %p152, %p153
      %p156 = scmp.ne.s32.totalorder %s139, %s155
      %p157 = scmp.eq.s32.totalorder %s21, 0
      %p158 = por %p156, %p157
      %p159 = scmp.le.s32.totalorder 1, %s15
      %p160 = scmp.lt.s32.totalorder %s15, 3
      %p161 = pnand %p159, %p160
      %p162 = pneg %p161
      // Predicated region
      $region9: #{encoder_block.3} parent=5 // pred_check
        _
      $region10: #{encoder_block.3} parent=5 // pred_check_branch
        %164 = sbr.rel (%p161) target = $region12
      $region11: #{encoder_block.3} parent=5 // pred_region
        %s165 = ssub.s32 %s15, 1
        // Predicated region
        $region13: #{encoder_block.3} parent=11 // pred_check
          %p166 = pneg %p62
        $region14: #{encoder_block.3} parent=11 // pred_check_branch
          %168 = sbr.rel (%p166) target = $region16
        $region15: #{encoder_block.3} parent=11 // pred_region
          _
        $region16: #{encoder_block.3} parent=11 // pred_fallthru
          _
        // Predicated region
        $region17: #{encoder_block.3} parent=11 // pred_check
          %p169 = pneg %p83
        $region18: #{encoder_block.3} parent=11 // pred_check_branch
          %171 = sbr.rel (%p169) target = $region20
        $region19: #{encoder_block.3} parent=11 // pred_region
          _
        $region20: #{encoder_block.3} parent=11 // pred_fallthru
          _
        // Predicated region
        $region21: #{encoder_block.3} parent=11 // pred_check
          %p172 = pneg %p104
        $region22: #{encoder_block.3} parent=11 // pred_check_branch
          %174 = sbr.rel (%p172) target = $region24
        $region23: #{encoder_block.3} parent=11 // pred_region
          %s176 = ssub.s32 6144, 6144
          %177 = vsyncadd [#allocation5], %s176
          %s178 = sshll.u32 [#allocation4], 4
          %s179 = int_to_ptr.vmem [resolvable:$true] %s178
          %184 = dma.hbm_to_vmem [thread:$0]  %s3, 6144, %s179, [#allocation5], 384, 384, 24
        $region24: #{encoder_block.3} parent=11 // pred_fallthru
          _
        // Predicated region
        $region25: #{encoder_block.3} parent=11 // pred_check
          %p185 = pneg %p125
        $region26: #{encoder_block.3} parent=11 // pred_check_branch
          %187 = sbr.rel (%p185) target = $region28
        $region27: #{encoder_block.3} parent=11 // pred_region
          _
        $region28: #{encoder_block.3} parent=11 // pred_fallthru
          _
      $region12: #{encoder_block.3} parent=5 // pred_fallthru
        _
      %p188 = scmp.lt.s32.totalorder %s15, 2
      // Predicated region
      $region29: #{encoder_block.3} parent=5 // pred_check
        %p189 = pneg %p188
      $region30: #{encoder_block.3} parent=5 // pred_check_branch
        %191 = sbr.rel (%p189) target = $region32
      $region31: #{encoder_block.3} parent=5 // pred_region
        // Predicated region
        $region33: #{encoder_block.3} parent=31 // pred_check
          %p192 = pneg %p35
        $region34: #{encoder_block.3} parent=31 // pred_check_branch
          %194 = sbr.rel (%p192) target = $region36
        $region35: #{encoder_block.3} parent=31 // pred_region
          %s195 = sand.u32 %s25, 1
          %s196 = scalar_lea.sflag [#allocation3], %s195
          %s197 = sand.u32 %s25, 1
          %s198 = smul.addr %s197, 32
          %s199 = scalar_lea.vmem [#allocation2], %s198
          %s200 = smul.u32 4, %s15
          %s202 = ssub.s32 512, 512
          %203 = vsyncadd %s196, %s202
          %s204 = smul.addr %s200, 128
          %s205 = scalar_lea.hbm %s0, %s204
          %s206 = sshll.u32 %s199, 4
          %s207 = int_to_ptr.vmem [resolvable:$true] %s206
          %212 = dma.hbm_to_vmem [thread:$0]  %s205, 512, %s207, %s196, 128, 128, 8
        $region36: #{encoder_block.3} parent=31 // pred_fallthru
          _
      $region32: #{encoder_block.3} parent=5 // pred_fallthru
        _
      %p213 = scmp.le.s32.totalorder 1, %s15
      %p214 = scmp.lt.s32.totalorder %s15, 3
      %p215 = pnand %p213, %p214
      %p216 = pneg %p215
      // Predicated region
      $region37: #{encoder_block.3} parent=5 // pred_check
        _
      $region38: #{encoder_block.3} parent=5 // pred_check_branch
        %218 = sbr.rel (%p215) target = $region40
      $region39: #{encoder_block.3} parent=5 // pred_region
        %s219 = ssub.s32 %s15, 1
        %s220 = sand.u32 %s28, 1
        %s221 = scalar_lea.sflag [#allocation3], %s220
        %s222 = sand.u32 %s28, 1
        %s223 = smul.addr %s222, 32
        %s224 = scalar_lea.vmem [#allocation2], %s223
        // Predicated region
        $region41: #{encoder_block.3} parent=39 // pred_check
          %p225 = pneg %p41
        $region42: #{encoder_block.3} parent=39 // pred_check_branch
          %227 = sbr.rel (%p225) target = $region44
        $region43: #{encoder_block.3} parent=39 // pred_region
          %228 = dma.done %s221, 512
        $region44: #{encoder_block.3} parent=39 // pred_fallthru
          _
        // Predicated region
        $region45: #{encoder_block.3} parent=39 // pred_check
          %p229 = pneg %p104
        $region46: #{encoder_block.3} parent=39 // pred_check_branch
          %231 = sbr.rel (%p229) target = $region48
        $region47: #{encoder_block.3} parent=39 // pred_region
          %232 = dma.done [#allocation5], 6144
        $region48: #{encoder_block.3} parent=39 // pred_fallthru
          _
        %s233 = sand.u32 %s28, 1
        %s234 = scalar_lea.sflag [#allocation3], %s233
        %s235 = sand.u32 %s28, 1
        %s236 = smul.addr %s235, 32
        %s237 = scalar_lea.vmem [#allocation2], %s236
        %p238 = pneg %p41
        %p239 = pneg %p38
        %p240 = pneg %p62
        %p241 = pneg %p59
        %p242 = pneg %p83
        %p243 = pneg %p80
        %p244 = pneg %p104
        %p245 = pneg %p101
        %p246 = pneg %p125
        %p247 = pneg %p122
        %p248 = pneg %p151
        %p249 = pneg %p148
        %s250 = smul.u32 4, %s20
        %p251 = scmp.lt.s32.totalorder %s250, 7
        %s252 = scalar_select %p251, %s250, 7
        %s253 = smul.addr %s252, 3
        %s254 = smul.addr %s253, 8
        %s255 = scalar_lea.vmem %s5, %s254
        %s256 = smul.u32 4, %s20
        %s257 = smul.u32 4, %s20
        %p258 = scmp.lt.s32.totalorder %s257, 7
        %s259 = scalar_select %p258, %s257, 7
        %s260 = smul.addr %s259, 3
        %s261 = smul.addr %s260, 8
        %s262 = scalar_lea.vmem %s5, %s261
        %s263 = smul.u32 4, %s20
        %v264 = vld [vmem:[%s224] sm:$0xff]
        %v265 = vld [vmem:[%s224 + $0x8] sm:$0xff]
        %v266 = vld [vmem:[%s224 + $0x10] sm:$0xff]
        %v267 = vld [vmem:[%s224 + $0x18] sm:$0xff]
        %v268 = vld [vmem:[%s1] sm:$0x1]
        %v269 = vld [vmem:[%s2] sm:$0x1]
        %270 = vadd.xlane.f32.xlu0 %v264
        %v271 = vpop.xlane.xlu0 %270
        %272 = vadd.xlane.f32.xlu0 %v265
        %v273 = vpop.xlane.xlu0 %272
        %274 = vadd.xlane.f32.xlu0 %v266
        %v275 = vpop.xlane.xlu0 %274
        %276 = vadd.xlane.f32.xlu0 %v267
        %v277 = vpop.xlane.xlu0 %276
        %v278 = vrcp.pop 128.0
        %v279 = vmul.f32 %v271, %v278
        %v280 = vmul.f32 %v273, %v278
        %v281 = vmul.f32 %v275, %v278
        %v282 = vmul.f32 %v277, %v278
        %v283 = vsub.f32 %v264, %v279
        %v284 = vsub.f32 %v265, %v280
        %v285 = vsub.f32 %v266, %v281
        %v286 = vsub.f32 %v267, %v282
        %v287 = vmul.f32 %v283, %v283
        %v288 = vmul.f32 %v284, %v284
        %v289 = vmul.f32 %v285, %v285
        %v290 = vmul.f32 %v286, %v286
        %291 = vadd.xlane.f32.xlu0 %v287
        %v292 = vpop.xlane.xlu0 %291
        %293 = vadd.xlane.f32.xlu0 %v288
        %v294 = vpop.xlane.xlu0 %293
        %295 = vadd.xlane.f32.xlu0 %v289
        %v296 = vpop.xlane.xlu0 %295
        %297 = vadd.xlane.f32.xlu0 %v290
        %v298 = vpop.xlane.xlu0 %297
        %v299 = vmul.f32 %v292, %v278
        %v300 = vmul.f32 %v294, %v278
        %v301 = vmul.f32 %v296, %v278
        %v302 = vmul.f32 %v298, %v278
        %v303 = vadd.f32 %v299, 1e-05
        %v304 = vadd.f32 %v300, 1e-05
        %v305 = vadd.f32 %v301, 1e-05
        %v306 = vadd.f32 %v302, 1e-05
        %v307 = vrsqrt.pop %v303
        %v308 = vrsqrt.pop %v304
        %v309 = vrsqrt.pop %v305
        %v310 = vrsqrt.pop %v306
        %v311 = vmul.f32 %v283, %v307
        %v312 = vmul.f32 %v284, %v308
        %v313 = vmul.f32 %v285, %v309
        %v314 = vmul.f32 %v286, %v310
        %v316 = vlaneseq
        %v317 = vshrl.u32 %v316, 7
        %v318 = vsub.s32 0, %v317
        %v319 = vrot.slane %v268, %v318
        %v321 = vmul.f32 %v311, %v319
        %v322 = vmul.f32 %v312, %v319
        %v323 = vmul.f32 %v313, %v319
        %v324 = vmul.f32 %v314, %v319
        %v326 = vlaneseq
        %v327 = vshrl.u32 %v326, 7
        %v328 = vsub.s32 0, %v327
        %v329 = vrot.slane %v269, %v328
        %v331 = vadd.f32 %v321, %v329
        %v332 = vadd.f32 %v322, %v329
        %v333 = vadd.f32 %v323, %v329
        %v334 = vadd.f32 %v324, %v329
        %v335 = vld [vmem:[#allocation4] sm:$0xff]
        %v336 = vld [vmem:[#allocation4 + $0x8] sm:$0xff]
        %v337 = vld [vmem:[#allocation4 + $0x10] sm:$0xff]
        %v338 = vld [vmem:[#allocation4 + $0x18] sm:$0xff]
        %v339 = vld [vmem:[#allocation4 + $0x20] sm:$0xff]
        %v340 = vld [vmem:[#allocation4 + $0x28] sm:$0xff]
        %v341 = vld [vmem:[#allocation4 + $0x30] sm:$0xff]
        %v342 = vld [vmem:[#allocation4 + $0x38] sm:$0xff]
        %v343 = vld [vmem:[#allocation4 + $0x40] sm:$0xff]
        %v344 = vld [vmem:[#allocation4 + $0x48] sm:$0xff]
        %v345 = vld [vmem:[#allocation4 + $0x50] sm:$0xff]
        %v346 = vld [vmem:[#allocation4 + $0x58] sm:$0xff]
        %v347 = vld [vmem:[#allocation4 + $0x60] sm:$0xff]
        %v348 = vld [vmem:[#allocation4 + $0x68] sm:$0xff]
        %v349 = vld [vmem:[#allocation4 + $0x70] sm:$0xff]
        %v350 = vld [vmem:[#allocation4 + $0x78] sm:$0xff]
        %v351 = vld [vmem:[#allocation4 + $0x80] sm:$0xff]
        %v352 = vld [vmem:[#allocation4 + $0x88] sm:$0xff]
        %v353 = vld [vmem:[#allocation4 + $0x90] sm:$0xff]
        %v354 = vld [vmem:[#allocation4 + $0x98] sm:$0xff]
        %v355 = vld [vmem:[#allocation4 + $0xa0] sm:$0xff]
        %v356 = vld [vmem:[#allocation4 + $0xa8] sm:$0xff]
        %v357 = vld [vmem:[#allocation4 + $0xb0] sm:$0xff]
        %v358 = vld [vmem:[#allocation4 + $0xb8] sm:$0xff]
        %v359 = vld [vmem:[#allocation4 + $0xc0] sm:$0xff]
        %v360 = vld [vmem:[#allocation4 + $0xc8] sm:$0xff]
        %v361 = vld [vmem:[#allocation4 + $0xd0] sm:$0xff]
        %v362 = vld [vmem:[#allocation4 + $0xd8] sm:$0xff]
        %v363 = vld [vmem:[#allocation4 + $0xe0] sm:$0xff]
        %v364 = vld [vmem:[#allocation4 + $0xe8] sm:$0xff]
        %v365 = vld [vmem:[#allocation4 + $0xf0] sm:$0xff]
        %v366 = vld [vmem:[#allocation4 + $0xf8] sm:$0xff]
        %v367 = vld [vmem:[#allocation4 + $0x100] sm:$0xff]
        %v368 = vld [vmem:[#allocation4 + $0x108] sm:$0xff]
        %v369 = vld [vmem:[#allocation4 + $0x110] sm:$0xff]
        %v370 = vld [vmem:[#allocation4 + $0x118] sm:$0xff]
        %v371 = vld [vmem:[#allocation4 + $0x120] sm:$0xff]
        %v372 = vld [vmem:[#allocation4 + $0x128] sm:$0xff]
        %v373 = vld [vmem:[#allocation4 + $0x130] sm:$0xff]
        %v374 = vld [vmem:[#allocation4 + $0x138] sm:$0xff]
        %v375 = vld [vmem:[#allocation4 + $0x140] sm:$0xff]
        %v376 = vld [vmem:[#allocation4 + $0x148] sm:$0xff]
        %v377 = vld [vmem:[#allocation4 + $0x150] sm:$0xff]
        %v378 = vld [vmem:[#allocation4 + $0x158] sm:$0xff]
        %v379 = vld [vmem:[#allocation4 + $0x160] sm:$0xff]
        %v380 = vld [vmem:[#allocation4 + $0x168] sm:$0xff]
        %v381 = vld [vmem:[#allocation4 + $0x170] sm:$0xff]
        %v382 = vld [vmem:[#allocation4 + $0x178] sm:$0xff]
        %v383 = vld [vmem:[%s4] sm:$0x7]
        %v385 = vlaneseq
        %v386 = vshrl.u32 %v385, 7
        %v387 = vsub.s32 0, %v386
        %v388 = vrot.slane %v383, %v387
        %v389 = vlaneseq
        %v390 = vshrl.u32 %v389, 7
        %v391 = vsub.s32 1, %v390
        %v392 = vrot.slane %v383, %v391
        %v393 = vlaneseq
        %v394 = vshrl.u32 %v393, 7
        %v395 = vsub.s32 2, %v394
        %v396 = vrot.slane %v383, %v395
        %400 = vmatprep.subr.mxu0 %v381
        %401 = vmatpush1.msra.mxu0 %v380
        %402 = vmatprep.subr.mxu0 %v378
        %403 = vmatpush1.msra.mxu0 %v377
        %404 = vmatprep.subr.mxu0 %v375
        %405 = vmatpush1.msra.mxu0 %v374
        %406 = vmatprep.subr.mxu0 %v372
        %407 = vmatpush1.msra.mxu0 %v371
        %408 = vmatprep.subr.mxu0 %v369
        %409 = vmatpush1.msra.mxu0 %v368
        %410 = vmatprep.subr.mxu0 %v366
        %411 = vmatpush1.msra.mxu0 %v365
        %412 = vmatprep.subr.mxu0 %v363
        %413 = vmatpush1.msra.mxu0 %v362
        %414 = vmatprep.subr.mxu0 %v360
        %415 = vmatpush1.msra.mxu0 %v359
        %416 = vmatprep.subr.mxu0 %v357
        %417 = vmatpush1.msra.mxu0 %v356
        %418 = vmatprep.subr.mxu0 %v354
        %419 = vmatpush1.msra.mxu0 %v353
        %420 = vmatprep.subr.mxu0 %v351
        %421 = vmatpush1.msra.mxu0 %v350
        %422 = vmatprep.subr.mxu0 %v348
        %423 = vmatpush1.msra.mxu0 %v347
        %424 = vmatprep.subr.mxu0 %v345
        %425 = vmatpush1.msra.mxu0 %v344
        %426 = vmatprep.subr.mxu0 %v342
        %427 = vmatpush1.msra.mxu0 %v341
        %428 = vmatprep.subr.mxu0 %v339
        %429 = vmatpush1.msra.mxu0 %v338
        %430 = vmatprep.subr.mxu0 %v336
        %431 = vmatpush1.msra.mxu0 %v335
        %432 = vmatprep.subr.mxu0 0.0
        %433 = vmatpush2.msra.mxu0 0.0
        %434 = vmatprep.subr.mxu0 0.0
        %435 = vmatpush2.msra.mxu0 0.0
        %436 = vmatprep.subr.mxu0 0.0
        %437 = vmatpush2.msra.mxu0 0.0
        %438 = vmatprep.subr.mxu0 0.0
        %439 = vmatpush2.msra.mxu0 0.0
        %440 = vmatprep.subr.mxu0 0.0
        %441 = vmatpush2.msra.mxu0 0.0
        %442 = vmatprep.subr.mxu0 0.0
        %443 = vmatpush2.msra.mxu0 0.0
        %444 = vmatprep.subr.mxu0 0.0
        %445 = vmatpush2.msra.mxu0 0.0
        %446 = vmatprep.subr.mxu0 0.0
        %447 = vmatpush2.msra.mxu0 0.0
        %448 = vmatprep.subr.mxu0 0.0
        %449 = vmatpush2.msra.mxu0 0.0
        %450 = vmatprep.subr.mxu0 0.0
        %451 = vmatpush2.msra.mxu0 0.0
        %452 = vmatprep.subr.mxu0 0.0
        %453 = vmatpush2.msra.mxu0 0.0
        %454 = vmatprep.subr.mxu0 0.0
        %455 = vmatpush2.msra.mxu0 0.0
        %456 = vmatprep.subr.mxu0 0.0
        %457 = vmatpush2.msra.mxu0 0.0
        %458 = vmatprep.subr.mxu0 0.0
        %459 = vmatpush2.msra.mxu0 0.0
        %460 = vmatprep.subr.mxu0 0.0
        %461 = vmatpush2.msra.mxu0 0.0
        %462 = vmatprep.subr.mxu0 0.0
        %463 = vmatpush2.msra.mxu0 0.0
        %464 = vmatprep.mubr.f32.mxu0 0.0
        %465 = vmatmul.mubr.f32.gmra.mxu0 %v331
        %v466 = vpop.f32.mrf.mxu0
        %v467 = vadd.f32 %v388, %v466
        %v468 = vpop.f32.mrf.mxu0
        %v469 = vadd.f32 %v392, %v468
        %470 = vmatprep.mubr.f32.mxu0 0.0
        %471 = vmatmul.mubr.f32.gmra.mxu0 %v332
        %v472 = vpop.f32.mrf.mxu0
        %v473 = vadd.f32 %v388, %v472
        %v474 = vpop.f32.mrf.mxu0
        %v475 = vadd.f32 %v392, %v474
        %476 = vmatprep.mubr.f32.mxu0 0.0
        %477 = vmatmul.mubr.f32.gmra.mxu0 %v333
        %v478 = vpop.f32.mrf.mxu0
        %v479 = vadd.f32 %v388, %v478
        %v480 = vpop.f32.mrf.mxu0
        %v481 = vadd.f32 %v392, %v480
        %482 = vmatprep.mubr.f32.mxu0 0.0
        %483 = vmatmul.mubr.f32.gmra.mxu0 %v334
        %v484 = vpop.f32.mrf.mxu0
        %v485 = vadd.f32 %v388, %v484
        %v486 = vpop.f32.mrf.mxu0
        %v487 = vadd.f32 %v392, %v486
        %488 = vdwg.mxu0
        %489 = vmatprep.subr.mxu0 0.0
        %490 = vmatpush1.msra.mxu0 %v382
        %491 = vmatprep.subr.mxu0 0.0
        %492 = vmatpush1.msra.mxu0 %v379
        %493 = vmatprep.subr.mxu0 0.0
        %494 = vmatpush1.msra.mxu0 %v376
        %495 = vmatprep.subr.mxu0 0.0
        %496 = vmatpush1.msra.mxu0 %v373
        %497 = vmatprep.subr.mxu0 0.0
        %498 = vmatpush1.msra.mxu0 %v370
        %499 = vmatprep.subr.mxu0 0.0
        %500 = vmatpush1.msra.mxu0 %v367
        %501 = vmatprep.subr.mxu0 0.0
        %502 = vmatpush1.msra.mxu0 %v364
        %503 = vmatprep.subr.mxu0 0.0
        %504 = vmatpush1.msra.mxu0 %v361
        %505 = vmatprep.subr.mxu0 0.0
        %506 = vmatpush1.msra.mxu0 %v358
        %507 = vmatprep.subr.mxu0 0.0
        %508 = vmatpush1.msra.mxu0 %v355
        %509 = vmatprep.subr.mxu0 0.0
        %510 = vmatpush1.msra.mxu0 %v352
        %511 = vmatprep.subr.mxu0 0.0
        %512 = vmatpush1.msra.mxu0 %v349
        %513 = vmatprep.subr.mxu0 0.0
        %514 = vmatpush1.msra.mxu0 %v346
        %515 = vmatprep.subr.mxu0 0.0
        %516 = vmatpush1.msra.mxu0 %v343
        %517 = vmatprep.subr.mxu0 0.0
        %518 = vmatpush1.msra.mxu0 %v340
        %519 = vmatprep.subr.mxu0 0.0
        %520 = vmatpush1.msra.mxu0 %v337
        %521 = vmatprep.subr.mxu0 0.0
        %522 = vmatpush2.msra.mxu0 0.0
        %523 = vmatprep.subr.mxu0 0.0
        %524 = vmatpush2.msra.mxu0 0.0
        %525 = vmatprep.subr.mxu0 0.0
        %526 = vmatpush2.msra.mxu0 0.0
        %527 = vmatprep.subr.mxu0 0.0
        %528 = vmatpush2.msra.mxu0 0.0
        %529 = vmatprep.subr.mxu0 0.0
        %530 = vmatpush2.msra.mxu0 0.0
        %531 = vmatprep.subr.mxu0 0.0
        %532 = vmatpush2.msra.mxu0 0.0
        %533 = vmatprep.subr.mxu0 0.0
        %534 = vmatpush2.msra.mxu0 0.0
        %535 = vmatprep.subr.mxu0 0.0
        %536 = vmatpush2.msra.mxu0 0.0
        %537 = vmatprep.subr.mxu0 0.0
        %538 = vmatpush2.msra.mxu0 0.0
        %539 = vmatprep.subr.mxu0 0.0
        %540 = vmatpush2.msra.mxu0 0.0
        %541 = vmatprep.subr.mxu0 0.0
        %542 = vmatpush2.msra.mxu0 0.0
        %543 = vmatprep.subr.mxu0 0.0
        %544 = vmatpush2.msra.mxu0 0.0
        %545 = vmatprep.subr.mxu0 0.0
        %546 = vmatpush2.msra.mxu0 0.0
        %547 = vmatprep.subr.mxu0 0.0
        %548 = vmatpush2.msra.mxu0 0.0
        %549 = vmatprep.subr.mxu0 0.0
        %550 = vmatpush2.msra.mxu0 0.0
        %551 = vmatprep.subr.mxu0 0.0
        %552 = vmatpush2.msra.mxu0 0.0
        %553 = vmatprep.mubr.f32.mxu0 0.0
        %554 = vmatmul.mubr.f32.gmra.mxu0 %v331
        %v555 = vpop.f32.mrf.mxu0
        %v556 = vadd.f32 %v396, %v555
        %v557 = vpop.f32.mrf.mxu0
        %558 = vmatprep.mubr.f32.mxu0 0.0
        %559 = vmatmul.mubr.f32.gmra.mxu0 %v332
        %v560 = vpop.f32.mrf.mxu0
        %v561 = vadd.f32 %v396, %v560
        %v562 = vpop.f32.mrf.mxu0
        %563 = vmatprep.mubr.f32.mxu0 0.0
        %564 = vmatmul.mubr.f32.gmra.mxu0 %v333
        %v565 = vpop.f32.mrf.mxu0
        %v566 = vadd.f32 %v396, %v565
        %v567 = vpop.f32.mrf.mxu0
        %568 = vmatprep.mubr.f32.mxu0 0.0
        %569 = vmatmul.mubr.f32.gmra.mxu0 %v334
        %v570 = vpop.f32.mrf.mxu0
        %v571 = vadd.f32 %v396, %v570
        %v572 = vpop.f32.mrf.mxu0
        %573 = vdwg.mxu0
        %574 = vst [vmem:[%s262] sm:$0xff] %v467
        %575 = vst [vmem:[%s262 + $0x8] sm:$0xff] %v469
        %576 = vst [vmem:[%s262 + $0x10] sm:$0xff] %v556
        %577 = vst [vmem:[%s262 + $0x18] sm:$0xff] %v473
        %578 = vst [vmem:[%s262 + $0x20] sm:$0xff] %v475
        %579 = vst [vmem:[%s262 + $0x28] sm:$0xff] %v561
        %580 = vst [vmem:[%s262 + $0x30] sm:$0xff] %v479
        %581 = vst [vmem:[%s262 + $0x38] sm:$0xff] %v481
        %582 = vst [vmem:[%s262 + $0x40] sm:$0xff] %v566
        %583 = vst [vmem:[%s262 + $0x48] sm:$0xff] %v485
        %584 = vst [vmem:[%s262 + $0x50] sm:$0xff] %v487
        %585 = vst [vmem:[%s262 + $0x58] sm:$0xff] %v571
        %s586 = smul.u32 4, %s20
        %p587 = scmp.lt.s32.totalorder %s586, 7
        %s588 = scalar_select %p587, %s586, 7
        %s589 = smul.addr %s588, 3
        %s590 = smul.addr %s589, 8
        %s591 = scalar_lea.vmem %s5, %s590
        // Predicated region
        $region49: #{encoder_block.3} parent=39 // pred_check
          %p592 = pneg %p148
        $region50: #{encoder_block.3} parent=39 // pred_check_branch
          %594 = sbr.rel (%p592) target = $region52
        $region51: #{encoder_block.3} parent=39 // pred_region
          %s595 = smul.u32 4, %s20
        $region52: #{encoder_block.3} parent=39 // pred_fallthru
          _
      $region40: #{encoder_block.3} parent=5 // pred_fallthru
        _
      %p596 = scmp.le.s32.totalorder 2, %s15
      // Predicated region
      $region53: #{encoder_block.3} parent=5 // pred_check
        %p597 = pneg %p596
      $region54: #{encoder_block.3} parent=5 // pred_check_branch
        %599 = sbr.rel (%p597) target = $region56
      $region55: #{encoder_block.3} parent=5 // pred_region
        %s600 = ssub.s32 %s15, 2
        // Predicated region
        $region57: #{encoder_block.3} parent=55 // pred_check
          %p601 = pneg %p154
        $region58: #{encoder_block.3} parent=55 // pred_check_branch
          %603 = sbr.rel (%p601) target = $region60
        $region59: #{encoder_block.3} parent=55 // pred_region
          %s604 = smul.u32 4, %s21
          %p605 = scmp.lt.s32.totalorder %s604, 7
          %s606 = scalar_select %p605, %s604, 7
          %s607 = smul.addr %s606, 3
          %s608 = smul.addr %s607, 8
          %s609 = scalar_lea.vmem %s5, %s608
        $region60: #{encoder_block.3} parent=55 // pred_fallthru
          _
      $region56: #{encoder_block.3} parent=5 // pred_fallthru
        _
    $region6: #{encoder_block.3} parent=1 // loop_footer
      %s19 = sadd.s32 1, %s15
    $region7: #{encoder_block.3} parent=1 // loop_footer_branch
      %14 = sbr.rel target = $region3
    $region8: #{encoder_block.3} parent=1 // loop_exit
      _
    %610 = vsyncpa [#allocation3], 1
    %s611 = scalar_lea.sflag [#allocation3], 1
    %612 = vsyncpa %s611, 1
    %613 = vsyncpa [#allocation5], 1

// kernel: encoder_block.4
$region0: #{encoder_block.4}
  #allocation0 [shape = 'u32[]', space=smem, size = 0x4, offset = 0x4, fixed_abs, tag = 'smem constant byte address 0x4 - core index']
  #allocation1 [shape = 'u32[144,128]{1,0:T(1,128)}', space=vmem, size = 0x12000, scoped, tag = 'internal scratch']
  #allocation2 [shape = 'f32[16,4]{1,0:T(8,128)}', space=vmem, size = 0x2000, scoped, tag = 'scratch operand']
  #allocation3 [shape = 'f32[16,4]{1,0:T(8,128)}', space=vmem, size = 0x2000, scoped, tag = 'scratch operand']
  #allocation4 [shape = 'f32[16,128]{1,0:T(8,128)}', space=vmem, size = 0x2000, scoped, tag = 'scratch operand']
  %s0 = inlined_call_operand.vmem [shape: f32[16,4,3,4,32], index: 0, kind: input, shape index: {}, may-alias: {0,1,2}]
  %s1 = inlined_call_operand.vmem [shape: f32[16,4,3,4,32], index: 1, kind: input, shape index: {}, may-alias: {0,1,2}]
  %s2 = inlined_call_operand.vmem [shape: f32[16,4,3,4,32], index: 2, kind: input, shape index: {}, may-alias: {0,1,2}]
  %s3 = inlined_call_operand.vmem [shape: f32[16,512], index: 3, kind: output, shape index: {}]
  %s4 = sld [smem:[#allocation0]]
  $region210: #{encoder_block.4} parent=0
    _
  %s6 = ssub.s32 1, %s4
  %s7 = scalar_select 0, %s6, %s4
  $region1: #{encoder_block.4} parent=0
    #allocation5 [shape = 'u8[65536]{0}', space=vmem, size = 0x10000, scoped, tag = 'input window, operand 0']
    #allocation6 [shape = 'u8[32768]{0}', space=vmem, size = 0x8000, scoped, tag = 'input window, operand 1']
    #allocation7 [shape = 'u8[32768]{0}', space=vmem, size = 0x8000, scoped, tag = 'input window, operand 2']
    #allocation8 [shape = 'u8[16384]{0}', space=vmem, size = 0x4000, scoped, tag = 'output window, operand 0']
    loop: start=0, step=1, limit=10
    $region2: #{encoder_block.4} parent=1 // loop_pre_header
      _
    $region3: #{encoder_block.4} parent=1 // loop_header
      %s9 = sphi 0, %s13
      %p10 = scmp.ge.s32.totalorder %s9, 10
      %s16 = sphi 0, %s28
      %s17 = sphi 0, %s24
      %s18 = sphi 0, %s16
      %s19 = sphi 0, %s17
      %s20 = sphi 0, %s18
      %s21 = sphi 0, %s19
      %s31 = sphi 0, %s33
      %s34 = sphi 0, %s31
      %s35 = sphi 0, %s34
      %s51 = sphi 0, %s35
      %s59 = sphi 0, %s61
      %s62 = sphi 0, %s59
      %s63 = sphi 0, %s62
      %s79 = sphi 0, %s63
      %s87 = sphi 0, %s89
      %s90 = sphi 0, %s87
      %s91 = sphi 0, %s90
      %s107 = sphi 0, %s91
      %s113 = sphi 0, %s115
      %s116 = sphi 0, %s113
      %s117 = sphi 0, %s116
      %s133 = sphi 0, %s117
    $region4: #{encoder_block.4} parent=1 // loop_header_branch
      %12 = sbr.rel (%p10) target = $region8
    $region5: #{encoder_block.4} parent=1 // loop_body
      %s14 = ssub.s32 %s9, 1
      %s15 = ssub.s32 %s9, 2
      %s22 = sadd.s32 1, %s17
      %p23 = scmp.ge.s32.totalorder %s22, 2
      %s24 = scalar_select %p23, 0, %s22
      %s25 = sadd.s32 1, %s16
      %s26 = scalar_select %p23, %s25, %s16
      %p27 = scmp.ge.s32.totalorder %s26, 4
      %s28 = scalar_select %p27, 0, %s26
      %s29 = ssub.s32 %s16, %s28
      %p30 = scmp.eq.s32.totalorder %s29, 0
      %s32 = sadd.s32 %s31, 1
      %s33 = scalar_select %p30, %s31, %s32
      %p36 = pneg %p30
      %p37 = scmp.eq.s32.totalorder %s9, 7
      %p38 = por %p36, %p37
      %p39 = scmp.ne.s32.totalorder %s31, %s34
      %p40 = scmp.eq.s32.totalorder %s9, 0
      %p41 = por %p39, %p40
      %p42 = scmp.ne.s32.totalorder %s31, %s34
      %p43 = scmp.eq.s32.totalorder %s14, 7
      %p44 = por %p42, %p43
      %p45 = scmp.ne.s32.totalorder %s34, %s35
      %p46 = scmp.eq.s32.totalorder %s14, 0
      %p47 = por %p45, %p46
      %p48 = scmp.ne.s32.totalorder %s34, %s35
      %p49 = scmp.eq.s32.totalorder %s15, 7
      %p50 = por %p48, %p49
      %p52 = scmp.ne.s32.totalorder %s35, %s51
      %p53 = scmp.eq.s32.totalorder %s15, 0
      %p54 = por %p52, %p53
      %s55 = ssub.s32 %s17, %s24
      %s56 = ssub.s32 %s16, %s28
      %s57 = sor.u32 %s55, %s56
      %p58 = scmp.eq.s32.totalorder %s57, 0
      %s60 = sadd.s32 %s59, 1
      %s61 = scalar_select %p58, %s59, %s60
      %p64 = pneg %p58
      %p65 = scmp.eq.s32.totalorder %s9, 7
      %p66 = por %p64, %p65
      %p67 = scmp.ne.s32.totalorder %s59, %s62
      %p68 = scmp.eq.s32.totalorder %s9, 0
      %p69 = por %p67, %p68
      %p70 = scmp.ne.s32.totalorder %s59, %s62
      %p71 = scmp.eq.s32.totalorder %s14, 7
      %p72 = por %p70, %p71
      %p73 = scmp.ne.s32.totalorder %s62, %s63
      %p74 = scmp.eq.s32.totalorder %s14, 0
      %p75 = por %p73, %p74
      %p76 = scmp.ne.s32.totalorder %s62, %s63
      %p77 = scmp.eq.s32.totalorder %s15, 7
      %p78 = por %p76, %p77
      %p80 = scmp.ne.s32.totalorder %s63, %s79
      %p81 = scmp.eq.s32.totalorder %s15, 0
      %p82 = por %p80, %p81
      %s83 = ssub.s32 %s17, %s24
      %s84 = ssub.s32 %s16, %s28
      %s85 = sor.u32 %s83, %s84
      %p86 = scmp.eq.s32.totalorder %s85, 0
      %s88 = sadd.s32 %s87, 1
      %s89 = scalar_select %p86, %s87, %s88
      %p92 = pneg %p86
      %p93 = scmp.eq.s32.totalorder %s9, 7
      %p94 = por %p92, %p93
      %p95 = scmp.ne.s32.totalorder %s87, %s90
      %p96 = scmp.eq.s32.totalorder %s9, 0
      %p97 = por %p95, %p96
      %p98 = scmp.ne.s32.totalorder %s87, %s90
      %p99 = scmp.eq.s32.totalorder %s14, 7
      %p100 = por %p98, %p99
      %p101 = scmp.ne.s32.totalorder %s90, %s91
      %p102 = scmp.eq.s32.totalorder %s14, 0
      %p103 = por %p101, %p102
      %p104 = scmp.ne.s32.totalorder %s90, %s91
      %p105 = scmp.eq.s32.totalorder %s15, 7
      %p106 = por %p104, %p105
      %p108 = scmp.ne.s32.totalorder %s91, %s107
      %p109 = scmp.eq.s32.totalorder %s15, 0
      %p110 = por %p108, %p109
      %s111 = ssub.s32 %s16, %s28
      %p112 = scmp.eq.s32.totalorder %s111, 0
      %s114 = sadd.s32 %s113, 1
      %s115 = scalar_select %p112, %s113, %s114
      %p118 = pneg %p112
      %p119 = scmp.eq.s32.totalorder %s9, 7
      %p120 = por %p118, %p119
      %p121 = scmp.ne.s32.totalorder %s113, %s116
      %p122 = scmp.eq.s32.totalorder %s9, 0
      %p123 = por %p121, %p122
      %p124 = scmp.ne.s32.totalorder %s113, %s116
      %p125 = scmp.eq.s32.totalorder %s14, 7
      %p126 = por %p124, %p125
      %p127 = scmp.ne.s32.totalorder %s116, %s117
      %p128 = scmp.eq.s32.totalorder %s14, 0
      %p129 = por %p127, %p128
      %p130 = scmp.ne.s32.totalorder %s116, %s117
      %p131 = scmp.eq.s32.totalorder %s15, 7
      %p132 = por %p130, %p131
      %p134 = scmp.ne.s32.totalorder %s117, %s133
      %p135 = scmp.eq.s32.totalorder %s15, 0
      %p136 = por %p134, %p135
      %p137 = scmp.le.s32.totalorder 1, %s9
      %p138 = scmp.lt.s32.totalorder %s9, 9
      %p139 = pnand %p137, %p138
      %p140 = pneg %p139
      // Predicated region
      $region9: #{encoder_block.4} parent=5 // pred_check
        _
      $region10: #{encoder_block.4} parent=5 // pred_check_branch
        %142 = sbr.rel (%p139) target = $region12
      $region11: #{encoder_block.4} parent=5 // pred_region
        %s143 = ssub.s32 %s9, 1
      $region12: #{encoder_block.4} parent=5 // pred_fallthru
        _
      %p144 = scmp.lt.s32.totalorder %s9, 8
      // Predicated region
      $region13: #{encoder_block.4} parent=5 // pred_check
        %p145 = pneg %p144
      $region14: #{encoder_block.4} parent=5 // pred_check_branch
        %147 = sbr.rel (%p145) target = $region16
      $region15: #{encoder_block.4} parent=5 // pred_region
        // Predicated region
        $region17: #{encoder_block.4} parent=15 // pred_check
          %p148 = pneg %p41
        $region18: #{encoder_block.4} parent=15 // pred_check_branch
          %150 = sbr.rel (%p148) target = $region20
        $region19: #{encoder_block.4} parent=15 // pred_region
          %s151 = sand.u32 %s31, 1
          %s152 = sand.u32 %s31, 1
          %s153 = smul.addr %s152, 64
          %s154 = scalar_lea.vmem [#allocation5], %s153
          %s155 = smul.addr %s16, 3
          %s156 = smul.addr %s155, 4
          %s157 = scalar_lea.vmem %s0, %s156
          // Predicated region
          $region21: #{encoder_block.4} parent=19 // pred_check
            _
          $region22: #{encoder_block.4} parent=19 // pred_check_branch
            %159 = sbr.rel (0) target = $region24
          $region23: #{encoder_block.4} parent=19 // pred_region
            // Predicated region
            $region25: #{encoder_block.4} parent=23 // pred_check
              _
            $region26: #{encoder_block.4} parent=23 // pred_check_branch
              %161 = sbr.rel target = $region28
            $region27: #{encoder_block.4} parent=23 // pred_region
              // Predicated region
              $region40: #{encoder_block.4} parent=27 // pred_check
                _
              $region41: #{encoder_block.4} parent=27 // pred_check_branch
                %207 = sbr.rel (0) target = $region43
              $region42: #{encoder_block.4} parent=27 // pred_region
                loop: start=0, step=1, limit=1
                $region44: #{encoder_block.4} parent=42 // loop_pre_header
                  _
                $region45: #{encoder_block.4} parent=42 // loop_header
                  %s209 = sphi 0, %s213
                  %p210 = scmp.ge.s32.totalorder %s209, 1
                  %s214 = sphi %s157, %s157
                  %s215 = sphi %s154, %s154
                $region46: #{encoder_block.4} parent=42 // loop_header_branch
                  %212 = sbr.rel (%p210) target = $region50
                $region47: #{encoder_block.4} parent=42 // loop_body
                  _
                $region48: #{encoder_block.4} parent=42 // loop_footer
                  %s213 = sadd.s32 1, %s209
                $region49: #{encoder_block.4} parent=42 // loop_footer_branch
                  %208 = sbr.rel target = $region45
                $region50: #{encoder_block.4} parent=42 // loop_exit
                  _
                %s217 = ssub.s32 16, 1
                loop: start=0, step=1, limit=1
                $region51: #{encoder_block.4} parent=42 // loop_pre_header
                  _
                $region52: #{encoder_block.4} parent=42 // loop_header
                  %s219 = sphi 0, %s223
                  %p220 = scmp.ge.s32.totalorder %s219, 1
                  %s224 = sphi %s157, %s157
                  %s225 = sphi %s154, %s154
                $region53: #{encoder_block.4} parent=42 // loop_header_branch
                  %222 = sbr.rel (%p220) target = $region57
                $region54: #{encoder_block.4} parent=42 // loop_body
                  %v226 = vld [vmem:[%s224] sm:%s217]
                  %227 = vst [vmem:[%s225] sm:%s217] %v226
                  %v228 = vld [vmem:[%s224 + $0x30] sm:%s217]
                  %229 = vst [vmem:[%s225 + $0x4] sm:%s217] %v228
                  %v230 = vld [vmem:[%s224 + $0x60] sm:%s217]
                  %231 = vst [vmem:[%s225 + $0x8] sm:%s217] %v230
                  %v232 = vld [vmem:[%s224 + $0x90] sm:%s217]
                  %233 = vst [vmem:[%s225 + $0xc] sm:%s217] %v232
                  %v234 = vld [vmem:[%s224 + $0xc0] sm:%s217]
                  %235 = vst [vmem:[%s225 + $0x10] sm:%s217] %v234
                  %v236 = vld [vmem:[%s224 + $0xf0] sm:%s217]
                  %237 = vst [vmem:[%s225 + $0x14] sm:%s217] %v236
                  %v238 = vld [vmem:[%s224 + $0x120] sm:%s217]
                  %239 = vst [vmem:[%s225 + $0x18] sm:%s217] %v238
                  %v240 = vld [vmem:[%s224 + $0x150] sm:%s217]
                  %241 = vst [vmem:[%s225 + $0x1c] sm:%s217] %v240
                  %v242 = vld [vmem:[%s224 + $0x180] sm:%s217]
                  %243 = vst [vmem:[%s225 + $0x20] sm:%s217] %v242
                  %v244 = vld [vmem:[%s224 + $0x1b0] sm:%s217]
                  %245 = vst [vmem:[%s225 + $0x24] sm:%s217] %v244
                  %v246 = vld [vmem:[%s224 + $0x1e0] sm:%s217]
                  %247 = vst [vmem:[%s225 + $0x28] sm:%s217] %v246
                  %v248 = vld [vmem:[%s224 + $0x210] sm:%s217]
                  %249 = vst [vmem:[%s225 + $0x2c] sm:%s217] %v248
                  %v250 = vld [vmem:[%s224 + $0x240] sm:%s217]
                  %251 = vst [vmem:[%s225 + $0x30] sm:%s217] %v250
                  %v252 = vld [vmem:[%s224 + $0x270] sm:%s217]
                  %253 = vst [vmem:[%s225 + $0x34] sm:%s217] %v252
                  %v254 = vld [vmem:[%s224 + $0x2a0] sm:%s217]
                  %255 = vst [vmem:[%s225 + $0x38] sm:%s217] %v254
                  %v256 = vld [vmem:[%s224 + $0x2d0] sm:%s217]
                  %257 = vst [vmem:[%s225 + $0x3c] sm:%s217] %v256
                $region55: #{encoder_block.4} parent=42 // loop_footer
                  %s223 = sadd.s32 1, %s219
                $region56: #{encoder_block.4} parent=42 // loop_footer_branch
                  %218 = sbr.rel target = $region52
                $region57: #{encoder_block.4} parent=42 // loop_exit
                  _
              $region43: #{encoder_block.4} parent=27 // pred_fallthru
                _
            $region28: #{encoder_block.4} parent=23 // pred_fallthru
              _
            // Predicated region
            $region29: #{encoder_block.4} parent=23 // pred_check
              _
            $region30: #{encoder_block.4} parent=23 // pred_check_branch
              %163 = sbr.rel (0) target = $region32
            $region31: #{encoder_block.4} parent=23 // pred_region
              %s165 = ssub.s32 16, 1
              loop: start=0, step=1, limit=1
              $region33: #{encoder_block.4} parent=31 // loop_pre_header
                _
              $region34: #{encoder_block.4} parent=31 // loop_header
                %s167 = sphi 0, %s171
                %p168 = scmp.ge.s32.totalorder %s167, 1
                %s172 = sphi %s157, %s157
                %s173 = sphi %s154, %s154
              $region35: #{encoder_block.4} parent=31 // loop_header_branch
                %170 = sbr.rel (%p168) target = $region39
              $region36: #{encoder_block.4} parent=31 // loop_body
                %v174 = vld [vmem:[%s172] sm:%s165]
                %175 = vst [vmem:[%s173] sm:%s165] %v174
                %v176 = vld [vmem:[%s172 + $0x30] sm:%s165]
                %177 = vst [vmem:[%s173 + $0x4] sm:%s165] %v176
                %v178 = vld [vmem:[%s172 + $0x60] sm:%s165]
                %179 = vst [vmem:[%s173 + $0x8] sm:%s165] %v178
                %v180 = vld [vmem:[%s172 + $0x90] sm:%s165]
                %181 = vst [vmem:[%s173 + $0xc] sm:%s165] %v180
                %v182 = vld [vmem:[%s172 + $0xc0] sm:%s165]
                %183 = vst [vmem:[%s173 + $0x10] sm:%s165] %v182
                %v184 = vld [vmem:[%s172 + $0xf0] sm:%s165]
                %185 = vst [vmem:[%s173 + $0x14] sm:%s165] %v184
                %v186 = vld [vmem:[%s172 + $0x120] sm:%s165]
                %187 = vst [vmem:[%s173 + $0x18] sm:%s165] %v186
                %v188 = vld [vmem:[%s172 + $0x150] sm:%s165]
                %189 = vst [vmem:[%s173 + $0x1c] sm:%s165] %v188
                %v190 = vld [vmem:[%s172 + $0x180] sm:%s165]
                %191 = vst [vmem:[%s173 + $0x20] sm:%s165] %v190
                %v192 = vld [vmem:[%s172 + $0x1b0] sm:%s165]
                %193 = vst [vmem:[%s173 + $0x24] sm:%s165] %v192
                %v194 = vld [vmem:[%s172 + $0x1e0] sm:%s165]
                %195 = vst [vmem:[%s173 + $0x28] sm:%s165] %v194
                %v196 = vld [vmem:[%s172 + $0x210] sm:%s165]
                %197 = vst [vmem:[%s173 + $0x2c] sm:%s165] %v196
                %v198 = vld [vmem:[%s172 + $0x240] sm:%s165]
                %199 = vst [vmem:[%s173 + $0x30] sm:%s165] %v198
                %v200 = vld [vmem:[%s172 + $0x270] sm:%s165]
                %201 = vst [vmem:[%s173 + $0x34] sm:%s165] %v200
                %v202 = vld [vmem:[%s172 + $0x2a0] sm:%s165]
                %203 = vst [vmem:[%s173 + $0x38] sm:%s165] %v202
                %v204 = vld [vmem:[%s172 + $0x2d0] sm:%s165]
                %205 = vst [vmem:[%s173 + $0x3c] sm:%s165] %v204
              $region37: #{encoder_block.4} parent=31 // loop_footer
                %s171 = sadd.s32 1, %s167
              $region38: #{encoder_block.4} parent=31 // loop_footer_branch
                %166 = sbr.rel target = $region34
              $region39: #{encoder_block.4} parent=31 // loop_exit
                _
            $region32: #{encoder_block.4} parent=23 // pred_fallthru
              _
          $region24: #{encoder_block.4} parent=19 // pred_fallthru
            _
          %258 = vnop
        $region20: #{encoder_block.4} parent=15 // pred_fallthru
          _
        // Predicated region
        $region58: #{encoder_block.4} parent=15 // pred_check
          %p259 = pneg %p69
        $region59: #{encoder_block.4} parent=15 // pred_check_branch
          %261 = sbr.rel (%p259) target = $region61
        $region60: #{encoder_block.4} parent=15 // pred_region
          %s262 = sand.u32 %s59, 1
          %s263 = sand.u32 %s59, 1
          %s264 = smul.addr %s263, 32
          %s265 = scalar_lea.vmem [#allocation6], %s264
          %s266 = smul.u32 8, %s17
          %s267 = smul.addr %s16, 3
          %s268 = sadd.s32 1, %s267
          %s269 = smul.addr %s266, 12
          %s270 = sadd.s32 %s268, %s269
          %s271 = smul.addr %s270, 4
          %s272 = scalar_lea.vmem %s1, %s271
          // Predicated region
          $region62: #{encoder_block.4} parent=60 // pred_check
            _
          $region63: #{encoder_block.4} parent=60 // pred_check_branch
            %274 = sbr.rel (0) target = $region65
          $region64: #{encoder_block.4} parent=60 // pred_region
            // Predicated region
            $region66: #{encoder_block.4} parent=64 // pred_check
              _
            $region67: #{encoder_block.4} parent=64 // pred_check_branch
              %276 = sbr.rel target = $region69
            $region68: #{encoder_block.4} parent=64 // pred_region
              // Predicated region
              $region81: #{encoder_block.4} parent=68 // pred_check
                _
              $region82: #{encoder_block.4} parent=68 // pred_check_branch
                %306 = sbr.rel (0) target = $region84
              $region83: #{encoder_block.4} parent=68 // pred_region
                loop: start=0, step=1, limit=1
                $region85: #{encoder_block.4} parent=83 // loop_pre_header
                  _
                $region86: #{encoder_block.4} parent=83 // loop_header
                  %s308 = sphi 0, %s312
                  %p309 = scmp.ge.s32.totalorder %s308, 1
                  %s313 = sphi %s272, %s272
                  %s314 = sphi %s265, %s265
                $region87: #{encoder_block.4} parent=83 // loop_header_branch
                  %311 = sbr.rel (%p309) target = $region91
                $region88: #{encoder_block.4} parent=83 // loop_body
                  _
                $region89: #{encoder_block.4} parent=83 // loop_footer
                  %s312 = sadd.s32 1, %s308
                $region90: #{encoder_block.4} parent=83 // loop_footer_branch
                  %307 = sbr.rel target = $region86
                $region91: #{encoder_block.4} parent=83 // loop_exit
                  _
                %s316 = ssub.s32 16, 1
                loop: start=0, step=1, limit=1
                $region92: #{encoder_block.4} parent=83 // loop_pre_header
                  _
                $region93: #{encoder_block.4} parent=83 // loop_header
                  %s318 = sphi 0, %s322
                  %p319 = scmp.ge.s32.totalorder %s318, 1
                  %s323 = sphi %s272, %s272
                  %s324 = sphi %s265, %s265
                $region94: #{encoder_block.4} parent=83 // loop_header_branch
                  %321 = sbr.rel (%p319) target = $region98
                $region95: #{encoder_block.4} parent=83 // loop_body
                  %v325 = vld [vmem:[%s323] sm:%s316]
                  %326 = vst [vmem:[%s324] sm:%s316] %v325
                  %v327 = vld [vmem:[%s323 + $0x30] sm:%s316]
                  %328 = vst [vmem:[%s324 + $0x4] sm:%s316] %v327
                  %v329 = vld [vmem:[%s323 + $0x60] sm:%s316]
                  %330 = vst [vmem:[%s324 + $0x8] sm:%s316] %v329
                  %v331 = vld [vmem:[%s323 + $0x90] sm:%s316]
                  %332 = vst [vmem:[%s324 + $0xc] sm:%s316] %v331
                  %v333 = vld [vmem:[%s323 + $0xc0] sm:%s316]
                  %334 = vst [vmem:[%s324 + $0x10] sm:%s316] %v333
                  %v335 = vld [vmem:[%s323 + $0xf0] sm:%s316]
                  %336 = vst [vmem:[%s324 + $0x14] sm:%s316] %v335
                  %v337 = vld [vmem:[%s323 + $0x120] sm:%s316]
                  %338 = vst [vmem:[%s324 + $0x18] sm:%s316] %v337
                  %v339 = vld [vmem:[%s323 + $0x150] sm:%s316]
                  %340 = vst [vmem:[%s324 + $0x1c] sm:%s316] %v339
                $region96: #{encoder_block.4} parent=83 // loop_footer
                  %s322 = sadd.s32 1, %s318
                $region97: #{encoder_block.4} parent=83 // loop_footer_branch
                  %317 = sbr.rel target = $region93
                $region98: #{encoder_block.4} parent=83 // loop_exit
                  _
              $region84: #{encoder_block.4} parent=68 // pred_fallthru
                _
            $region69: #{encoder_block.4} parent=64 // pred_fallthru
              _
            // Predicated region
            $region70: #{encoder_block.4} parent=64 // pred_check
              _
            $region71: #{encoder_block.4} parent=64 // pred_check_branch
              %278 = sbr.rel (0) target = $region73
            $region72: #{encoder_block.4} parent=64 // pred_region
              %s280 = ssub.s32 16, 1
              loop: start=0, step=1, limit=1
              $region74: #{encoder_block.4} parent=72 // loop_pre_header
                _
              $region75: #{encoder_block.4} parent=72 // loop_header
                %s282 = sphi 0, %s286
                %p283 = scmp.ge.s32.totalorder %s282, 1
                %s287 = sphi %s272, %s272
                %s288 = sphi %s265, %s265
              $region76: #{encoder_block.4} parent=72 // loop_header_branch
                %285 = sbr.rel (%p283) target = $region80
              $region77: #{encoder_block.4} parent=72 // loop_body
                %v289 = vld [vmem:[%s287] sm:%s280]
                %290 = vst [vmem:[%s288] sm:%s280] %v289
                %v291 = vld [vmem:[%s287 + $0x30] sm:%s280]
                %292 = vst [vmem:[%s288 + $0x4] sm:%s280] %v291
                %v293 = vld [vmem:[%s287 + $0x60] sm:%s280]
                %294 = vst [vmem:[%s288 + $0x8] sm:%s280] %v293
                %v295 = vld [vmem:[%s287 + $0x90] sm:%s280]
                %296 = vst [vmem:[%s288 + $0xc] sm:%s280] %v295
                %v297 = vld [vmem:[%s287 + $0xc0] sm:%s280]
                %298 = vst [vmem:[%s288 + $0x10] sm:%s280] %v297
                %v299 = vld [vmem:[%s287 + $0xf0] sm:%s280]
                %300 = vst [vmem:[%s288 + $0x14] sm:%s280] %v299
                %v301 = vld [vmem:[%s287 + $0x120] sm:%s280]
                %302 = vst [vmem:[%s288 + $0x18] sm:%s280] %v301
                %v303 = vld [vmem:[%s287 + $0x150] sm:%s280]
                %304 = vst [vmem:[%s288 + $0x1c] sm:%s280] %v303
              $region78: #{encoder_block.4} parent=72 // loop_footer
                %s286 = sadd.s32 1, %s282
              $region79: #{encoder_block.4} parent=72 // loop_footer_branch
                %281 = sbr.rel target = $region75
              $region80: #{encoder_block.4} parent=72 // loop_exit
                _
            $region73: #{encoder_block.4} parent=64 // pred_fallthru
              _
          $region65: #{encoder_block.4} parent=60 // pred_fallthru
            _
          %341 = vnop
        $region61: #{encoder_block.4} parent=15 // pred_fallthru
          _
        // Predicated region
        $region99: #{encoder_block.4} parent=15 // pred_check
          %p342 = pneg %p97
        $region100: #{encoder_block.4} parent=15 // pred_check_branch
          %344 = sbr.rel (%p342) target = $region102
        $region101: #{encoder_block.4} parent=15 // pred_region
          %s345 = sand.u32 %s87, 1
          %s346 = sand.u32 %s87, 1
          %s347 = smul.addr %s346, 32
          %s348 = scalar_lea.vmem [#allocation7], %s347
          %s349 = smul.u32 8, %s17
          %s350 = smul.addr %s16, 3
          %s351 = sadd.s32 2, %s350
          %s352 = smul.addr %s349, 12
          %s353 = sadd.s32 %s351, %s352
          %s354 = smul.addr %s353, 4
          %s355 = scalar_lea.vmem %s2, %s354
          // Predicated region
          $region103: #{encoder_block.4} parent=101 // pred_check
            _
          $region104: #{encoder_block.4} parent=101 // pred_check_branch
            %357 = sbr.rel (0) target = $region106
          $region105: #{encoder_block.4} parent=101 // pred_region
            // Predicated region
            $region107: #{encoder_block.4} parent=105 // pred_check
              _
            $region108: #{encoder_block.4} parent=105 // pred_check_branch
              %359 = sbr.rel target = $region110
            $region109: #{encoder_block.4} parent=105 // pred_region
              // Predicated region
              $region122: #{encoder_block.4} parent=109 // pred_check
                _
              $region123: #{encoder_block.4} parent=109 // pred_check_branch
                %389 = sbr.rel (0) target = $region125
              $region124: #{encoder_block.4} parent=109 // pred_region
                loop: start=0, step=1, limit=1
                $region126: #{encoder_block.4} parent=124 // loop_pre_header
                  _
                $region127: #{encoder_block.4} parent=124 // loop_header
                  %s391 = sphi 0, %s395
                  %p392 = scmp.ge.s32.totalorder %s391, 1
                  %s396 = sphi %s355, %s355
                  %s397 = sphi %s348, %s348
                $region128: #{encoder_block.4} parent=124 // loop_header_branch
                  %394 = sbr.rel (%p392) target = $region132
                $region129: #{encoder_block.4} parent=124 // loop_body
                  _
                $region130: #{encoder_block.4} parent=124 // loop_footer
                  %s395 = sadd.s32 1, %s391
                $region131: #{encoder_block.4} parent=124 // loop_footer_branch
                  %390 = sbr.rel target = $region127
                $region132: #{encoder_block.4} parent=124 // loop_exit
                  _
                %s399 = ssub.s32 16, 1
                loop: start=0, step=1, limit=1
                $region133: #{encoder_block.4} parent=124 // loop_pre_header
                  _
                $region134: #{encoder_block.4} parent=124 // loop_header
                  %s401 = sphi 0, %s405
                  %p402 = scmp.ge.s32.totalorder %s401, 1
                  %s406 = sphi %s355, %s355
                  %s407 = sphi %s348, %s348
                $region135: #{encoder_block.4} parent=124 // loop_header_branch
                  %404 = sbr.rel (%p402) target = $region139
                $region136: #{encoder_block.4} parent=124 // loop_body
                  %v408 = vld [vmem:[%s406] sm:%s399]
                  %409 = vst [vmem:[%s407] sm:%s399] %v408
                  %v410 = vld [vmem:[%s406 + $0x30] sm:%s399]
                  %411 = vst [vmem:[%s407 + $0x4] sm:%s399] %v410
                  %v412 = vld [vmem:[%s406 + $0x60] sm:%s399]
                  %413 = vst [vmem:[%s407 + $0x8] sm:%s399] %v412
                  %v414 = vld [vmem:[%s406 + $0x90] sm:%s399]
                  %415 = vst [vmem:[%s407 + $0xc] sm:%s399] %v414
                  %v416 = vld [vmem:[%s406 + $0xc0] sm:%s399]
                  %417 = vst [vmem:[%s407 + $0x10] sm:%s399] %v416
                  %v418 = vld [vmem:[%s406 + $0xf0] sm:%s399]
                  %419 = vst [vmem:[%s407 + $0x14] sm:%s399] %v418
                  %v420 = vld [vmem:[%s406 + $0x120] sm:%s399]
                  %421 = vst [vmem:[%s407 + $0x18] sm:%s399] %v420
                  %v422 = vld [vmem:[%s406 + $0x150] sm:%s399]
                  %423 = vst [vmem:[%s407 + $0x1c] sm:%s399] %v422
                $region137: #{encoder_block.4} parent=124 // loop_footer
                  %s405 = sadd.s32 1, %s401
                $region138: #{encoder_block.4} parent=124 // loop_footer_branch
                  %400 = sbr.rel target = $region134
                $region139: #{encoder_block.4} parent=124 // loop_exit
                  _
              $region125: #{encoder_block.4} parent=109 // pred_fallthru
                _
            $region110: #{encoder_block.4} parent=105 // pred_fallthru
              _
            // Predicated region
            $region111: #{encoder_block.4} parent=105 // pred_check
              _
            $region112: #{encoder_block.4} parent=105 // pred_check_branch
              %361 = sbr.rel (0) target = $region114
            $region113: #{encoder_block.4} parent=105 // pred_region
              %s363 = ssub.s32 16, 1
              loop: start=0, step=1, limit=1
              $region115: #{encoder_block.4} parent=113 // loop_pre_header
                _
              $region116: #{encoder_block.4} parent=113 // loop_header
                %s365 = sphi 0, %s369
                %p366 = scmp.ge.s32.totalorder %s365, 1
                %s370 = sphi %s355, %s355
                %s371 = sphi %s348, %s348
              $region117: #{encoder_block.4} parent=113 // loop_header_branch
                %368 = sbr.rel (%p366) target = $region121
              $region118: #{encoder_block.4} parent=113 // loop_body
                %v372 = vld [vmem:[%s370] sm:%s363]
                %373 = vst [vmem:[%s371] sm:%s363] %v372
                %v374 = vld [vmem:[%s370 + $0x30] sm:%s363]
                %375 = vst [vmem:[%s371 + $0x4] sm:%s363] %v374
                %v376 = vld [vmem:[%s370 + $0x60] sm:%s363]
                %377 = vst [vmem:[%s371 + $0x8] sm:%s363] %v376
                %v378 = vld [vmem:[%s370 + $0x90] sm:%s363]
                %379 = vst [vmem:[%s371 + $0xc] sm:%s363] %v378
                %v380 = vld [vmem:[%s370 + $0xc0] sm:%s363]
                %381 = vst [vmem:[%s371 + $0x10] sm:%s363] %v380
                %v382 = vld [vmem:[%s370 + $0xf0] sm:%s363]
                %383 = vst [vmem:[%s371 + $0x14] sm:%s363] %v382
                %v384 = vld [vmem:[%s370 + $0x120] sm:%s363]
                %385 = vst [vmem:[%s371 + $0x18] sm:%s363] %v384
                %v386 = vld [vmem:[%s370 + $0x150] sm:%s363]
                %387 = vst [vmem:[%s371 + $0x1c] sm:%s363] %v386
              $region119: #{encoder_block.4} parent=113 // loop_footer
                %s369 = sadd.s32 1, %s365
              $region120: #{encoder_block.4} parent=113 // loop_footer_branch
                %364 = sbr.rel target = $region116
              $region121: #{encoder_block.4} parent=113 // loop_exit
                _
            $region114: #{encoder_block.4} parent=105 // pred_fallthru
              _
          $region106: #{encoder_block.4} parent=101 // pred_fallthru
            _
          %424 = vnop
        $region102: #{encoder_block.4} parent=15 // pred_fallthru
          _
      $region16: #{encoder_block.4} parent=5 // pred_fallthru
        _
      %p425 = scmp.le.s32.totalorder 1, %s9
      %p426 = scmp.lt.s32.totalorder %s9, 9
      %p427 = pnand %p425, %p426
      %p428 = pneg %p427
      // Predicated region
      $region140: #{encoder_block.4} parent=5 // pred_check
        _
      $region141: #{encoder_block.4} parent=5 // pred_check_branch
        %430 = sbr.rel (%p427) target = $region143
      $region142: #{encoder_block.4} parent=5 // pred_region
        %s431 = ssub.s32 %s9, 1
        %s432 = sand.u32 %s34, 1
        %s433 = sand.u32 %s34, 1
        %s434 = smul.addr %s433, 64
        %s435 = scalar_lea.vmem [#allocation5], %s434
        // Predicated region
        $region144: #{encoder_block.4} parent=142 // pred_check
          %p436 = pneg %p47
        $region145: #{encoder_block.4} parent=142 // pred_check_branch
          %438 = sbr.rel (%p436) target = $region147
        $region146: #{encoder_block.4} parent=142 // pred_region
          _
        $region147: #{encoder_block.4} parent=142 // pred_fallthru
          _
        %s439 = sand.u32 %s62, 1
        %s440 = sand.u32 %s62, 1
        %s441 = smul.addr %s440, 32
        %s442 = scalar_lea.vmem [#allocation6], %s441
        // Predicated region
        $region148: #{encoder_block.4} parent=142 // pred_check
          %p443 = pneg %p75
        $region149: #{encoder_block.4} parent=142 // pred_check_branch
          %445 = sbr.rel (%p443) target = $region151
        $region150: #{encoder_block.4} parent=142 // pred_region
          _
        $region151: #{encoder_block.4} parent=142 // pred_fallthru
          _
        %s446 = sand.u32 %s90, 1
        %s447 = sand.u32 %s90, 1
        %s448 = smul.addr %s447, 32
        %s449 = scalar_lea.vmem [#allocation7], %s448
        // Predicated region
        $region152: #{encoder_block.4} parent=142 // pred_check
          %p450 = pneg %p103
        $region153: #{encoder_block.4} parent=142 // pred_check_branch
          %452 = sbr.rel (%p450) target = $region155
        $region154: #{encoder_block.4} parent=142 // pred_region
          _
        $region155: #{encoder_block.4} parent=142 // pred_fallthru
          _
        %s453 = sand.u32 %s34, 1
        %s454 = sand.u32 %s34, 1
        %s455 = smul.addr %s454, 64
        %s456 = scalar_lea.vmem [#allocation5], %s455
        %p457 = pneg %p47
        %p458 = pneg %p44
        %s459 = sand.u32 %s62, 1
        %s460 = sand.u32 %s62, 1
        %s461 = smul.addr %s460, 32
        %s462 = scalar_lea.vmem [#allocation6], %s461
        %p463 = pneg %p75
        %p464 = pneg %p72
        %s465 = sand.u32 %s90, 1
        %s466 = sand.u32 %s90, 1
        %s467 = smul.addr %s466, 32
        %s468 = scalar_lea.vmem [#allocation7], %s467
        %p469 = pneg %p103
        %p470 = pneg %p100
        %p471 = pneg %p129
        %p472 = pneg %p126
        %s473 = sand.u32 %s116, 1
        %s474 = sand.u32 %s116, 1
        %s475 = smul.addr %s474, 16
        %s476 = scalar_lea.vmem [#allocation8], %s475
        %s477 = smul.u32 8, %s19
        %s478 = smul.u32 8, %s19
        %p479 = scmp.eq.s32.totalorder %s19, 0
        // Predicated region
        $region156: #{encoder_block.4} parent=142 // pred_check
          %p480 = pneg %p479
        $region157: #{encoder_block.4} parent=142 // pred_check_branch
          %482 = sbr.rel (%p480) target = $region159
        $region158: #{encoder_block.4} parent=142 // pred_region
          %vm483 = vcmask 31744
          %484 = vst.msk [vmem:[#allocation2] sm:$0xff] %vm483, -inf
          %485 = vst.msk [vmem:[#allocation2 + $0x8] sm:$0xff] %vm483, -inf
          %486 = vst.msk [vmem:[#allocation3] sm:$0xff] %vm483, 0.0
          %487 = vst.msk [vmem:[#allocation3 + $0x8] sm:$0xff] %vm483, 0.0
          %488 = vst [vmem:[#allocation4] sm:$0xff] 0.0
          %489 = vst [vmem:[#allocation4 + $0x8] sm:$0xff] 0.0
        $region159: #{encoder_block.4} parent=142 // pred_fallthru
          _
        %v490 = vld [vmem:[%s435] sm:$0x1]
        %v491 = vld [vmem:[%s435 + $0x4] sm:$0x1]
        %v492 = vld [vmem:[%s435 + $0x8] sm:$0x1]
        %v493 = vld [vmem:[%s435 + $0xc] sm:$0x1]
        %v494 = vld [vmem:[%s435 + $0x10] sm:$0x1]
        %v495 = vld [vmem:[%s435 + $0x14] sm:$0x1]
        %v496 = vld [vmem:[%s435 + $0x18] sm:$0x1]
        %v497 = vld [vmem:[%s435 + $0x1c] sm:$0x1]
        %v498 = vld [vmem:[%s435 + $0x20] sm:$0x1]
        %v499 = vld [vmem:[%s435 + $0x24] sm:$0x1]
        %v500 = vld [vmem:[%s435 + $0x28] sm:$0x1]
        %v501 = vld [vmem:[%s435 + $0x2c] sm:$0x1]
        %v502 = vld [vmem:[%s435 + $0x30] sm:$0x1]
        %v503 = vld [vmem:[%s435 + $0x34] sm:$0x1]
        %v504 = vld [vmem:[%s435 + $0x38] sm:$0x1]
        %v505 = vld [vmem:[%s435 + $0x3c] sm:$0x1]
        %v506 = vld [vmem:[%s442] sm:$0x1]
        %v507 = vld [vmem:[%s442 + $0x4] sm:$0x1]
        %v508 = vld [vmem:[%s442 + $0x8] sm:$0x1]
        %v509 = vld [vmem:[%s442 + $0xc] sm:$0x1]
        %v510 = vld [vmem:[%s442 + $0x10] sm:$0x1]
        %v511 = vld [vmem:[%s442 + $0x14] sm:$0x1]
        %v512 = vld [vmem:[%s442 + $0x18] sm:$0x1]
        %v513 = vld [vmem:[%s442 + $0x1c] sm:$0x1]
        %v514 = vld [vmem:[%s449] sm:$0x1]
        %v515 = vld [vmem:[%s449 + $0x4] sm:$0x1]
        %v516 = vld [vmem:[%s449 + $0x8] sm:$0x1]
        %v517 = vld [vmem:[%s449 + $0xc] sm:$0x1]
        %v518 = vld [vmem:[%s449 + $0x10] sm:$0x1]
        %v519 = vld [vmem:[%s449 + $0x14] sm:$0x1]
        %v520 = vld [vmem:[%s449 + $0x18] sm:$0x1]
        %v521 = vld [vmem:[%s449 + $0x1c] sm:$0x1]
        %v538 = vrot.slane %v491, 7
        %vm539 = vcmask 1041409
        %v540 = vsel %vm539, %v538, %v490
        %v541 = vrot.slane %v492, 6
        %vm542 = vcmask 1042434
        %v543 = vsel %vm542, %v541, %v540
        %v544 = vrot.slane %v493, 5
        %vm545 = vcmask 1043459
        %v546 = vsel %vm545, %v544, %v543
        %v547 = vrot.slane %v494, 4
        %vm548 = vcmask 1044484
        %v549 = vsel %vm548, %v547, %v546
        %v550 = vrot.slane %v495, 3
        %vm551 = vcmask 1045509
        %v552 = vsel %vm551, %v550, %v549
        %v553 = vrot.slane %v496, 2
        %vm554 = vcmask 1046534
        %v555 = vsel %vm554, %v553, %v552
        %v556 = vrot.slane %v497, 1
        %vm557 = vcmask 1047559
        %v558 = vsel %vm557, %v556, %v555
        %v559 = vrot.slane %v499, 7
        %v560 = vsel %vm539, %v559, %v498
        %v561 = vrot.slane %v500, 6
        %v562 = vsel %vm542, %v561, %v560
        %v563 = vrot.slane %v501, 5
        %v564 = vsel %vm545, %v563, %v562
        %v565 = vrot.slane %v502, 4
        %v566 = vsel %vm548, %v565, %v564
        %v567 = vrot.slane %v503, 3
        %v568 = vsel %vm551, %v567, %v566
        %v569 = vrot.slane %v504, 2
        %v570 = vsel %vm554, %v569, %v568
        %v571 = vrot.slane %v505, 1
        %v572 = vsel %vm557, %v571, %v570
        %v581 = vrot.slane %v507, 7
        %v582 = vsel %vm539, %v581, %v506
        %v583 = vrot.slane %v508, 6
        %v584 = vsel %vm542, %v583, %v582
        %v585 = vrot.slane %v509, 5
        %v586 = vsel %vm545, %v585, %v584
        %v587 = vrot.slane %v510, 4
        %v588 = vsel %vm548, %v587, %v586
        %v589 = vrot.slane %v511, 3
        %v590 = vsel %vm551, %v589, %v588
        %v591 = vrot.slane %v512, 2
        %v592 = vsel %vm554, %v591, %v590
        %v593 = vrot.slane %v513, 1
        %v594 = vsel %vm557, %v593, %v592
        %vm595 = vcmask 261120
        %v596 = vsel %vm595, %v558, 0
        %v598 = vsel %vm595, %v572, 0
        %v600 = vsel %vm595, %v594, 0
        %602 = vmatprep.subr.mxu0 0.0
        %603 = vmatpush1.xpose.msra.mxu0 0.0
        %604 = vmatprep.subr.mxu0 0.0
        %605 = vmatpush1.xpose.msra.mxu0 0.0
        %606 = vmatprep.subr.mxu0 0.0
        %607 = vmatpush1.xpose.msra.mxu0 0.0
        %608 = vmatprep.subr.mxu0 0.0
        %609 = vmatpush1.xpose.msra.mxu0 0.0
        %610 = vmatprep.subr.mxu0 0.0
        %611 = vmatpush1.xpose.msra.mxu0 0.0
        %612 = vmatprep.subr.mxu0 0.0
        %613 = vmatpush1.xpose.msra.mxu0 0.0
        %614 = vmatprep.subr.mxu0 0.0
        %615 = vmatpush1.xpose.msra.mxu0 0.0
        %616 = vmatprep.subr.mxu0 0.0
        %617 = vmatpush1.xpose.msra.mxu0 0.0
        %618 = vmatprep.subr.mxu0 0.0
        %619 = vmatpush1.xpose.msra.mxu0 0.0
        %620 = vmatprep.subr.mxu0 0.0
        %621 = vmatpush1.xpose.msra.mxu0 0.0
        %622 = vmatprep.subr.mxu0 0.0
        %623 = vmatpush1.xpose.msra.mxu0 0.0
        %624 = vmatprep.subr.mxu0 0.0
        %625 = vmatpush1.xpose.msra.mxu0 0.0
        %626 = vmatprep.subr.mxu0 0.0
        %627 = vmatpush1.xpose.msra.mxu0 0.0
        %628 = vmatprep.subr.mxu0 0.0
        %629 = vmatpush1.xpose.msra.mxu0 0.0
        %630 = vmatprep.subr.mxu0 0.0
        %631 = vmatpush1.xpose.msra.mxu0 0.0
        %632 = vmatprep.subr.mxu0 0.0
        %633 = vmatpush1.xpose.msra.mxu0 %v600
        %634 = vmatprep.subr.mxu0 0.0
        %635 = vmatpush2.xpose.msra.mxu0 0.0
        %636 = vmatprep.subr.mxu0 0.0
        %637 = vmatpush2.xpose.msra.mxu0 0.0
        %638 = vmatprep.subr.mxu0 0.0
        %639 = vmatpush2.xpose.msra.mxu0 0.0
        %640 = vmatprep.subr.mxu0 0.0
        %641 = vmatpush2.xpose.msra.mxu0 0.0
        %642 = vmatprep.subr.mxu0 0.0
        %643 = vmatpush2.xpose.msra.mxu0 0.0
        %644 = vmatprep.subr.mxu0 0.0
        %645 = vmatpush2.xpose.msra.mxu0 0.0
        %646 = vmatprep.subr.mxu0 0.0
        %647 = vmatpush2.xpose.msra.mxu0 0.0
        %648 = vmatprep.subr.mxu0 0.0
        %649 = vmatpush2.xpose.msra.mxu0 0.0
        %650 = vmatprep.subr.mxu0 0.0
        %651 = vmatpush2.xpose.msra.mxu0 0.0
        %652 = vmatprep.subr.mxu0 0.0
        %653 = vmatpush2.xpose.msra.mxu0 0.0
        %654 = vmatprep.subr.mxu0 0.0
        %655 = vmatpush2.xpose.msra.mxu0 0.0
        %656 = vmatprep.subr.mxu0 0.0
        %657 = vmatpush2.xpose.msra.mxu0 0.0
        %658 = vmatprep.subr.mxu0 0.0
        %659 = vmatpush2.xpose.msra.mxu0 0.0
        %660 = vmatprep.subr.mxu0 0.0
        %661 = vmatpush2.xpose.msra.mxu0 0.0
        %662 = vmatprep.subr.mxu0 0.0
        %663 = vmatpush2.xpose.msra.mxu0 0.0
        %664 = vmatprep.subr.mxu0 0.0
        %665 = vmatpush2.xpose.msra.mxu0 0.0
        %666 = vmatprep.mubr.f32.mxu0 0.0
        %667 = vmatmul.mubr.f32.gmra.mxu0 %v596
        %v668 = vpop.f32.mrf.mxu0
        %v669 = vadd.f32 0.0, %v668
        %v670 = vpop.f32.mrf.mxu0
        %671 = vmatprep.mubr.f32.mxu0 0.0
        %672 = vmatmul.mubr.f32.gmra.mxu0 %v598
        %v673 = vpop.f32.mrf.mxu0
        %v674 = vadd.f32 0.0, %v673
        %v675 = vpop.f32.mrf.mxu0
        %676 = vdwg.mxu0
        %v677 = vmul.f32 %v669, 0.17677669
        %v678 = vmul.f32 %v674, 0.17677669
        %v679 = vld [vmem:[#allocation2] sm:$0xff]
        %v680 = vld [vmem:[#allocation2 + $0x8] sm:$0xff]
        %vm681 = vcmask 64512
        %v682 = vsel %vm681, %v677, -inf
        %683 = vmax.xlane.f32.xlu0 %v682
        %v684 = vpop.xlane.xlu0 %683
        %v685 = vsel %vm681, %v678, -inf
        %686 = vmax.xlane.f32.xlu0 %v685
        %v687 = vpop.xlane.xlu0 %686
        %v688 = vmax.f32 %v679, %v684
        %v689 = vmax.f32 %v680, %v687
        %v690 = vsub.f32 %v679, %v688
        %v691 = vsub.f32 %v680, %v689
        %v692 = vmul.f32 %v690, 1.442695
        %v693 = vpow.pop %v692
        %v694 = vmul.f32 %v691, 1.442695
        %v695 = vpow.pop %v694
        %697 = vset.pattern.permute.xlu0 0
        %698 = vperm.xlu0 %697, %v688
        %v699 = vpop.permute.xlu0 %698
        %702 = vset.pattern.permute.xlu0 0
        %703 = vperm.xlu0 %702, %v689
        %v704 = vpop.permute.xlu0 %703
        %v706 = vsub.f32 %v677, %v699
        %v707 = vsub.f32 %v678, %v704
        %v708 = vmul.f32 %v706, 1.442695
        %v709 = vpow.pop %v708
        %v710 = vmul.f32 %v707, 1.442695
        %v711 = vpow.pop %v710
        %v712 = vld [vmem:[#allocation3] sm:$0xff]
        %v713 = vld [vmem:[#allocation3 + $0x8] sm:$0xff]
        %v714 = vmul.f32 %v693, %v712
        %v715 = vmul.f32 %v695, %v713
        %v716 = vsel %vm681, %v709, 0.0
        %717 = vadd.xlane.f32.xlu0 %v716
        %v718 = vpop.xlane.xlu0 %717
        %v719 = vsel %vm681, %v711, 0.0
        %720 = vadd.xlane.f32.xlu0 %v719
        %v721 = vpop.xlane.xlu0 %720
        %v722 = vadd.f32 %v714, %v718
        %v723 = vadd.f32 %v715, %v721
        %vm724 = vcmask 7168
        %725 = vst.msk [vmem:[#allocation3] sm:$0xff] %vm724, %v722
        %726 = vst.msk [vmem:[#allocation3 + $0x8] sm:$0xff] %vm724, %v723
        %727 = vst.msk [vmem:[#allocation2] sm:$0xff] %vm724, %v688
        %728 = vst.msk [vmem:[#allocation2 + $0x8] sm:$0xff] %vm724, %v689
        %v729 = vld [vmem:[#allocation4] sm:$0xff]
        %v730 = vld [vmem:[#allocation4 + $0x8] sm:$0xff]
        %732 = vset.pattern.permute.xlu0 0
        %733 = vperm.xlu0 %732, %v693
        %v734 = vpop.permute.xlu0 %733
        %737 = vset.pattern.permute.xlu0 0
        %738 = vperm.xlu0 %737, %v695
        %v739 = vpop.permute.xlu0 %738
        %v741 = vmul.f32 %v734, %v729
        %v742 = vmul.f32 %v739, %v730
        %v751 = vrot.slane %v515, 7
        %v752 = vsel %vm539, %v751, %v514
        %v753 = vrot.slane %v516, 6
        %v754 = vsel %vm542, %v753, %v752
        %v755 = vrot.slane %v517, 5
        %v756 = vsel %vm545, %v755, %v754
        %v757 = vrot.slane %v518, 4
        %v758 = vsel %vm548, %v757, %v756
        %v759 = vrot.slane %v519, 3
        %v760 = vsel %vm551, %v759, %v758
        %v761 = vrot.slane %v520, 2
        %v762 = vsel %vm554, %v761, %v760
        %v763 = vrot.slane %v521, 1
        %v764 = vsel %vm557, %v763, %v762
        %v767 = vsel %vm681, %v709, 0
        %v770 = vsel %vm681, %v711, 0
        %772 = vmatprep.subr.mxu0 0.0
        %773 = vmatpush1.msra.mxu0 0.0
        %774 = vmatprep.subr.mxu0 0.0
        %775 = vmatpush1.msra.mxu0 0.0
        %776 = vmatprep.subr.mxu0 0.0
        %777 = vmatpush1.msra.mxu0 0.0
        %778 = vmatprep.subr.mxu0 0.0
        %779 = vmatpush1.msra.mxu0 0.0
        %780 = vmatprep.subr.mxu0 0.0
        %781 = vmatpush1.msra.mxu0 0.0
        %782 = vmatprep.subr.mxu0 0.0
        %783 = vmatpush1.msra.mxu0 0.0
        %784 = vmatprep.subr.mxu0 0.0
        %785 = vmatpush1.msra.mxu0 0.0
        %786 = vmatprep.subr.mxu0 0.0
        %787 = vmatpush1.msra.mxu0 0.0
        %788 = vmatprep.subr.mxu0 0.0
        %789 = vmatpush1.msra.mxu0 0.0
        %790 = vmatprep.subr.mxu0 0.0
        %791 = vmatpush1.msra.mxu0 0.0
        %792 = vmatprep.subr.mxu0 0.0
        %793 = vmatpush1.msra.mxu0 0.0
        %794 = vmatprep.subr.mxu0 0.0
        %795 = vmatpush1.msra.mxu0 0.0
        %796 = vmatprep.subr.mxu0 0.0
        %797 = vmatpush1.msra.mxu0 0.0
        %798 = vmatprep.subr.mxu0 0.0
        %799 = vmatpush1.msra.mxu0 0.0
        %800 = vmatprep.subr.mxu0 0.0
        %801 = vmatpush1.msra.mxu0 0.0
        %802 = vmatprep.subr.mxu0 0.0
        %803 = vmatpush1.msra.mxu0 %v764
        %804 = vmatprep.subr.mxu0 0.0
        %805 = vmatpush2.msra.mxu0 0.0
        %806 = vmatprep.subr.mxu0 0.0
        %807 = vmatpush2.msra.mxu0 0.0
        %808 = vmatprep.subr.mxu0 0.0
        %809 = vmatpush2.msra.mxu0 0.0
        %810 = vmatprep.subr.mxu0 0.0
        %811 = vmatpush2.msra.mxu0 0.0
        %812 = vmatprep.subr.mxu0 0.0
        %813 = vmatpush2.msra.mxu0 0.0
        %814 = vmatprep.subr.mxu0 0.0
        %815 = vmatpush2.msra.mxu0 0.0
        %816 = vmatprep.subr.mxu0 0.0
        %817 = vmatpush2.msra.mxu0 0.0
        %818 = vmatprep.subr.mxu0 0.0
        %819 = vmatpush2.msra.mxu0 0.0
        %820 = vmatprep.subr.mxu0 0.0
        %821 = vmatpush2.msra.mxu0 0.0
        %822 = vmatprep.subr.mxu0 0.0
        %823 = vmatpush2.msra.mxu0 0.0
        %824 = vmatprep.subr.mxu0 0.0
        %825 = vmatpush2.msra.mxu0 0.0
        %826 = vmatprep.subr.mxu0 0.0
        %827 = vmatpush2.msra.mxu0 0.0
        %828 = vmatprep.subr.mxu0 0.0
        %829 = vmatpush2.msra.mxu0 0.0
        %830 = vmatprep.subr.mxu0 0.0
        %831 = vmatpush2.msra.mxu0 0.0
        %832 = vmatprep.subr.mxu0 0.0
        %833 = vmatpush2.msra.mxu0 0.0
        %834 = vmatprep.subr.mxu0 0.0
        %835 = vmatpush2.msra.mxu0 0.0
        %836 = vmatprep.mubr.f32.mxu0 0.0
        %837 = vmatmul.mubr.f32.gmra.mxu0 %v767
        %v838 = vpop.f32.mrf.mxu0
        %v839 = vadd.f32 0.0, %v838
        %v840 = vpop.f32.mrf.mxu0
        %841 = vmatprep.mubr.f32.mxu0 0.0
        %842 = vmatmul.mubr.f32.gmra.mxu0 %v770
        %v843 = vpop.f32.mrf.mxu0
        %v844 = vadd.f32 0.0, %v843
        %v845 = vpop.f32.mrf.mxu0
        %846 = vdwg.mxu0
        %v847 = vadd.f32 %v741, %v839
        %v848 = vadd.f32 %v742, %v844
        %849 = vst.msk [vmem:[#allocation4] sm:$0xff] %vm595, %v847
        %850 = vst.msk [vmem:[#allocation4 + $0x8] sm:$0xff] %vm595, %v848
        %v851 = vld [vmem:[%s435 + $0x1] sm:$0x1]
        %v852 = vld [vmem:[%s435 + $0x5] sm:$0x1]
        %v853 = vld [vmem:[%s435 + $0x9] sm:$0x1]
        %v854 = vld [vmem:[%s435 + $0xd] sm:$0x1]
        %v855 = vld [vmem:[%s435 + $0x11] sm:$0x1]
        %v856 = vld [vmem:[%s435 + $0x15] sm:$0x1]
        %v857 = vld [vmem:[%s435 + $0x19] sm:$0x1]
        %v858 = vld [vmem:[%s435 + $0x1d] sm:$0x1]
        %v859 = vld [vmem:[%s435 + $0x21] sm:$0x1]
        %v860 = vld [vmem:[%s435 + $0x25] sm:$0x1]
        %v861 = vld [vmem:[%s435 + $0x29] sm:$0x1]
        %v862 = vld [vmem:[%s435 + $0x2d] sm:$0x1]
        %v863 = vld [vmem:[%s435 + $0x31] sm:$0x1]
        %v864 = vld [vmem:[%s435 + $0x35] sm:$0x1]
        %v865 = vld [vmem:[%s435 + $0x39] sm:$0x1]
        %v866 = vld [vmem:[%s435 + $0x3d] sm:$0x1]
        %v867 = vld [vmem:[%s442 + $0x1] sm:$0x1]
        %v868 = vld [vmem:[%s442 + $0x5] sm:$0x1]
        %v869 = vld [vmem:[%s442 + $0x9] sm:$0x1]
        %v870 = vld [vmem:[%s442 + $0xd] sm:$0x1]
        %v871 = vld [vmem:[%s442 + $0x11] sm:$0x1]
        %v872 = vld [vmem:[%s442 + $0x15] sm:$0x1]
        %v873 = vld [vmem:[%s442 + $0x19] sm:$0x1]
        %v874 = vld [vmem:[%s442 + $0x1d] sm:$0x1]
        %v875 = vld [vmem:[%s449 + $0x1] sm:$0x1]
        %v876 = vld [vmem:[%s449 + $0x5] sm:$0x1]
        %v877 = vld [vmem:[%s449 + $0x9] sm:$0x1]
        %v878 = vld [vmem:[%s449 + $0xd] sm:$0x1]
        %v879 = vld [vmem:[%s449 + $0x11] sm:$0x1]
        %v880 = vld [vmem:[%s449 + $0x15] sm:$0x1]
        %v881 = vld [vmem:[%s449 + $0x19] sm:$0x1]
        %v882 = vld [vmem:[%s449 + $0x1d] sm:$0x1]
        %v899 = vrot.slane %v852, 7
        %v900 = vsel %vm539, %v899, %v851
        %v901 = vrot.slane %v853, 6
        %v902 = vsel %vm542, %v901, %v900
        %v903 = vrot.slane %v854, 5
        %v904 = vsel %vm545, %v903, %v902
        %v905 = vrot.slane %v855, 4
        %v906 = vsel %vm548, %v905, %v904
        %v907 = vrot.slane %v856, 3
        %v908 = vsel %vm551, %v907, %v906
        %v909 = vrot.slane %v857, 2
        %v910 = vsel %vm554, %v909, %v908
        %v911 = vrot.slane %v858, 1
        %v912 = vsel %vm557, %v911, %v910
        %v913 = vrot.slane %v860, 7
        %v914 = vsel %vm539, %v913, %v859
        %v915 = vrot.slane %v861, 6
        %v916 = vsel %vm542, %v915, %v914
        %v917 = vrot.slane %v862, 5
        %v918 = vsel %vm545, %v917, %v916
        %v919 = vrot.slane %v863, 4
        %v920 = vsel %vm548, %v919, %v918
        %v921 = vrot.slane %v864, 3
        %v922 = vsel %vm551, %v921, %v920
        %v923 = vrot.slane %v865, 2
        %v924 = vsel %vm554, %v923, %v922
        %v925 = vrot.slane %v866, 1
        %v926 = vsel %vm557, %v925, %v924
        %v935 = vrot.slane %v868, 7
        %v936 = vsel %vm539, %v935, %v867
        %v937 = vrot.slane %v869, 6
        %v938 = vsel %vm542, %v937, %v936
        %v939 = vrot.slane %v870, 5
        %v940 = vsel %vm545, %v939, %v938
        %v941 = vrot.slane %v871, 4
        %v942 = vsel %vm548, %v941, %v940
        %v943 = vrot.slane %v872, 3
        %v944 = vsel %vm551, %v943, %v942
        %v945 = vrot.slane %v873, 2
        %v946 = vsel %vm554, %v945, %v944
        %v947 = vrot.slane %v874, 1
        %v948 = vsel %vm557, %v947, %v946
        %v949 = vsel %vm595, %v912, 0
        %v951 = vsel %vm595, %v926, 0
        %v953 = vsel %vm595, %v948, 0
        %955 = vmatprep.subr.mxu0 0.0
        %956 = vmatpush1.xpose.msra.mxu0 0.0
        %957 = vmatprep.subr.mxu0 0.0
        %958 = vmatpush1.xpose.msra.mxu0 0.0
        %959 = vmatprep.subr.mxu0 0.0
        %960 = vmatpush1.xpose.msra.mxu0 0.0
        %961 = vmatprep.subr.mxu0 0.0
        %962 = vmatpush1.xpose.msra.mxu0 0.0
        %963 = vmatprep.subr.mxu0 0.0
        %964 = vmatpush1.xpose.msra.mxu0 0.0
        %965 = vmatprep.subr.mxu0 0.0
        %966 = vmatpush1.xpose.msra.mxu0 0.0
        %967 = vmatprep.subr.mxu0 0.0
        %968 = vmatpush1.xpose.msra.mxu0 0.0
        %969 = vmatprep.subr.mxu0 0.0
        %970 = vmatpush1.xpose.msra.mxu0 0.0
        %971 = vmatprep.subr.mxu0 0.0
        %972 = vmatpush1.xpose.msra.mxu0 0.0
        %973 = vmatprep.subr.mxu0 0.0
        %974 = vmatpush1.xpose.msra.mxu0 0.0
        %975 = vmatprep.subr.mxu0 0.0
        %976 = vmatpush1.xpose.msra.mxu0 0.0
        %977 = vmatprep.subr.mxu0 0.0
        %978 = vmatpush1.xpose.msra.mxu0 0.0
        %979 = vmatprep.subr.mxu0 0.0
        %980 = vmatpush1.xpose.msra.mxu0 0.0
        %981 = vmatprep.subr.mxu0 0.0
        %982 = vmatpush1.xpose.msra.mxu0 0.0
        %983 = vmatprep.subr.mxu0 0.0
        %984 = vmatpush1.xpose.msra.mxu0 0.0
        %985 = vmatprep.subr.mxu0 0.0
        %986 = vmatpush1.xpose.msra.mxu0 %v953
        %987 = vmatprep.subr.mxu0 0.0
        %988 = vmatpush2.xpose.msra.mxu0 0.0
        %989 = vmatprep.subr.mxu0 0.0
        %990 = vmatpush2.xpose.msra.mxu0 0.0
        %991 = vmatprep.subr.mxu0 0.0
        %992 = vmatpush2.xpose.msra.mxu0 0.0
        %993 = vmatprep.subr.mxu0 0.0
        %994 = vmatpush2.xpose.msra.mxu0 0.0
        %995 = vmatprep.subr.mxu0 0.0
        %996 = vmatpush2.xpose.msra.mxu0 0.0
        %997 = vmatprep.subr.mxu0 0.0
        %998 = vmatpush2.xpose.msra.mxu0 0.0
        %999 = vmatprep.subr.mxu0 0.0
        %1000 = vmatpush2.xpose.msra.mxu0 0.0
        %1001 = vmatprep.subr.mxu0 0.0
        %1002 = vmatpush2.xpose.msra.mxu0 0.0
        %1003 = vmatprep.subr.mxu0 0.0
        %1004 = vmatpush2.xpose.msra.mxu0 0.0
        %1005 = vmatprep.subr.mxu0 0.0
        %1006 = vmatpush2.xpose.msra.mxu0 0.0
        %1007 = vmatprep.subr.mxu0 0.0
        %1008 = vmatpush2.xpose.msra.mxu0 0.0
        %1009 = vmatprep.subr.mxu0 0.0
        %1010 = vmatpush2.xpose.msra.mxu0 0.0
        %1011 = vmatprep.subr.mxu0 0.0
        %1012 = vmatpush2.xpose.msra.mxu0 0.0
        %1013 = vmatprep.subr.mxu0 0.0
        %1014 = vmatpush2.xpose.msra.mxu0 0.0
        %1015 = vmatprep.subr.mxu0 0.0
        %1016 = vmatpush2.xpose.msra.mxu0 0.0
        %1017 = vmatprep.subr.mxu0 0.0
        %1018 = vmatpush2.xpose.msra.mxu0 0.0
        %1019 = vmatprep.mubr.f32.mxu0 0.0
        %1020 = vmatmul.mubr.f32.gmra.mxu0 %v949
        %v1021 = vpop.f32.mrf.mxu0
        %v1022 = vadd.f32 0.0, %v1021
        %v1023 = vpop.f32.mrf.mxu0
        %1024 = vmatprep.mubr.f32.mxu0 0.0
        %1025 = vmatmul.mubr.f32.gmra.mxu0 %v951
        %v1026 = vpop.f32.mrf.mxu0
        %v1027 = vadd.f32 0.0, %v1026
        %v1028 = vpop.f32.mrf.mxu0
        %1029 = vdwg.mxu0
        %v1030 = vmul.f32 %v1022, 0.17677669
        %v1031 = vmul.f32 %v1027, 0.17677669
        %v1032 = vld [vmem:[#allocation2] sm:$0xff]
        %v1033 = vld [vmem:[#allocation2 + $0x8] sm:$0xff]
        %v1034 = vsel %vm681, %v1030, -inf
        %1035 = vmax.xlane.f32.xlu0 %v1034
        %v1036 = vpop.xlane.xlu0 %1035
        %v1037 = vsel %vm681, %v1031, -inf
        %1038 = vmax.xlane.f32.xlu0 %v1037
        %v1039 = vpop.xlane.xlu0 %1038
        %v1040 = vmax.f32 %v1032, %v1036
        %v1041 = vmax.f32 %v1033, %v1039
        %v1042 = vsub.f32 %v1032, %v1040
        %v1043 = vsub.f32 %v1033, %v1041
        %v1044 = vmul.f32 %v1042, 1.442695
        %v1045 = vpow.pop %v1044
        %v1046 = vmul.f32 %v1043, 1.442695
        %v1047 = vpow.pop %v1046
        %1049 = vset.pattern.permute.xlu0 1
        %1050 = vperm.xlu0 %1049, %v1040
        %v1051 = vpop.permute.xlu0 %1050
        %1054 = vset.pattern.permute.xlu0 1
        %1055 = vperm.xlu0 %1054, %v1041
        %v1056 = vpop.permute.xlu0 %1055
        %v1058 = vsub.f32 %v1030, %v1051
        %v1059 = vsub.f32 %v1031, %v1056
        %v1060 = vmul.f32 %v1058, 1.442695
        %v1061 = vpow.pop %v1060
        %v1062 = vmul.f32 %v1059, 1.442695
        %v1063 = vpow.pop %v1062
        %v1064 = vld [vmem:[#allocation3] sm:$0xff]
        %v1065 = vld [vmem:[#allocation3 + $0x8] sm:$0xff]
        %v1066 = vmul.f32 %v1045, %v1064
        %v1067 = vmul.f32 %v1047, %v1065
        %v1068 = vsel %vm681, %v1061, 0.0
        %1069 = vadd.xlane.f32.xlu0 %v1068
        %v1070 = vpop.xlane.xlu0 %1069
        %v1071 = vsel %vm681, %v1063, 0.0
        %1072 = vadd.xlane.f32.xlu0 %v1071
        %v1073 = vpop.xlane.xlu0 %1072
        %v1074 = vadd.f32 %v1066, %v1070
        %v1075 = vadd.f32 %v1067, %v1073
        %vm1076 = vcmask 15368
        %1077 = vst.msk [vmem:[#allocation3] sm:$0xff] %vm1076, %v1074
        %1078 = vst.msk [vmem:[#allocation3 + $0x8] sm:$0xff] %vm1076, %v1075
        %1079 = vst.msk [vmem:[#allocation2] sm:$0xff] %vm1076, %v1040
        %1080 = vst.msk [vmem:[#allocation2 + $0x8] sm:$0xff] %vm1076, %v1041
        %v1081 = vld [vmem:[#allocation4] sm:$0xff]
        %v1082 = vld [vmem:[#allocation4 + $0x8] sm:$0xff]
        %1084 = vset.pattern.permute.xlu0 1
        %1085 = vperm.xlu0 %1084, %v1045
        %v1086 = vpop.permute.xlu0 %1085
        %1089 = vset.pattern.permute.xlu0 1
        %1090 = vperm.xlu0 %1089, %v1047
        %v1091 = vpop.permute.xlu0 %1090
        %v1093 = vmul.f32 %v1086, %v1081
        %v1094 = vmul.f32 %v1091, %v1082
        %v1103 = vrot.slane %v876, 7
        %v1104 = vsel %vm539, %v1103, %v875
        %v1105 = vrot.slane %v877, 6
        %v1106 = vsel %vm542, %v1105, %v1104
        %v1107 = vrot.slane %v878, 5
        %v1108 = vsel %vm545, %v1107, %v1106
        %v1109 = vrot.slane %v879, 4
        %v1110 = vsel %vm548, %v1109, %v1108
        %v1111 = vrot.slane %v880, 3
        %v1112 = vsel %vm551, %v1111, %v1110
        %v1113 = vrot.slane %v881, 2
        %v1114 = vsel %vm554, %v1113, %v1112
        %v1115 = vrot.slane %v882, 1
        %v1116 = vsel %vm557, %v1115, %v1114
        %v1119 = vsel %vm681, %v1061, 0
        %v1122 = vsel %vm681, %v1063, 0
        %1124 = vmatprep.subr.mxu0 0.0
        %1125 = vmatpush1.msra.mxu0 0.0
        %1126 = vmatprep.subr.mxu0 0.0
        %1127 = vmatpush1.msra.mxu0 0.0
        %1128 = vmatprep.subr.mxu0 0.0
        %1129 = vmatpush1.msra.mxu0 0.0
        %1130 = vmatprep.subr.mxu0 0.0
        %1131 = vmatpush1.msra.mxu0 0.0
        %1132 = vmatprep.subr.mxu0 0.0
        %1133 = vmatpush1.msra.mxu0 0.0
        %1134 = vmatprep.subr.mxu0 0.0
        %1135 = vmatpush1.msra.mxu0 0.0
        %1136 = vmatprep.subr.mxu0 0.0
        %1137 = vmatpush1.msra.mxu0 0.0
        %1138 = vmatprep.subr.mxu0 0.0
        %1139 = vmatpush1.msra.mxu0 0.0
        %1140 = vmatprep.subr.mxu0 0.0
        %1141 = vmatpush1.msra.mxu0 0.0
        %1142 = vmatprep.subr.mxu0 0.0
        %1143 = vmatpush1.msra.mxu0 0.0
        %1144 = vmatprep.subr.mxu0 0.0
        %1145 = vmatpush1.msra.mxu0 0.0
        %1146 = vmatprep.subr.mxu0 0.0
        %1147 = vmatpush1.msra.mxu0 0.0
        %1148 = vmatprep.subr.mxu0 0.0
        %1149 = vmatpush1.msra.mxu0 0.0
        %1150 = vmatprep.subr.mxu0 0.0
        %1151 = vmatpush1.msra.mxu0 0.0
        %1152 = vmatprep.subr.mxu0 0.0
        %1153 = vmatpush1.msra.mxu0 0.0
        %1154 = vmatprep.subr.mxu0 0.0
        %1155 = vmatpush1.msra.mxu0 %v1116
        %1156 = vmatprep.subr.mxu0 0.0
        %1157 = vmatpush2.msra.mxu0 0.0
        %1158 = vmatprep.subr.mxu0 0.0
        %1159 = vmatpush2.msra.mxu0 0.0
        %1160 = vmatprep.subr.mxu0 0.0
        %1161 = vmatpush2.msra.mxu0 0.0
        %1162 = vmatprep.subr.mxu0 0.0
        %1163 = vmatpush2.msra.mxu0 0.0
        %1164 = vmatprep.subr.mxu0 0.0
        %1165 = vmatpush2.msra.mxu0 0.0
        %1166 = vmatprep.subr.mxu0 0.0
        %1167 = vmatpush2.msra.mxu0 0.0
        %1168 = vmatprep.subr.mxu0 0.0
        %1169 = vmatpush2.msra.mxu0 0.0
        %1170 = vmatprep.subr.mxu0 0.0
        %1171 = vmatpush2.msra.mxu0 0.0
        %1172 = vmatprep.subr.mxu0 0.0
        %1173 = vmatpush2.msra.mxu0 0.0
        %1174 = vmatprep.subr.mxu0 0.0
        %1175 = vmatpush2.msra.mxu0 0.0
        %1176 = vmatprep.subr.mxu0 0.0
        %1177 = vmatpush2.msra.mxu0 0.0
        %1178 = vmatprep.subr.mxu0 0.0
        %1179 = vmatpush2.msra.mxu0 0.0
        %1180 = vmatprep.subr.mxu0 0.0
        %1181 = vmatpush2.msra.mxu0 0.0
        %1182 = vmatprep.subr.mxu0 0.0
        %1183 = vmatpush2.msra.mxu0 0.0
        %1184 = vmatprep.subr.mxu0 0.0
        %1185 = vmatpush2.msra.mxu0 0.0
        %1186 = vmatprep.subr.mxu0 0.0
        %1187 = vmatpush2.msra.mxu0 0.0
        %1188 = vmatprep.mubr.f32.mxu0 0.0
        %1189 = vmatmul.mubr.f32.gmra.mxu0 %v1119
        %v1190 = vpop.f32.mrf.mxu0
        %v1191 = vadd.f32 0.0, %v1190
        %v1192 = vpop.f32.mrf.mxu0
        %1193 = vmatprep.mubr.f32.mxu0 0.0
        %1194 = vmatmul.mubr.f32.gmra.mxu0 %v1122
        %v1195 = vpop.f32.mrf.mxu0
        %v1196 = vadd.f32 0.0, %v1195
        %v1197 = vpop.f32.mrf.mxu0
        %1198 = vdwg.mxu0
        %1201 = vrot.lane.b32.xlu0 %v1191, 32
        %v1202 = vpop.permute.xlu0 %1201
        %1203 = vrot.lane.b32.xlu0 %v1196, 32
        %v1204 = vpop.permute.xlu0 %1203
        %v1207 = vadd.f32 %v1093, %v1202
        %v1208 = vadd.f32 %v1094, %v1204
        %vm1209 = vcmask 523520
        %1210 = vst.msk [vmem:[#allocation4] sm:$0xff] %vm1209, %v1207
        %1211 = vst.msk [vmem:[#allocation4 + $0x8] sm:$0xff] %vm1209, %v1208
        %v1212 = vld [vmem:[%s435 + $0x2] sm:$0x1]
        %v1213 = vld [vmem:[%s435 + $0x6] sm:$0x1]
        %v1214 = vld [vmem:[%s435 + $0xa] sm:$0x1]
        %v1215 = vld [vmem:[%s435 + $0xe] sm:$0x1]
        %v1216 = vld [vmem:[%s435 + $0x12] sm:$0x1]
        %v1217 = vld [vmem:[%s435 + $0x16] sm:$0x1]
        %v1218 = vld [vmem:[%s435 + $0x1a] sm:$0x1]
        %v1219 = vld [vmem:[%s435 + $0x1e] sm:$0x1]
        %v1220 = vld [vmem:[%s435 + $0x22] sm:$0x1]
        %v1221 = vld [vmem:[%s435 + $0x26] sm:$0x1]
        %v1222 = vld [vmem:[%s435 + $0x2a] sm:$0x1]
        %v1223 = vld [vmem:[%s435 + $0x2e] sm:$0x1]
        %v1224 = vld [vmem:[%s435 + $0x32] sm:$0x1]
        %v1225 = vld [vmem:[%s435 + $0x36] sm:$0x1]
        %v1226 = vld [vmem:[%s435 + $0x3a] sm:$0x1]
        %v1227 = vld [vmem:[%s435 + $0x3e] sm:$0x1]
        %v1228 = vld [vmem:[%s442 + $0x2] sm:$0x1]
        %v1229 = vld [vmem:[%s442 + $0x6] sm:$0x1]
        %v1230 = vld [vmem:[%s442 + $0xa] sm:$0x1]
        %v1231 = vld [vmem:[%s442 + $0xe] sm:$0x1]
        %v1232 = vld [vmem:[%s442 + $0x12] sm:$0x1]
        %v1233 = vld [vmem:[%s442 + $0x16] sm:$0x1]
        %v1234 = vld [vmem:[%s442 + $0x1a] sm:$0x1]
        %v1235 = vld [vmem:[%s442 + $0x1e] sm:$0x1]
        %v1236 = vld [vmem:[%s449 + $0x2] sm:$0x1]
        %v1237 = vld [vmem:[%s449 + $0x6] sm:$0x1]
        %v1238 = vld [vmem:[%s449 + $0xa] sm:$0x1]
        %v1239 = vld [vmem:[%s449 + $0xe] sm:$0x1]
        %v1240 = vld [vmem:[%s449 + $0x12] sm:$0x1]
        %v1241 = vld [vmem:[%s449 + $0x16] sm:$0x1]
        %v1242 = vld [vmem:[%s449 + $0x1a] sm:$0x1]
        %v1243 = vld [vmem:[%s449 + $0x1e] sm:$0x1]
        %v1260 = vrot.slane %v1213, 7
        %v1261 = vsel %vm539, %v1260, %v1212
        %v1262 = vrot.slane %v1214, 6
        %v1263 = vsel %vm542, %v1262, %v1261
        %v1264 = vrot.slane %v1215, 5
        %v1265 = vsel %vm545, %v1264, %v1263
        %v1266 = vrot.slane %v1216, 4
        %v1267 = vsel %vm548, %v1266, %v1265
        %v1268 = vrot.slane %v1217, 3
        %v1269 = vsel %vm551, %v1268, %v1267
        %v1270 = vrot.slane %v1218, 2
        %v1271 = vsel %vm554, %v1270, %v1269
        %v1272 = vrot.slane %v1219, 1
        %v1273 = vsel %vm557, %v1272, %v1271
        %v1274 = vrot.slane %v1221, 7
        %v1275 = vsel %vm539, %v1274, %v1220
        %v1276 = vrot.slane %v1222, 6
        %v1277 = vsel %vm542, %v1276, %v1275
        %v1278 = vrot.slane %v1223, 5
        %v1279 = vsel %vm545, %v1278, %v1277
        %v1280 = vrot.slane %v1224, 4
        %v1281 = vsel %vm548, %v1280, %v1279
        %v1282 = vrot.slane %v1225, 3
        %v1283 = vsel %vm551, %v1282, %v1281
        %v1284 = vrot.slane %v1226, 2
        %v1285 = vsel %vm554, %v1284, %v1283
        %v1286 = vrot.slane %v1227, 1
        %v1287 = vsel %vm557, %v1286, %v1285
        %v1296 = vrot.slane %v1229, 7
        %v1297 = vsel %vm539, %v1296, %v1228
        %v1298 = vrot.slane %v1230, 6
        %v1299 = vsel %vm542, %v1298, %v1297
        %v1300 = vrot.slane %v1231, 5
        %v1301 = vsel %vm545, %v1300, %v1299
        %v1302 = vrot.slane %v1232, 4
        %v1303 = vsel %vm548, %v1302, %v1301
        %v1304 = vrot.slane %v1233, 3
        %v1305 = vsel %vm551, %v1304, %v1303
        %v1306 = vrot.slane %v1234, 2
        %v1307 = vsel %vm554, %v1306, %v1305
        %v1308 = vrot.slane %v1235, 1
        %v1309 = vsel %vm557, %v1308, %v1307
        %v1310 = vsel %vm595, %v1273, 0
        %v1312 = vsel %vm595, %v1287, 0
        %v1314 = vsel %vm595, %v1309, 0
        %1316 = vmatprep.subr.mxu0 0.0
        %1317 = vmatpush1.xpose.msra.mxu0 0.0
        %1318 = vmatprep.subr.mxu0 0.0
        %1319 = vmatpush1.xpose.msra.mxu0 0.0
        %1320 = vmatprep.subr.mxu0 0.0
        %1321 = vmatpush1.xpose.msra.mxu0 0.0
        %1322 = vmatprep.subr.mxu0 0.0
        %1323 = vmatpush1.xpose.msra.mxu0 0.0
        %1324 = vmatprep.subr.mxu0 0.0
        %1325 = vmatpush1.xpose.msra.mxu0 0.0
        %1326 = vmatprep.subr.mxu0 0.0
        %1327 = vmatpush1.xpose.msra.mxu0 0.0
        %1328 = vmatprep.subr.mxu0 0.0
        %1329 = vmatpush1.xpose.msra.mxu0 0.0
        %1330 = vmatprep.subr.mxu0 0.0
        %1331 = vmatpush1.xpose.msra.mxu0 0.0
        %1332 = vmatprep.subr.mxu0 0.0
        %1333 = vmatpush1.xpose.msra.mxu0 0.0
        %1334 = vmatprep.subr.mxu0 0.0
        %1335 = vmatpush1.xpose.msra.mxu0 0.0
        %1336 = vmatprep.subr.mxu0 0.0
        %1337 = vmatpush1.xpose.msra.mxu0 0.0
        %1338 = vmatprep.subr.mxu0 0.0
        %1339 = vmatpush1.xpose.msra.mxu0 0.0
        %1340 = vmatprep.subr.mxu0 0.0
        %1341 = vmatpush1.xpose.msra.mxu0 0.0
        %1342 = vmatprep.subr.mxu0 0.0
        %1343 = vmatpush1.xpose.msra.mxu0 0.0
        %1344 = vmatprep.subr.mxu0 0.0
        %1345 = vmatpush1.xpose.msra.mxu0 0.0
        %1346 = vmatprep.subr.mxu0 0.0
        %1347 = vmatpush1.xpose.msra.mxu0 %v1314
        %1348 = vmatprep.subr.mxu0 0.0
        %1349 = vmatpush2.xpose.msra.mxu0 0.0
        %1350 = vmatprep.subr.mxu0 0.0
        %1351 = vmatpush2.xpose.msra.mxu0 0.0
        %1352 = vmatprep.subr.mxu0 0.0
        %1353 = vmatpush2.xpose.msra.mxu0 0.0
        %1354 = vmatprep.subr.mxu0 0.0
        %1355 = vmatpush2.xpose.msra.mxu0 0.0
        %1356 = vmatprep.subr.mxu0 0.0
        %1357 = vmatpush2.xpose.msra.mxu0 0.0
        %1358 = vmatprep.subr.mxu0 0.0
        %1359 = vmatpush2.xpose.msra.mxu0 0.0
        %1360 = vmatprep.subr.mxu0 0.0
        %1361 = vmatpush2.xpose.msra.mxu0 0.0
        %1362 = vmatprep.subr.mxu0 0.0
        %1363 = vmatpush2.xpose.msra.mxu0 0.0
        %1364 = vmatprep.subr.mxu0 0.0
        %1365 = vmatpush2.xpose.msra.mxu0 0.0
        %1366 = vmatprep.subr.mxu0 0.0
        %1367 = vmatpush2.xpose.msra.mxu0 0.0
        %1368 = vmatprep.subr.mxu0 0.0
        %1369 = vmatpush2.xpose.msra.mxu0 0.0
        %1370 = vmatprep.subr.mxu0 0.0
        %1371 = vmatpush2.xpose.msra.mxu0 0.0
        %1372 = vmatprep.subr.mxu0 0.0
        %1373 = vmatpush2.xpose.msra.mxu0 0.0
        %1374 = vmatprep.subr.mxu0 0.0
        %1375 = vmatpush2.xpose.msra.mxu0 0.0
        %1376 = vmatprep.subr.mxu0 0.0
        %1377 = vmatpush2.xpose.msra.mxu0 0.0
        %1378 = vmatprep.subr.mxu0 0.0
        %1379 = vmatpush2.xpose.msra.mxu0 0.0
        %1380 = vmatprep.mubr.f32.mxu0 0.0
        %1381 = vmatmul.mubr.f32.gmra.mxu0 %v1310
        %v1382 = vpop.f32.mrf.mxu0
        %v1383 = vadd.f32 0.0, %v1382
        %v1384 = vpop.f32.mrf.mxu0
        %1385 = vmatprep.mubr.f32.mxu0 0.0
        %1386 = vmatmul.mubr.f32.gmra.mxu0 %v1312
        %v1387 = vpop.f32.mrf.mxu0
        %v1388 = vadd.f32 0.0, %v1387
        %v1389 = vpop.f32.mrf.mxu0
        %1390 = vdwg.mxu0
        %v1391 = vmul.f32 %v1383, 0.17677669
        %v1392 = vmul.f32 %v1388, 0.17677669
        %v1393 = vld [vmem:[#allocation2] sm:$0xff]
        %v1394 = vld [vmem:[#allocation2 + $0x8] sm:$0xff]
        %v1395 = vsel %vm681, %v1391, -inf
        %1396 = vmax.xlane.f32.xlu0 %v1395
        %v1397 = vpop.xlane.xlu0 %1396
        %v1398 = vsel %vm681, %v1392, -inf
        %1399 = vmax.xlane.f32.xlu0 %v1398
        %v1400 = vpop.xlane.xlu0 %1399
        %v1401 = vmax.f32 %v1393, %v1397
        %v1402 = vmax.f32 %v1394, %v1400
        %v1403 = vsub.f32 %v1393, %v1401
        %v1404 = vsub.f32 %v1394, %v1402
        %v1405 = vmul.f32 %v1403, 1.442695
        %v1406 = vpow.pop %v1405
        %v1407 = vmul.f32 %v1404, 1.442695
        %v1408 = vpow.pop %v1407
        %1410 = vset.pattern.permute.xlu0 2
        %1411 = vperm.xlu0 %1410, %v1401
        %v1412 = vpop.permute.xlu0 %1411
        %1415 = vset.pattern.permute.xlu0 2
        %1416 = vperm.xlu0 %1415, %v1402
        %v1417 = vpop.permute.xlu0 %1416
        %v1419 = vsub.f32 %v1391, %v1412
        %v1420 = vsub.f32 %v1392, %v1417
        %v1421 = vmul.f32 %v1419, 1.442695
        %v1422 = vpow.pop %v1421
        %v1423 = vmul.f32 %v1420, 1.442695
        %v1424 = vpow.pop %v1423
        %v1425 = vld [vmem:[#allocation3] sm:$0xff]
        %v1426 = vld [vmem:[#allocation3 + $0x8] sm:$0xff]
        %v1427 = vmul.f32 %v1406, %v1425
        %v1428 = vmul.f32 %v1408, %v1426
        %v1429 = vsel %vm681, %v1422, 0.0
        %1430 = vadd.xlane.f32.xlu0 %v1429
        %v1431 = vpop.xlane.xlu0 %1430
        %v1432 = vsel %vm681, %v1424, 0.0
        %1433 = vadd.xlane.f32.xlu0 %v1432
        %v1434 = vpop.xlane.xlu0 %1433
        %v1435 = vadd.f32 %v1427, %v1431
        %v1436 = vadd.f32 %v1428, %v1434
        %vm1437 = vcmask 23568
        %1438 = vst.msk [vmem:[#allocation3] sm:$0xff] %vm1437, %v1435
        %1439 = vst.msk [vmem:[#allocation3 + $0x8] sm:$0xff] %vm1437, %v1436
        %1440 = vst.msk [vmem:[#allocation2] sm:$0xff] %vm1437, %v1401
        %1441 = vst.msk [vmem:[#allocation2 + $0x8] sm:$0xff] %vm1437, %v1402
        %v1442 = vld [vmem:[#allocation4] sm:$0xff]
        %v1443 = vld [vmem:[#allocation4 + $0x8] sm:$0xff]
        %1445 = vset.pattern.permute.xlu0 2
        %1446 = vperm.xlu0 %1445, %v1406
        %v1447 = vpop.permute.xlu0 %1446
        %1450 = vset.pattern.permute.xlu0 2
        %1451 = vperm.xlu0 %1450, %v1408
        %v1452 = vpop.permute.xlu0 %1451
        %v1454 = vmul.f32 %v1447, %v1442
        %v1455 = vmul.f32 %v1452, %v1443
        %v1464 = vrot.slane %v1237, 7
        %v1465 = vsel %vm539, %v1464, %v1236
        %v1466 = vrot.slane %v1238, 6
        %v1467 = vsel %vm542, %v1466, %v1465
        %v1468 = vrot.slane %v1239, 5
        %v1469 = vsel %vm545, %v1468, %v1467
        %v1470 = vrot.slane %v1240, 4
        %v1471 = vsel %vm548, %v1470, %v1469
        %v1472 = vrot.slane %v1241, 3
        %v1473 = vsel %vm551, %v1472, %v1471
        %v1474 = vrot.slane %v1242, 2
        %v1475 = vsel %vm554, %v1474, %v1473
        %v1476 = vrot.slane %v1243, 1
        %v1477 = vsel %vm557, %v1476, %v1475
        %v1480 = vsel %vm681, %v1422, 0
        %v1483 = vsel %vm681, %v1424, 0
        %1485 = vmatprep.subr.mxu0 0.0
        %1486 = vmatpush1.msra.mxu0 0.0
        %1487 = vmatprep.subr.mxu0 0.0
        %1488 = vmatpush1.msra.mxu0 0.0
        %1489 = vmatprep.subr.mxu0 0.0
        %1490 = vmatpush1.msra.mxu0 0.0
        %1491 = vmatprep.subr.mxu0 0.0
        %1492 = vmatpush1.msra.mxu0 0.0
        %1493 = vmatprep.subr.mxu0 0.0
        %1494 = vmatpush1.msra.mxu0 0.0
        %1495 = vmatprep.subr.mxu0 0.0
        %1496 = vmatpush1.msra.mxu0 0.0
        %1497 = vmatprep.subr.mxu0 0.0
        %1498 = vmatpush1.msra.mxu0 0.0
        %1499 = vmatprep.subr.mxu0 0.0
        %1500 = vmatpush1.msra.mxu0 0.0
        %1501 = vmatprep.subr.mxu0 0.0
        %1502 = vmatpush1.msra.mxu0 0.0
        %1503 = vmatprep.subr.mxu0 0.0
        %1504 = vmatpush1.msra.mxu0 0.0
        %1505 = vmatprep.subr.mxu0 0.0
        %1506 = vmatpush1.msra.mxu0 0.0
        %1507 = vmatprep.subr.mxu0 0.0
        %1508 = vmatpush1.msra.mxu0 0.0
        %1509 = vmatprep.subr.mxu0 0.0
        %1510 = vmatpush1.msra.mxu0 0.0
        %1511 = vmatprep.subr.mxu0 0.0
        %1512 = vmatpush1.msra.mxu0 0.0
        %1513 = vmatprep.subr.mxu0 0.0
        %1514 = vmatpush1.msra.mxu0 0.0
        %1515 = vmatprep.subr.mxu0 0.0
        %1516 = vmatpush1.msra.mxu0 %v1477
        %1517 = vmatprep.subr.mxu0 0.0
        %1518 = vmatpush2.msra.mxu0 0.0
        %1519 = vmatprep.subr.mxu0 0.0
        %1520 = vmatpush2.msra.mxu0 0.0
        %1521 = vmatprep.subr.mxu0 0.0
        %1522 = vmatpush2.msra.mxu0 0.0
        %1523 = vmatprep.subr.mxu0 0.0
        %1524 = vmatpush2.msra.mxu0 0.0
        %1525 = vmatprep.subr.mxu0 0.0
        %1526 = vmatpush2.msra.mxu0 0.0
        %1527 = vmatprep.subr.mxu0 0.0
        %1528 = vmatpush2.msra.mxu0 0.0
        %1529 = vmatprep.subr.mxu0 0.0
        %1530 = vmatpush2.msra.mxu0 0.0
        %1531 = vmatprep.subr.mxu0 0.0
        %1532 = vmatpush2.msra.mxu0 0.0
        %1533 = vmatprep.subr.mxu0 0.0
        %1534 = vmatpush2.msra.mxu0 0.0
        %1535 = vmatprep.subr.mxu0 0.0
        %1536 = vmatpush2.msra.mxu0 0.0
        %1537 = vmatprep.subr.mxu0 0.0
        %1538 = vmatpush2.msra.mxu0 0.0
        %1539 = vmatprep.subr.mxu0 0.0
        %1540 = vmatpush2.msra.mxu0 0.0
        %1541 = vmatprep.subr.mxu0 0.0
        %1542 = vmatpush2.msra.mxu0 0.0
        %1543 = vmatprep.subr.mxu0 0.0
        %1544 = vmatpush2.msra.mxu0 0.0
        %1545 = vmatprep.subr.mxu0 0.0
        %1546 = vmatpush2.msra.mxu0 0.0
        %1547 = vmatprep.subr.mxu0 0.0
        %1548 = vmatpush2.msra.mxu0 0.0
        %1549 = vmatprep.mubr.f32.mxu0 0.0
        %1550 = vmatmul.mubr.f32.gmra.mxu0 %v1480
        %v1551 = vpop.f32.mrf.mxu0
        %v1552 = vadd.f32 0.0, %v1551
        %v1553 = vpop.f32.mrf.mxu0
        %1554 = vmatprep.mubr.f32.mxu0 0.0
        %1555 = vmatmul.mubr.f32.gmra.mxu0 %v1483
        %v1556 = vpop.f32.mrf.mxu0
        %v1557 = vadd.f32 0.0, %v1556
        %v1558 = vpop.f32.mrf.mxu0
        %1559 = vdwg.mxu0
        %1562 = vrot.lane.b32.xlu0 %v1552, 64
        %v1563 = vpop.permute.xlu0 %1562
        %1564 = vrot.lane.b32.xlu0 %v1557, 64
        %v1565 = vpop.permute.xlu0 %1564
        %v1568 = vadd.f32 %v1454, %v1563
        %v1569 = vadd.f32 %v1455, %v1565
        %vm1570 = vcmask 785920
        %1571 = vst.msk [vmem:[#allocation4] sm:$0xff] %vm1570, %v1568
        %1572 = vst.msk [vmem:[#allocation4 + $0x8] sm:$0xff] %vm1570, %v1569
        %v1573 = vld [vmem:[%s435 + $0x3] sm:$0x1]
        %v1574 = vld [vmem:[%s435 + $0x7] sm:$0x1]
        %v1575 = vld [vmem:[%s435 + $0xb] sm:$0x1]
        %v1576 = vld [vmem:[%s435 + $0xf] sm:$0x1]
        %v1577 = vld [vmem:[%s435 + $0x13] sm:$0x1]
        %v1578 = vld [vmem:[%s435 + $0x17] sm:$0x1]
        %v1579 = vld [vmem:[%s435 + $0x1b] sm:$0x1]
        %v1580 = vld [vmem:[%s435 + $0x1f] sm:$0x1]
        %v1581 = vld [vmem:[%s435 + $0x23] sm:$0x1]
        %v1582 = vld [vmem:[%s435 + $0x27] sm:$0x1]
        %v1583 = vld [vmem:[%s435 + $0x2b] sm:$0x1]
        %v1584 = vld [vmem:[%s435 + $0x2f] sm:$0x1]
        %v1585 = vld [vmem:[%s435 + $0x33] sm:$0x1]
        %v1586 = vld [vmem:[%s435 + $0x37] sm:$0x1]
        %v1587 = vld [vmem:[%s435 + $0x3b] sm:$0x1]
        %v1588 = vld [vmem:[%s435 + $0x3f] sm:$0x1]
        %v1589 = vld [vmem:[%s442 + $0x3] sm:$0x1]
        %v1590 = vld [vmem:[%s442 + $0x7] sm:$0x1]
        %v1591 = vld [vmem:[%s442 + $0xb] sm:$0x1]
        %v1592 = vld [vmem:[%s442 + $0xf] sm:$0x1]
        %v1593 = vld [vmem:[%s442 + $0x13] sm:$0x1]
        %v1594 = vld [vmem:[%s442 + $0x17] sm:$0x1]
        %v1595 = vld [vmem:[%s442 + $0x1b] sm:$0x1]
        %v1596 = vld [vmem:[%s442 + $0x1f] sm:$0x1]
        %v1597 = vld [vmem:[%s449 + $0x3] sm:$0x1]
        %v1598 = vld [vmem:[%s449 + $0x7] sm:$0x1]
        %v1599 = vld [vmem:[%s449 + $0xb] sm:$0x1]
        %v1600 = vld [vmem:[%s449 + $0xf] sm:$0x1]
        %v1601 = vld [vmem:[%s449 + $0x13] sm:$0x1]
        %v1602 = vld [vmem:[%s449 + $0x17] sm:$0x1]
        %v1603 = vld [vmem:[%s449 + $0x1b] sm:$0x1]
        %v1604 = vld [vmem:[%s449 + $0x1f] sm:$0x1]
        %v1621 = vrot.slane %v1574, 7
        %v1622 = vsel %vm539, %v1621, %v1573
        %v1623 = vrot.slane %v1575, 6
        %v1624 = vsel %vm542, %v1623, %v1622
        %v1625 = vrot.slane %v1576, 5
        %v1626 = vsel %vm545, %v1625, %v1624
        %v1627 = vrot.slane %v1577, 4
        %v1628 = vsel %vm548, %v1627, %v1626
        %v1629 = vrot.slane %v1578, 3
        %v1630 = vsel %vm551, %v1629, %v1628
        %v1631 = vrot.slane %v1579, 2
        %v1632 = vsel %vm554, %v1631, %v1630
        %v1633 = vrot.slane %v1580, 1
        %v1634 = vsel %vm557, %v1633, %v1632
        %v1635 = vrot.slane %v1582, 7
        %v1636 = vsel %vm539, %v1635, %v1581
        %v1637 = vrot.slane %v1583, 6
        %v1638 = vsel %vm542, %v1637, %v1636
        %v1639 = vrot.slane %v1584, 5
        %v1640 = vsel %vm545, %v1639, %v1638
        %v1641 = vrot.slane %v1585, 4
        %v1642 = vsel %vm548, %v1641, %v1640
        %v1643 = vrot.slane %v1586, 3
        %v1644 = vsel %vm551, %v1643, %v1642
        %v1645 = vrot.slane %v1587, 2
        %v1646 = vsel %vm554, %v1645, %v1644
        %v1647 = vrot.slane %v1588, 1
        %v1648 = vsel %vm557, %v1647, %v1646
        %v1657 = vrot.slane %v1590, 7
        %v1658 = vsel %vm539, %v1657, %v1589
        %v1659 = vrot.slane %v1591, 6
        %v1660 = vsel %vm542, %v1659, %v1658
        %v1661 = vrot.slane %v1592, 5
        %v1662 = vsel %vm545, %v1661, %v1660
        %v1663 = vrot.slane %v1593, 4
        %v1664 = vsel %vm548, %v1663, %v1662
        %v1665 = vrot.slane %v1594, 3
        %v1666 = vsel %vm551, %v1665, %v1664
        %v1667 = vrot.slane %v1595, 2
        %v1668 = vsel %vm554, %v1667, %v1666
        %v1669 = vrot.slane %v1596, 1
        %v1670 = vsel %vm557, %v1669, %v1668
        %v1671 = vsel %vm595, %v1634, 0
        %v1673 = vsel %vm595, %v1648, 0
        %v1675 = vsel %vm595, %v1670, 0
        %1677 = vmatprep.subr.mxu0 0.0
        %1678 = vmatpush1.xpose.msra.mxu0 0.0
        %1679 = vmatprep.subr.mxu0 0.0
        %1680 = vmatpush1.xpose.msra.mxu0 0.0
        %1681 = vmatprep.subr.mxu0 0.0
        %1682 = vmatpush1.xpose.msra.mxu0 0.0
        %1683 = vmatprep.subr.mxu0 0.0
        %1684 = vmatpush1.xpose.msra.mxu0 0.0
        %1685 = vmatprep.subr.mxu0 0.0
        %1686 = vmatpush1.xpose.msra.mxu0 0.0
        %1687 = vmatprep.subr.mxu0 0.0
        %1688 = vmatpush1.xpose.msra.mxu0 0.0
        %1689 = vmatprep.subr.mxu0 0.0
        %1690 = vmatpush1.xpose.msra.mxu0 0.0
        %1691 = vmatprep.subr.mxu0 0.0
        %1692 = vmatpush1.xpose.msra.mxu0 0.0
        %1693 = vmatprep.subr.mxu0 0.0
        %1694 = vmatpush1.xpose.msra.mxu0 0.0
        %1695 = vmatprep.subr.mxu0 0.0
        %1696 = vmatpush1.xpose.msra.mxu0 0.0
        %1697 = vmatprep.subr.mxu0 0.0
        %1698 = vmatpush1.xpose.msra.mxu0 0.0
        %1699 = vmatprep.subr.mxu0 0.0
        %1700 = vmatpush1.xpose.msra.mxu0 0.0
        %1701 = vmatprep.subr.mxu0 0.0
        %1702 = vmatpush1.xpose.msra.mxu0 0.0
        %1703 = vmatprep.subr.mxu0 0.0
        %1704 = vmatpush1.xpose.msra.mxu0 0.0
        %1705 = vmatprep.subr.mxu0 0.0
        %1706 = vmatpush1.xpose.msra.mxu0 0.0
        %1707 = vmatprep.subr.mxu0 0.0
        %1708 = vmatpush1.xpose.msra.mxu0 %v1675
        %1709 = vmatprep.subr.mxu0 0.0
        %1710 = vmatpush2.xpose.msra.mxu0 0.0
        %1711 = vmatprep.subr.mxu0 0.0
        %1712 = vmatpush2.xpose.msra.mxu0 0.0
        %1713 = vmatprep.subr.mxu0 0.0
        %1714 = vmatpush2.xpose.msra.mxu0 0.0
        %1715 = vmatprep.subr.mxu0 0.0
        %1716 = vmatpush2.xpose.msra.mxu0 0.0
        %1717 = vmatprep.subr.mxu0 0.0
        %1718 = vmatpush2.xpose.msra.mxu0 0.0
        %1719 = vmatprep.subr.mxu0 0.0
        %1720 = vmatpush2.xpose.msra.mxu0 0.0
        %1721 = vmatprep.subr.mxu0 0.0
        %1722 = vmatpush2.xpose.msra.mxu0 0.0
        %1723 = vmatprep.subr.mxu0 0.0
        %1724 = vmatpush2.xpose.msra.mxu0 0.0
        %1725 = vmatprep.subr.mxu0 0.0
        %1726 = vmatpush2.xpose.msra.mxu0 0.0
        %1727 = vmatprep.subr.mxu0 0.0
        %1728 = vmatpush2.xpose.msra.mxu0 0.0
        %1729 = vmatprep.subr.mxu0 0.0
        %1730 = vmatpush2.xpose.msra.mxu0 0.0
        %1731 = vmatprep.subr.mxu0 0.0
        %1732 = vmatpush2.xpose.msra.mxu0 0.0
        %1733 = vmatprep.subr.mxu0 0.0
        %1734 = vmatpush2.xpose.msra.mxu0 0.0
        %1735 = vmatprep.subr.mxu0 0.0
        %1736 = vmatpush2.xpose.msra.mxu0 0.0
        %1737 = vmatprep.subr.mxu0 0.0
        %1738 = vmatpush2.xpose.msra.mxu0 0.0
        %1739 = vmatprep.subr.mxu0 0.0
        %1740 = vmatpush2.xpose.msra.mxu0 0.0
        %1741 = vmatprep.mubr.f32.mxu0 0.0
        %1742 = vmatmul.mubr.f32.gmra.mxu0 %v1671
        %v1743 = vpop.f32.mrf.mxu0
        %v1744 = vadd.f32 0.0, %v1743
        %v1745 = vpop.f32.mrf.mxu0
        %1746 = vmatprep.mubr.f32.mxu0 0.0
        %1747 = vmatmul.mubr.f32.gmra.mxu0 %v1673
        %v1748 = vpop.f32.mrf.mxu0
        %v1749 = vadd.f32 0.0, %v1748
        %v1750 = vpop.f32.mrf.mxu0
        %1751 = vdwg.mxu0
        %v1752 = vmul.f32 %v1744, 0.17677669
        %v1753 = vmul.f32 %v1749, 0.17677669
        %v1754 = vld [vmem:[#allocation2] sm:$0xff]
        %v1755 = vld [vmem:[#allocation2 + $0x8] sm:$0xff]
        %v1756 = vsel %vm681, %v1752, -inf
        %1757 = vmax.xlane.f32.xlu0 %v1756
        %v1758 = vpop.xlane.xlu0 %1757
        %v1759 = vsel %vm681, %v1753, -inf
        %1760 = vmax.xlane.f32.xlu0 %v1759
        %v1761 = vpop.xlane.xlu0 %1760
        %v1762 = vmax.f32 %v1754, %v1758
        %v1763 = vmax.f32 %v1755, %v1761
        %v1764 = vsub.f32 %v1754, %v1762
        %v1765 = vsub.f32 %v1755, %v1763
        %v1766 = vmul.f32 %v1764, 1.442695
        %v1767 = vpow.pop %v1766
        %v1768 = vmul.f32 %v1765, 1.442695
        %v1769 = vpow.pop %v1768
        %1771 = vset.pattern.permute.xlu0 3
        %1772 = vperm.xlu0 %1771, %v1762
        %v1773 = vpop.permute.xlu0 %1772
        %1776 = vset.pattern.permute.xlu0 3
        %1777 = vperm.xlu0 %1776, %v1763
        %v1778 = vpop.permute.xlu0 %1777
        %v1780 = vsub.f32 %v1752, %v1773
        %v1781 = vsub.f32 %v1753, %v1778
        %v1782 = vmul.f32 %v1780, 1.442695
        %v1783 = vpow.pop %v1782
        %v1784 = vmul.f32 %v1781, 1.442695
        %v1785 = vpow.pop %v1784
        %v1786 = vld [vmem:[#allocation3] sm:$0xff]
        %v1787 = vld [vmem:[#allocation3 + $0x8] sm:$0xff]
        %v1788 = vmul.f32 %v1767, %v1786
        %v1789 = vmul.f32 %v1769, %v1787
        %v1790 = vsel %vm681, %v1783, 0.0
        %1791 = vadd.xlane.f32.xlu0 %v1790
        %v1792 = vpop.xlane.xlu0 %1791
        %v1793 = vsel %vm681, %v1785, 0.0
        %1794 = vadd.xlane.f32.xlu0 %v1793
        %v1795 = vpop.xlane.xlu0 %1794
        %v1796 = vadd.f32 %v1788, %v1792
        %v1797 = vadd.f32 %v1789, %v1795
        %vm1798 = vcmask 31768
        %1799 = vst.msk [vmem:[#allocation3] sm:$0xff] %vm1798, %v1796
        %1800 = vst.msk [vmem:[#allocation3 + $0x8] sm:$0xff] %vm1798, %v1797
        %1801 = vst.msk [vmem:[#allocation2] sm:$0xff] %vm1798, %v1762
        %1802 = vst.msk [vmem:[#allocation2 + $0x8] sm:$0xff] %vm1798, %v1763
        %v1803 = vld [vmem:[#allocation4] sm:$0xff]
        %v1804 = vld [vmem:[#allocation4 + $0x8] sm:$0xff]
        %1806 = vset.pattern.permute.xlu0 3
        %1807 = vperm.xlu0 %1806, %v1767
        %v1808 = vpop.permute.xlu0 %1807
        %1811 = vset.pattern.permute.xlu0 3
        %1812 = vperm.xlu0 %1811, %v1769
        %v1813 = vpop.permute.xlu0 %1812
        %v1815 = vmul.f32 %v1808, %v1803
        %v1816 = vmul.f32 %v1813, %v1804
        %v1825 = vrot.slane %v1598, 7
        %v1826 = vsel %vm539, %v1825, %v1597
        %v1827 = vrot.slane %v1599, 6
        %v1828 = vsel %vm542, %v1827, %v1826
        %v1829 = vrot.slane %v1600, 5
        %v1830 = vsel %vm545, %v1829, %v1828
        %v1831 = vrot.slane %v1601, 4
        %v1832 = vsel %vm548, %v1831, %v1830
        %v1833 = vrot.slane %v1602, 3
        %v1834 = vsel %vm551, %v1833, %v1832
        %v1835 = vrot.slane %v1603, 2
        %v1836 = vsel %vm554, %v1835, %v1834
        %v1837 = vrot.slane %v1604, 1
        %v1838 = vsel %vm557, %v1837, %v1836
        %v1841 = vsel %vm681, %v1783, 0
        %v1844 = vsel %vm681, %v1785, 0
        %1846 = vmatprep.subr.mxu0 0.0
        %1847 = vmatpush1.msra.mxu0 0.0
        %1848 = vmatprep.subr.mxu0 0.0
        %1849 = vmatpush1.msra.mxu0 0.0
        %1850 = vmatprep.subr.mxu0 0.0
        %1851 = vmatpush1.msra.mxu0 0.0
        %1852 = vmatprep.subr.mxu0 0.0
        %1853 = vmatpush1.msra.mxu0 0.0
        %1854 = vmatprep.subr.mxu0 0.0
        %1855 = vmatpush1.msra.mxu0 0.0
        %1856 = vmatprep.subr.mxu0 0.0
        %1857 = vmatpush1.msra.mxu0 0.0
        %1858 = vmatprep.subr.mxu0 0.0
        %1859 = vmatpush1.msra.mxu0 0.0
        %1860 = vmatprep.subr.mxu0 0.0
        %1861 = vmatpush1.msra.mxu0 0.0
        %1862 = vmatprep.subr.mxu0 0.0
        %1863 = vmatpush1.msra.mxu0 0.0
        %1864 = vmatprep.subr.mxu0 0.0
        %1865 = vmatpush1.msra.mxu0 0.0
        %1866 = vmatprep.subr.mxu0 0.0
        %1867 = vmatpush1.msra.mxu0 0.0
        %1868 = vmatprep.subr.mxu0 0.0
        %1869 = vmatpush1.msra.mxu0 0.0
        %1870 = vmatprep.subr.mxu0 0.0
        %1871 = vmatpush1.msra.mxu0 0.0
        %1872 = vmatprep.subr.mxu0 0.0
        %1873 = vmatpush1.msra.mxu0 0.0
        %1874 = vmatprep.subr.mxu0 0.0
        %1875 = vmatpush1.msra.mxu0 0.0
        %1876 = vmatprep.subr.mxu0 0.0
        %1877 = vmatpush1.msra.mxu0 %v1838
        %1878 = vmatprep.subr.mxu0 0.0
        %1879 = vmatpush2.msra.mxu0 0.0
        %1880 = vmatprep.subr.mxu0 0.0
        %1881 = vmatpush2.msra.mxu0 0.0
        %1882 = vmatprep.subr.mxu0 0.0
        %1883 = vmatpush2.msra.mxu0 0.0
        %1884 = vmatprep.subr.mxu0 0.0
        %1885 = vmatpush2.msra.mxu0 0.0
        %1886 = vmatprep.subr.mxu0 0.0
        %1887 = vmatpush2.msra.mxu0 0.0
        %1888 = vmatprep.subr.mxu0 0.0
        %1889 = vmatpush2.msra.mxu0 0.0
        %1890 = vmatprep.subr.mxu0 0.0
        %1891 = vmatpush2.msra.mxu0 0.0
        %1892 = vmatprep.subr.mxu0 0.0
        %1893 = vmatpush2.msra.mxu0 0.0
        %1894 = vmatprep.subr.mxu0 0.0
        %1895 = vmatpush2.msra.mxu0 0.0
        %1896 = vmatprep.subr.mxu0 0.0
        %1897 = vmatpush2.msra.mxu0 0.0
        %1898 = vmatprep.subr.mxu0 0.0
        %1899 = vmatpush2.msra.mxu0 0.0
        %1900 = vmatprep.subr.mxu0 0.0
        %1901 = vmatpush2.msra.mxu0 0.0
        %1902 = vmatprep.subr.mxu0 0.0
        %1903 = vmatpush2.msra.mxu0 0.0
        %1904 = vmatprep.subr.mxu0 0.0
        %1905 = vmatpush2.msra.mxu0 0.0
        %1906 = vmatprep.subr.mxu0 0.0
        %1907 = vmatpush2.msra.mxu0 0.0
        %1908 = vmatprep.subr.mxu0 0.0
        %1909 = vmatpush2.msra.mxu0 0.0
        %1910 = vmatprep.mubr.f32.mxu0 0.0
        %1911 = vmatmul.mubr.f32.gmra.mxu0 %v1841
        %v1912 = vpop.f32.mrf.mxu0
        %v1913 = vadd.f32 0.0, %v1912
        %v1914 = vpop.f32.mrf.mxu0
        %1915 = vmatprep.mubr.f32.mxu0 0.0
        %1916 = vmatmul.mubr.f32.gmra.mxu0 %v1844
        %v1917 = vpop.f32.mrf.mxu0
        %v1918 = vadd.f32 0.0, %v1917
        %v1919 = vpop.f32.mrf.mxu0
        %1920 = vdwg.mxu0
        %1923 = vrot.lane.b32.xlu0 %v1913, 96
        %v1924 = vpop.permute.xlu0 %1923
        %1925 = vrot.lane.b32.xlu0 %v1918, 96
        %v1926 = vpop.permute.xlu0 %1925
        %v1929 = vadd.f32 %v1815, %v1924
        %v1930 = vadd.f32 %v1816, %v1926
        %vm1931 = vcmask 1048320
        %1932 = vst.msk [vmem:[#allocation4] sm:$0xff] %vm1931, %v1929
        %1933 = vst.msk [vmem:[#allocation4 + $0x8] sm:$0xff] %vm1931, %v1930
        %p1934 = scmp.eq.s32.totalorder %s19, 1
        // Predicated region
        $region160: #{encoder_block.4} parent=142 // pred_check
          %p1935 = pneg %p1934
        $region161: #{encoder_block.4} parent=142 // pred_check_branch
          %1937 = sbr.rel (%p1935) target = $region163
        $region162: #{encoder_block.4} parent=142 // pred_region
          %v1938 = vld [vmem:[#allocation3] sm:$0xff]
          %v1939 = vld [vmem:[#allocation3 + $0x8] sm:$0xff]
          %v1940 = vrcp.pop %v1938
          %v1941 = vrcp.pop %v1939
          %v1942 = vld [vmem:[#allocation4] sm:$0xff]
          %v1943 = vld [vmem:[#allocation4 + $0x8] sm:$0xff]
          %1945 = vset.pattern.permute.xlu0 0
          %1946 = vperm.xlu0 %1945, %v1940
          %v1947 = vpop.permute.xlu0 %1946
          %1950 = vset.pattern.permute.xlu0 0
          %1951 = vperm.xlu0 %1950, %v1941
          %v1952 = vpop.permute.xlu0 %1951
          %v1954 = vmul.f32 %v1942, %v1947
          %v1955 = vmul.f32 %v1943, %v1952
          %1956 = vst.msk [vmem:[%s476] sm:$0xff] %vm595, %v1954
          %1957 = vst.msk [vmem:[%s476 + $0x8] sm:$0xff] %vm595, %v1955
          %v1958 = vld [vmem:[#allocation3] sm:$0xff]
          %v1959 = vld [vmem:[#allocation3 + $0x8] sm:$0xff]
          %v1960 = vrcp.pop %v1958
          %v1961 = vrcp.pop %v1959
          %v1962 = vld [vmem:[#allocation4] sm:$0xff]
          %v1963 = vld [vmem:[#allocation4 + $0x8] sm:$0xff]
          %1965 = vset.pattern.permute.xlu0 1
          %1966 = vperm.xlu0 %1965, %v1960
          %v1967 = vpop.permute.xlu0 %1966
          %1970 = vset.pattern.permute.xlu0 1
          %1971 = vperm.xlu0 %1970, %v1961
          %v1972 = vpop.permute.xlu0 %1971
          %v1974 = vmul.f32 %v1962, %v1967
          %v1975 = vmul.f32 %v1963, %v1972
          %1976 = vst.msk [vmem:[%s476] sm:$0xff] %vm1209, %v1974
          %1977 = vst.msk [vmem:[%s476 + $0x8] sm:$0xff] %vm1209, %v1975
          %v1978 = vld [vmem:[#allocation3] sm:$0xff]
          %v1979 = vld [vmem:[#allocation3 + $0x8] sm:$0xff]
          %v1980 = vrcp.pop %v1978
          %v1981 = vrcp.pop %v1979
          %v1982 = vld [vmem:[#allocation4] sm:$0xff]
          %v1983 = vld [vmem:[#allocation4 + $0x8] sm:$0xff]
          %1985 = vset.pattern.permute.xlu0 2
          %1986 = vperm.xlu0 %1985, %v1980
          %v1987 = vpop.permute.xlu0 %1986
          %1990 = vset.pattern.permute.xlu0 2
          %1991 = vperm.xlu0 %1990, %v1981
          %v1992 = vpop.permute.xlu0 %1991
          %v1994 = vmul.f32 %v1982, %v1987
          %v1995 = vmul.f32 %v1983, %v1992
          %1996 = vst.msk [vmem:[%s476] sm:$0xff] %vm1570, %v1994
          %1997 = vst.msk [vmem:[%s476 + $0x8] sm:$0xff] %vm1570, %v1995
          %v1998 = vld [vmem:[#allocation3] sm:$0xff]
          %v1999 = vld [vmem:[#allocation3 + $0x8] sm:$0xff]
          %v2000 = vrcp.pop %v1998
          %v2001 = vrcp.pop %v1999
          %v2002 = vld [vmem:[#allocation4] sm:$0xff]
          %v2003 = vld [vmem:[#allocation4 + $0x8] sm:$0xff]
          %2005 = vset.pattern.permute.xlu0 3
          %2006 = vperm.xlu0 %2005, %v2000
          %v2007 = vpop.permute.xlu0 %2006
          %2010 = vset.pattern.permute.xlu0 3
          %2011 = vperm.xlu0 %2010, %v2001
          %v2012 = vpop.permute.xlu0 %2011
          %v2014 = vmul.f32 %v2002, %v2007
          %v2015 = vmul.f32 %v2003, %v2012
          %2016 = vst.msk [vmem:[%s476] sm:$0xff] %vm1931, %v2014
          %2017 = vst.msk [vmem:[%s476 + $0x8] sm:$0xff] %vm1931, %v2015
        $region163: #{encoder_block.4} parent=142 // pred_fallthru
          _
        %s2018 = sand.u32 %s116, 1
        %s2019 = sand.u32 %s116, 1
        %s2020 = smul.addr %s2019, 16
        %s2021 = scalar_lea.vmem [#allocation8], %s2020
        // Predicated region
        $region164: #{encoder_block.4} parent=142 // pred_check
          %p2022 = pneg %p126
        $region165: #{encoder_block.4} parent=142 // pred_check_branch
          %2024 = sbr.rel (%p2022) target = $region167
        $region166: #{encoder_block.4} parent=142 // pred_region
          %s2025 = smul.addr %s18, 8
          %s2026 = scalar_lea.vmem %s3, %s2025
          // Predicated region
          $region168: #{encoder_block.4} parent=166 // pred_check
            _
          $region169: #{encoder_block.4} parent=166 // pred_check_branch
            %2028 = sbr.rel (0) target = $region171
          $region170: #{encoder_block.4} parent=166 // pred_region
            // Predicated region
            $region172: #{encoder_block.4} parent=170 // pred_check
              _
            $region173: #{encoder_block.4} parent=170 // pred_check_branch
              %2030 = sbr.rel (0) target = $region175
            $region174: #{encoder_block.4} parent=170 // pred_region
              // Predicated region
              $region187: #{encoder_block.4} parent=174 // pred_check
                _
              $region188: #{encoder_block.4} parent=174 // pred_check_branch
                %2048 = sbr.rel (0) target = $region190
              $region189: #{encoder_block.4} parent=174 // pred_region
                loop: start=0, step=1, limit=1
                $region191: #{encoder_block.4} parent=189 // loop_pre_header
                  _
                $region192: #{encoder_block.4} parent=189 // loop_header
                  %s2050 = sphi 0, %s2054
                  %p2051 = scmp.ge.s32.totalorder %s2050, 1
                  %s2055 = sphi %s2021, %s2021
                  %s2056 = sphi %s2026, %s2026
                $region193: #{encoder_block.4} parent=189 // loop_header_branch
                  %2053 = sbr.rel (%p2051) target = $region197
                $region194: #{encoder_block.4} parent=189 // loop_body
                  %v2057 = vld [vmem:[%s2055] sm:$0xff]
                  %2058 = vst [vmem:[%s2056] sm:$0xff] %v2057
                  %v2059 = vld [vmem:[%s2055 + $0x8] sm:$0xff]
                  %2060 = vst [vmem:[%s2056 + $0x20] sm:$0xff] %v2059
                $region195: #{encoder_block.4} parent=189 // loop_footer
                  %s2054 = sadd.s32 1, %s2050
                $region196: #{encoder_block.4} parent=189 // loop_footer_branch
                  %2049 = sbr.rel target = $region192
                $region197: #{encoder_block.4} parent=189 // loop_exit
                  _
              $region190: #{encoder_block.4} parent=174 // pred_fallthru
                _
              // Predicated region
              $region198: #{encoder_block.4} parent=174 // pred_check
                _
              $region199: #{encoder_block.4} parent=174 // pred_check_branch
                %2062 = sbr.rel target = $region201
              $region200: #{encoder_block.4} parent=174 // pred_region
                _
              $region201: #{encoder_block.4} parent=174 // pred_fallthru
                _
            $region175: #{encoder_block.4} parent=170 // pred_fallthru
              _
            // Predicated region
            $region176: #{encoder_block.4} parent=170 // pred_check
              _
            $region177: #{encoder_block.4} parent=170 // pred_check_branch
              %2032 = sbr.rel target = $region179
            $region178: #{encoder_block.4} parent=170 // pred_region
              %s2034 = ssub.s32 256, 1
              loop: start=0, step=1, limit=1
              $region180: #{encoder_block.4} parent=178 // loop_pre_header
                _
              $region181: #{encoder_block.4} parent=178 // loop_header
                %s2036 = sphi 0, %s2040
                %p2037 = scmp.ge.s32.totalorder %s2036, 1
                %s2041 = sphi %s2021, %s2021
                %s2042 = sphi %s2026, %s2026
              $region182: #{encoder_block.4} parent=178 // loop_header_branch
                %2039 = sbr.rel (%p2037) target = $region186
              $region183: #{encoder_block.4} parent=178 // loop_body
                %v2043 = vld [vmem:[%s2041] sm:%s2034]
                %2044 = vst [vmem:[%s2042] sm:%s2034] %v2043
                %v2045 = vld [vmem:[%s2041 + $0x8] sm:%s2034]
                %2046 = vst [vmem:[%s2042 + $0x20] sm:%s2034] %v2045
              $region184: #{encoder_block.4} parent=178 // loop_footer
                %s2040 = sadd.s32 1, %s2036
              $region185: #{encoder_block.4} parent=178 // loop_footer_branch
                %2035 = sbr.rel target = $region181
              $region186: #{encoder_block.4} parent=178 // loop_exit
                _
            $region179: #{encoder_block.4} parent=170 // pred_fallthru
              _
          $region171: #{encoder_block.4} parent=166 // pred_fallthru
            _
          %2063 = vnop
        $region167: #{encoder_block.4} parent=142 // pred_fallthru
          _
      $region143: #{encoder_block.4} parent=5 // pred_fallthru
        _
      %p2064 = scmp.le.s32.totalorder 2, %s9
      // Predicated region
      $region202: #{encoder_block.4} parent=5 // pred_check
        %p2065 = pneg %p2064
      $region203: #{encoder_block.4} parent=5 // pred_check_branch
        %2067 = sbr.rel (%p2065) target = $region205
      $region204: #{encoder_block.4} parent=5 // pred_region
        %s2068 = ssub.s32 %s9, 2
        // Predicated region
        $region206: #{encoder_block.4} parent=204 // pred_check
          %p2069 = pneg %p132
        $region207: #{encoder_block.4} parent=204 // pred_check_branch
          %2071 = sbr.rel (%p2069) target = $region209
        $region208: #{encoder_block.4} parent=204 // pred_region
          %s2072 = sand.u32 %s117, 1
          %s2073 = sand.u32 %s117, 1
          %s2074 = smul.addr %s2073, 16
          %s2075 = scalar_lea.vmem [#allocation8], %s2074
        $region209: #{encoder_block.4} parent=204 // pred_fallthru
          _
      $region205: #{encoder_block.4} parent=5 // pred_fallthru
        _
    $region6: #{encoder_block.4} parent=1 // loop_footer
      %s13 = sadd.s32 1, %s9
    $region7: #{encoder_block.4} parent=1 // loop_footer_branch
      %8 = sbr.rel target = $region3
    $region8: #{encoder_block.4} parent=1 // loop_exit
      _

// kernel: encoder_block.5
$region0: #{encoder_block.5}
  #allocation0 [shape = 'u32[]', space=smem, size = 0x4, offset = 0x4, fixed_abs, tag = 'smem constant byte address 0x4 - core index']
  #allocation1 [shape = 'u32[144,128]{1,0:T(1,128)}', space=vmem, size = 0x12000, scoped, tag = 'internal scratch']
  %s0 = inlined_call_operand.vmem [shape: f32[64,128], index: 0, kind: input, shape index: {}]
  %s1 = inlined_call_operand.vmem [shape: f32[64,128], index: 1, kind: input, shape index: {}]
  %s2 = inlined_call_operand.vmem [shape: f32[128,128], index: 2, kind: input, shape index: {}]
  %s3 = inlined_call_operand.vmem [shape: f32[1,128], index: 3, kind: input, shape index: {}]
  %s4 = inlined_call_operand.vmem [shape: f32[1,128], index: 4, kind: input, shape index: {}]
  %s5 = inlined_call_operand.vmem [shape: f32[1,128], index: 5, kind: input, shape index: {}]
  %s6 = inlined_call_operand.vmem [shape: f32[128,256], index: 6, kind: input, shape index: {}]
  %s7 = inlined_call_operand.vmem [shape: f32[1,256], index: 7, kind: input, shape index: {}]
  %s8 = inlined_call_operand.vmem [shape: f32[256,128], index: 8, kind: input, shape index: {}]
  %s9 = inlined_call_operand.vmem [shape: f32[1,128], index: 9, kind: input, shape index: {}]
  %s10 = inlined_call_operand.hbm [shape: f32[64,128], index: 10, kind: output, shape index: {}]
  %s11 = sld [smem:[#allocation0]]
  $region73: #{encoder_block.5} parent=0
    _
  %s13 = ssub.s32 1, %s11
  %s14 = scalar_select 0, %s13, %s11
  $region1: #{encoder_block.5} parent=0
    #allocation2 [shape = 'u8[32768]{0}', space=vmem, size = 0x8000, scoped, tag = 'output window, operand 0']
    #allocation3 [shape = 's32[2]{0}', space=sflag, size = 0x8, scoped, tag = 'scoped memory for encoder_block.5']
    %15 = vsyncpa [#allocation3], 0
    %s16 = scalar_lea.sflag [#allocation3], 1
    %17 = vsyncpa %s16, 0
    loop: start=0, step=1, limit=4
    $region2: #{encoder_block.5} parent=1 // loop_pre_header
      _
    $region3: #{encoder_block.5} parent=1 // loop_header
      %s19 = sphi 0, %s23
      %p20 = scmp.ge.s32.totalorder %s19, 4
      %s29 = sphi 0, %s31
      %s32 = sphi 0, %s29
      %s33 = sphi 0, %s32
      %s49 = sphi 0, %s33
      %s55 = sphi 0, %s57
      %s58 = sphi 0, %s55
      %s59 = sphi 0, %s58
      %s75 = sphi 0, %s59
      %s79 = sphi 0, %s79
      %s81 = sphi 0, %s79
      %s82 = sphi 0, %s81
      %s96 = sphi 0, %s82
      %s100 = sphi 0, %s100
      %s102 = sphi 0, %s100
      %s103 = sphi 0, %s102
      %s117 = sphi 0, %s103
      %s121 = sphi 0, %s121
      %s123 = sphi 0, %s121
      %s124 = sphi 0, %s123
      %s138 = sphi 0, %s124
      %s142 = sphi 0, %s142
      %s144 = sphi 0, %s142
      %s145 = sphi 0, %s144
      %s159 = sphi 0, %s145
      %s163 = sphi 0, %s163
      %s165 = sphi 0, %s163
      %s166 = sphi 0, %s165
      %s180 = sphi 0, %s166
      %s184 = sphi 0, %s184
      %s186 = sphi 0, %s184
      %s187 = sphi 0, %s186
      %s201 = sphi 0, %s187
      %s205 = sphi 0, %s205
      %s207 = sphi 0, %s205
      %s208 = sphi 0, %s207
      %s222 = sphi 0, %s208
      %s226 = sphi 0, %s226
      %s228 = sphi 0, %s226
      %s229 = sphi 0, %s228
      %s243 = sphi 0, %s229
      %s249 = sphi 0, %s251
      %s252 = sphi 0, %s249
      %s253 = sphi 0, %s252
      %s269 = sphi 0, %s253
    $region4: #{encoder_block.5} parent=1 // loop_header_branch
      %22 = sbr.rel (%p20) target = $region8
    $region5: #{encoder_block.5} parent=1 // loop_body
      %s24 = ssub.s32 %s19, 1
      %s25 = ssub.s32 %s19, 2
      %s26 = sadd.s32 %s19, 1
      %s27 = ssub.s32 %s19, %s26
      %p28 = scmp.eq.s32.totalorder %s27, 0
      %s30 = sadd.s32 %s29, 1
      %s31 = scalar_select %p28, %s29, %s30
      %p34 = pneg %p28
      %p35 = scmp.eq.s32.totalorder %s19, 1
      %p36 = por %p34, %p35
      %p37 = scmp.ne.s32.totalorder %s29, %s32
      %p38 = scmp.eq.s32.totalorder %s19, 0
      %p39 = por %p37, %p38
      %p40 = scmp.ne.s32.totalorder %s29, %s32
      %p41 = scmp.eq.s32.totalorder %s24, 1
      %p42 = por %p40, %p41
      %p43 = scmp.ne.s32.totalorder %s32, %s33
      %p44 = scmp.eq.s32.totalorder %s24, 0
      %p45 = por %p43, %p44
      %p46 = scmp.ne.s32.totalorder %s32, %s33
      %p47 = scmp.eq.s32.totalorder %s25, 1
      %p48 = por %p46, %p47
      %p50 = scmp.ne.s32.totalorder %s33, %s49
      %p51 = scmp.eq.s32.totalorder %s25, 0
      %p52 = por %p50, %p51
      %s53 = ssub.s32 %s19, %s26
      %p54 = scmp.eq.s32.totalorder %s53, 0
      %s56 = sadd.s32 %s55, 1
      %s57 = scalar_select %p54, %s55, %s56
      %p60 = pneg %p54
      %p61 = scmp.eq.s32.totalorder %s19, 1
      %p62 = por %p60, %p61
      %p63 = scmp.ne.s32.totalorder %s55, %s58
      %p64 = scmp.eq.s32.totalorder %s19, 0
      %p65 = por %p63, %p64
      %p66 = scmp.ne.s32.totalorder %s55, %s58
      %p67 = scmp.eq.s32.totalorder %s24, 1
      %p68 = por %p66, %p67
      %p69 = scmp.ne.s32.totalorder %s58, %s59
      %p70 = scmp.eq.s32.totalorder %s24, 0
      %p71 = por %p69, %p70
      %p72 = scmp.ne.s32.totalorder %s58, %s59
      %p73 = scmp.eq.s32.totalorder %s25, 1
      %p74 = por %p72, %p73
      %p76 = scmp.ne.s32.totalorder %s59, %s75
      %p77 = scmp.eq.s32.totalorder %s25, 0
      %p78 = por %p76, %p77
      %s80 = sadd.s32 %s79, 1
      %p83 = scmp.eq.s32.totalorder %s19, 1
      %p84 = scmp.ne.s32.totalorder %s79, %s81
      %p85 = scmp.eq.s32.totalorder %s19, 0
      %p86 = por %p84, %p85
      %p87 = scmp.ne.s32.totalorder %s79, %s81
      %p88 = scmp.eq.s32.totalorder %s24, 1
      %p89 = por %p87, %p88
      %p90 = scmp.ne.s32.totalorder %s81, %s82
      %p91 = scmp.eq.s32.totalorder %s24, 0
      %p92 = por %p90, %p91
      %p93 = scmp.ne.s32.totalorder %s81, %s82
      %p94 = scmp.eq.s32.totalorder %s25, 1
      %p95 = por %p93, %p94
      %p97 = scmp.ne.s32.totalorder %s82, %s96
      %p98 = scmp.eq.s32.totalorder %s25, 0
      %p99 = por %p97, %p98
      %s101 = sadd.s32 %s100, 1
      %p104 = scmp.eq.s32.totalorder %s19, 1
      %p105 = scmp.ne.s32.totalorder %s100, %s102
      %p106 = scmp.eq.s32.totalorder %s19, 0
      %p107 = por %p105, %p106
      %p108 = scmp.ne.s32.totalorder %s100, %s102
      %p109 = scmp.eq.s32.totalorder %s24, 1
      %p110 = por %p108, %p109
      %p111 = scmp.ne.s32.totalorder %s102, %s103
      %p112 = scmp.eq.s32.totalorder %s24, 0
      %p113 = por %p111, %p112
      %p114 = scmp.ne.s32.totalorder %s102, %s103
      %p115 = scmp.eq.s32.totalorder %s25, 1
      %p116 = por %p114, %p115
      %p118 = scmp.ne.s32.totalorder %s103, %s117
      %p119 = scmp.eq.s32.totalorder %s25, 0
      %p120 = por %p118, %p119
      %s122 = sadd.s32 %s121, 1
      %p125 = scmp.eq.s32.totalorder %s19, 1
      %p126 = scmp.ne.s32.totalorder %s121, %s123
      %p127 = scmp.eq.s32.totalorder %s19, 0
      %p128 = por %p126, %p127
      %p129 = scmp.ne.s32.totalorder %s121, %s123
      %p130 = scmp.eq.s32.totalorder %s24, 1
      %p131 = por %p129, %p130
      %p132 = scmp.ne.s32.totalorder %s123, %s124
      %p133 = scmp.eq.s32.totalorder %s24, 0
      %p134 = por %p132, %p133
      %p135 = scmp.ne.s32.totalorder %s123, %s124
      %p136 = scmp.eq.s32.totalorder %s25, 1
      %p137 = por %p135, %p136
      %p139 = scmp.ne.s32.totalorder %s124, %s138
      %p140 = scmp.eq.s32.totalorder %s25, 0
      %p141 = por %p139, %p140
      %s143 = sadd.s32 %s142, 1
      %p146 = scmp.eq.s32.totalorder %s19, 1
      %p147 = scmp.ne.s32.totalorder %s142, %s144
      %p148 = scmp.eq.s32.totalorder %s19, 0
      %p149 = por %p147, %p148
      %p150 = scmp.ne.s32.totalorder %s142, %s144
      %p151 = scmp.eq.s32.totalorder %s24, 1
      %p152 = por %p150, %p151
      %p153 = scmp.ne.s32.totalorder %s144, %s145
      %p154 = scmp.eq.s32.totalorder %s24, 0
      %p155 = por %p153, %p154
      %p156 = scmp.ne.s32.totalorder %s144, %s145
      %p157 = scmp.eq.s32.totalorder %s25, 1
      %p158 = por %p156, %p157
      %p160 = scmp.ne.s32.totalorder %s145, %s159
      %p161 = scmp.eq.s32.totalorder %s25, 0
      %p162 = por %p160, %p161
      %s164 = sadd.s32 %s163, 1
      %p167 = scmp.eq.s32.totalorder %s19, 1
      %p168 = scmp.ne.s32.totalorder %s163, %s165
      %p169 = scmp.eq.s32.totalorder %s19, 0
      %p170 = por %p168, %p169
      %p171 = scmp.ne.s32.totalorder %s163, %s165
      %p172 = scmp.eq.s32.totalorder %s24, 1
      %p173 = por %p171, %p172
      %p174 = scmp.ne.s32.totalorder %s165, %s166
      %p175 = scmp.eq.s32.totalorder %s24, 0
      %p176 = por %p174, %p175
      %p177 = scmp.ne.s32.totalorder %s165, %s166
      %p178 = scmp.eq.s32.totalorder %s25, 1
      %p179 = por %p177, %p178
      %p181 = scmp.ne.s32.totalorder %s166, %s180
      %p182 = scmp.eq.s32.totalorder %s25, 0
      %p183 = por %p181, %p182
      %s185 = sadd.s32 %s184, 1
      %p188 = scmp.eq.s32.totalorder %s19, 1
      %p189 = scmp.ne.s32.totalorder %s184, %s186
      %p190 = scmp.eq.s32.totalorder %s19, 0
      %p191 = por %p189, %p190
      %p192 = scmp.ne.s32.totalorder %s184, %s186
      %p193 = scmp.eq.s32.totalorder %s24, 1
      %p194 = por %p192, %p193
      %p195 = scmp.ne.s32.totalorder %s186, %s187
      %p196 = scmp.eq.s32.totalorder %s24, 0
      %p197 = por %p195, %p196
      %p198 = scmp.ne.s32.totalorder %s186, %s187
      %p199 = scmp.eq.s32.totalorder %s25, 1
      %p200 = por %p198, %p199
      %p202 = scmp.ne.s32.totalorder %s187, %s201
      %p203 = scmp.eq.s32.totalorder %s25, 0
      %p204 = por %p202, %p203
      %s206 = sadd.s32 %s205, 1
      %p209 = scmp.eq.s32.totalorder %s19, 1
      %p210 = scmp.ne.s32.totalorder %s205, %s207
      %p211 = scmp.eq.s32.totalorder %s19, 0
      %p212 = por %p210, %p211
      %p213 = scmp.ne.s32.totalorder %s205, %s207
      %p214 = scmp.eq.s32.totalorder %s24, 1
      %p215 = por %p213, %p214
      %p216 = scmp.ne.s32.totalorder %s207, %s208
      %p217 = scmp.eq.s32.totalorder %s24, 0
      %p218 = por %p216, %p217
      %p219 = scmp.ne.s32.totalorder %s207, %s208
      %p220 = scmp.eq.s32.totalorder %s25, 1
      %p221 = por %p219, %p220
      %p223 = scmp.ne.s32.totalorder %s208, %s222
      %p224 = scmp.eq.s32.totalorder %s25, 0
      %p225 = por %p223, %p224
      %s227 = sadd.s32 %s226, 1
      %p230 = scmp.eq.s32.totalorder %s19, 1
      %p231 = scmp.ne.s32.totalorder %s226, %s228
      %p232 = scmp.eq.s32.totalorder %s19, 0
      %p233 = por %p231, %p232
      %p234 = scmp.ne.s32.totalorder %s226, %s228
      %p235 = scmp.eq.s32.totalorder %s24, 1
      %p236 = por %p234, %p235
      %p237 = scmp.ne.s32.totalorder %s228, %s229
      %p238 = scmp.eq.s32.totalorder %s24, 0
      %p239 = por %p237, %p238
      %p240 = scmp.ne.s32.totalorder %s228, %s229
      %p241 = scmp.eq.s32.totalorder %s25, 1
      %p242 = por %p240, %p241
      %p244 = scmp.ne.s32.totalorder %s229, %s243
      %p245 = scmp.eq.s32.totalorder %s25, 0
      %p246 = por %p244, %p245
      %s247 = ssub.s32 %s19, %s26
      %p248 = scmp.eq.s32.totalorder %s247, 0
      %s250 = sadd.s32 %s249, 1
      %s251 = scalar_select %p248, %s249, %s250
      %p254 = pneg %p248
      %p255 = scmp.eq.s32.totalorder %s19, 1
      %p256 = por %p254, %p255
      %p257 = scmp.ne.s32.totalorder %s249, %s252
      %p258 = scmp.eq.s32.totalorder %s19, 0
      %p259 = por %p257, %p258
      %p260 = scmp.ne.s32.totalorder %s249, %s252
      %p261 = scmp.eq.s32.totalorder %s24, 1
      %p262 = por %p260, %p261
      %p263 = scmp.ne.s32.totalorder %s252, %s253
      %p264 = scmp.eq.s32.totalorder %s24, 0
      %p265 = por %p263, %p264
      %p266 = scmp.ne.s32.totalorder %s252, %s253
      %p267 = scmp.eq.s32.totalorder %s25, 1
      %p268 = por %p266, %p267
      %p270 = scmp.ne.s32.totalorder %s253, %s269
      %p271 = scmp.eq.s32.totalorder %s25, 0
      %p272 = por %p270, %p271
      %p273 = scmp.le.s32.totalorder 1, %s19
      %p274 = scmp.lt.s32.totalorder %s19, 3
      %p275 = pnand %p273, %p274
      %p276 = pneg %p275
      // Predicated region
      $region9: #{encoder_block.5} parent=5 // pred_check
        _
      $region10: #{encoder_block.5} parent=5 // pred_check_branch
        %278 = sbr.rel (%p275) target = $region12
      $region11: #{encoder_block.5} parent=5 // pred_region
        %s279 = ssub.s32 %s19, 1
        // Predicated region
        $region13: #{encoder_block.5} parent=11 // pred_check
          %p280 = pneg %p92
        $region14: #{encoder_block.5} parent=11 // pred_check_branch
          %282 = sbr.rel (%p280) target = $region16
        $region15: #{encoder_block.5} parent=11 // pred_region
          _
        $region16: #{encoder_block.5} parent=11 // pred_fallthru
          _
        // Predicated region
        $region17: #{encoder_block.5} parent=11 // pred_check
          %p283 = pneg %p113
        $region18: #{encoder_block.5} parent=11 // pred_check_branch
          %285 = sbr.rel (%p283) target = $region20
        $region19: #{encoder_block.5} parent=11 // pred_region
          _
        $region20: #{encoder_block.5} parent=11 // pred_fallthru
          _
        // Predicated region
        $region21: #{encoder_block.5} parent=11 // pred_check
          %p286 = pneg %p134
        $region22: #{encoder_block.5} parent=11 // pred_check_branch
          %288 = sbr.rel (%p286) target = $region24
        $region23: #{encoder_block.5} parent=11 // pred_region
          _
        $region24: #{encoder_block.5} parent=11 // pred_fallthru
          _
        // Predicated region
        $region25: #{encoder_block.5} parent=11 // pred_check
          %p289 = pneg %p155
        $region26: #{encoder_block.5} parent=11 // pred_check_branch
          %291 = sbr.rel (%p289) target = $region28
        $region27: #{encoder_block.5} parent=11 // pred_region
          _
        $region28: #{encoder_block.5} parent=11 // pred_fallthru
          _
        // Predicated region
        $region29: #{encoder_block.5} parent=11 // pred_check
          %p292 = pneg %p176
        $region30: #{encoder_block.5} parent=11 // pred_check_branch
          %294 = sbr.rel (%p292) target = $region32
        $region31: #{encoder_block.5} parent=11 // pred_region
          _
        $region32: #{encoder_block.5} parent=11 // pred_fallthru
          _
        // Predicated region
        $region33: #{encoder_block.5} parent=11 // pred_check
          %p295 = pneg %p197
        $region34: #{encoder_block.5} parent=11 // pred_check_branch
          %297 = sbr.rel (%p295) target = $region36
        $region35: #{encoder_block.5} parent=11 // pred_region
          _
        $region36: #{encoder_block.5} parent=11 // pred_fallthru
          _
        // Predicated region
        $region37: #{encoder_block.5} parent=11 // pred_check
          %p298 = pneg %p218
        $region38: #{encoder_block.5} parent=11 // pred_check_branch
          %300 = sbr.rel (%p298) target = $region40
        $region39: #{encoder_block.5} parent=11 // pred_region
          _
        $region40: #{encoder_block.5} parent=11 // pred_fallthru
          _
        // Predicated region
        $region41: #{encoder_block.5} parent=11 // pred_check
          %p301 = pneg %p239
        $region42: #{encoder_block.5} parent=11 // pred_check_branch
          %303 = sbr.rel (%p301) target = $region44
        $region43: #{encoder_block.5} parent=11 // pred_region
          _
        $region44: #{encoder_block.5} parent=11 // pred_fallthru
          _
      $region12: #{encoder_block.5} parent=5 // pred_fallthru
        _
      %p304 = scmp.lt.s32.totalorder %s19, 2
      // Predicated region
      $region45: #{encoder_block.5} parent=5 // pred_check
        %p305 = pneg %p304
      $region46: #{encoder_block.5} parent=5 // pred_check_branch
        %307 = sbr.rel (%p305) target = $region48
      $region47: #{encoder_block.5} parent=5 // pred_region
        // Predicated region
        $region49: #{encoder_block.5} parent=47 // pred_check
          %p308 = pneg %p39
        $region50: #{encoder_block.5} parent=47 // pred_check_branch
          %310 = sbr.rel (%p308) target = $region52
        $region51: #{encoder_block.5} parent=47 // pred_region
          %s311 = smul.u32 4, %s19
          %p312 = scmp.lt.s32.totalorder %s311, 7
          %s313 = scalar_select %p312, %s311, 7
          %s314 = smul.addr %s313, 8
          %s315 = scalar_lea.vmem %s0, %s314
          %s316 = smul.u32 4, %s19
        $region52: #{encoder_block.5} parent=47 // pred_fallthru
          _
        // Predicated region
        $region53: #{encoder_block.5} parent=47 // pred_check
          %p317 = pneg %p65
        $region54: #{encoder_block.5} parent=47 // pred_check_branch
          %319 = sbr.rel (%p317) target = $region56
        $region55: #{encoder_block.5} parent=47 // pred_region
          %s320 = smul.u32 4, %s19
          %p321 = scmp.lt.s32.totalorder %s320, 7
          %s322 = scalar_select %p321, %s320, 7
          %s323 = smul.addr %s322, 8
          %s324 = scalar_lea.vmem %s1, %s323
          %s325 = smul.u32 4, %s19
        $region56: #{encoder_block.5} parent=47 // pred_fallthru
          _
      $region48: #{encoder_block.5} parent=5 // pred_fallthru
        _
      %p326 = scmp.le.s32.totalorder 1, %s19
      %p327 = scmp.lt.s32.totalorder %s19, 3
      %p328 = pnand %p326, %p327
      %p329 = pneg %p328
      // Predicated region
      $region57: #{encoder_block.5} parent=5 // pred_check
        _
      $region58: #{encoder_block.5} parent=5 // pred_check_branch
        %331 = sbr.rel (%p328) target = $region60
      $region59: #{encoder_block.5} parent=5 // pred_region
        %s332 = ssub.s32 %s19, 1
        %s333 = smul.u32 4, %s24
        %p334 = scmp.lt.s32.totalorder %s333, 7
        %s335 = scalar_select %p334, %s333, 7
        %s336 = smul.addr %s335, 8
        %s337 = scalar_lea.vmem %s0, %s336
        %p338 = pneg %p45
        %p339 = pneg %p42
        %s340 = smul.u32 4, %s24
        %p341 = scmp.lt.s32.totalorder %s340, 7
        %s342 = scalar_select %p341, %s340, 7
        %s343 = smul.addr %s342, 8
        %s344 = scalar_lea.vmem %s1, %s343
        %p345 = pneg %p71
        %p346 = pneg %p68
        %p347 = pneg %p92
        %p348 = pneg %p89
        %p349 = pneg %p113
        %p350 = pneg %p110
        %p351 = pneg %p134
        %p352 = pneg %p131
        %p353 = pneg %p155
        %p354 = pneg %p152
        %p355 = pneg %p176
        %p356 = pneg %p173
        %p357 = pneg %p197
        %p358 = pneg %p194
        %p359 = pneg %p218
        %p360 = pneg %p215
        %p361 = pneg %p239
        %p362 = pneg %p236
        %p363 = pneg %p265
        %p364 = pneg %p262
        %s365 = sand.u32 %s252, 1
        %s366 = scalar_lea.sflag [#allocation3], %s365
        %s367 = sand.u32 %s252, 1
        %s368 = smul.addr %s367, 32
        %s369 = scalar_lea.vmem [#allocation2], %s368
        %s370 = smul.u32 4, %s24
        %p371 = scmp.lt.s32.totalorder %s370, 7
        %s372 = scalar_select %p371, %s370, 7
        %s373 = smul.addr %s372, 8
        %s374 = scalar_lea.vmem %s0, %s373
        %s375 = smul.u32 4, %s24
        %s376 = smul.u32 4, %s24
        %p377 = scmp.lt.s32.totalorder %s376, 7
        %s378 = scalar_select %p377, %s376, 7
        %s379 = smul.addr %s378, 8
        %s380 = scalar_lea.vmem %s1, %s379
        %s381 = smul.u32 4, %s24
        %s382 = smul.u32 4, %s24
        %v383 = vld [vmem:[%s374] sm:$0xff]
        %v384 = vld [vmem:[%s374 + $0x8] sm:$0xff]
        %v385 = vld [vmem:[%s374 + $0x10] sm:$0xff]
        %v386 = vld [vmem:[%s374 + $0x18] sm:$0xff]
        %v387 = vld [vmem:[%s2] sm:$0xff]
        %v388 = vld [vmem:[%s2 + $0x8] sm:$0xff]
        %v389 = vld [vmem:[%s2 + $0x10] sm:$0xff]
        %v390 = vld [vmem:[%s2 + $0x18] sm:$0xff]
        %v391 = vld [vmem:[%s2 + $0x20] sm:$0xff]
        %v392 = vld [vmem:[%s2 + $0x28] sm:$0xff]
        %v393 = vld [vmem:[%s2 + $0x30] sm:$0xff]
        %v394 = vld [vmem:[%s2 + $0x38] sm:$0xff]
        %v395 = vld [vmem:[%s2 + $0x40] sm:$0xff]
        %v396 = vld [vmem:[%s2 + $0x48] sm:$0xff]
        %v397 = vld [vmem:[%s2 + $0x50] sm:$0xff]
        %v398 = vld [vmem:[%s2 + $0x58] sm:$0xff]
        %v399 = vld [vmem:[%s2 + $0x60] sm:$0xff]
        %v400 = vld [vmem:[%s2 + $0x68] sm:$0xff]
        %v401 = vld [vmem:[%s2 + $0x70] sm:$0xff]
        %v402 = vld [vmem:[%s2 + $0x78] sm:$0xff]
        %v403 = vld [vmem:[%s3] sm:$0x1]
        %v405 = vlaneseq
        %v406 = vshrl.u32 %v405, 7
        %v407 = vsub.s32 0, %v406
        %v408 = vrot.slane %v403, %v407
        %410 = vmatprep.subr.mxu0 0.0
        %411 = vmatpush1.msra.mxu0 %v402
        %412 = vmatprep.subr.mxu0 0.0
        %413 = vmatpush1.msra.mxu0 %v401
        %414 = vmatprep.subr.mxu0 0.0
        %415 = vmatpush1.msra.mxu0 %v400
        %416 = vmatprep.subr.mxu0 0.0
        %417 = vmatpush1.msra.mxu0 %v399
        %418 = vmatprep.subr.mxu0 0.0
        %419 = vmatpush1.msra.mxu0 %v398
        %420 = vmatprep.subr.mxu0 0.0
        %421 = vmatpush1.msra.mxu0 %v397
        %422 = vmatprep.subr.mxu0 0.0
        %423 = vmatpush1.msra.mxu0 %v396
        %424 = vmatprep.subr.mxu0 0.0
        %425 = vmatpush1.msra.mxu0 %v395
        %426 = vmatprep.subr.mxu0 0.0
        %427 = vmatpush1.msra.mxu0 %v394
        %428 = vmatprep.subr.mxu0 0.0
        %429 = vmatpush1.msra.mxu0 %v393
        %430 = vmatprep.subr.mxu0 0.0
        %431 = vmatpush1.msra.mxu0 %v392
        %432 = vmatprep.subr.mxu0 0.0
        %433 = vmatpush1.msra.mxu0 %v391
        %434 = vmatprep.subr.mxu0 0.0
        %435 = vmatpush1.msra.mxu0 %v390
        %436 = vmatprep.subr.mxu0 0.0
        %437 = vmatpush1.msra.mxu0 %v389
        %438 = vmatprep.subr.mxu0 0.0
        %439 = vmatpush1.msra.mxu0 %v388
        %440 = vmatprep.subr.mxu0 0.0
        %441 = vmatpush1.msra.mxu0 %v387
        %442 = vmatprep.subr.mxu0 0.0
        %443 = vmatpush2.msra.mxu0 0.0
        %444 = vmatprep.subr.mxu0 0.0
        %445 = vmatpush2.msra.mxu0 0.0
        %446 = vmatprep.subr.mxu0 0.0
        %447 = vmatpush2.msra.mxu0 0.0
        %448 = vmatprep.subr.mxu0 0.0
        %449 = vmatpush2.msra.mxu0 0.0
        %450 = vmatprep.subr.mxu0 0.0
        %451 = vmatpush2.msra.mxu0 0.0
        %452 = vmatprep.subr.mxu0 0.0
        %453 = vmatpush2.msra.mxu0 0.0
        %454 = vmatprep.subr.mxu0 0.0
        %455 = vmatpush2.msra.mxu0 0.0
        %456 = vmatprep.subr.mxu0 0.0
        %457 = vmatpush2.msra.mxu0 0.0
        %458 = vmatprep.subr.mxu0 0.0
        %459 = vmatpush2.msra.mxu0 0.0
        %460 = vmatprep.subr.mxu0 0.0
        %461 = vmatpush2.msra.mxu0 0.0
        %462 = vmatprep.subr.mxu0 0.0
        %463 = vmatpush2.msra.mxu0 0.0
        %464 = vmatprep.subr.mxu0 0.0
        %465 = vmatpush2.msra.mxu0 0.0
        %466 = vmatprep.subr.mxu0 0.0
        %467 = vmatpush2.msra.mxu0 0.0
        %468 = vmatprep.subr.mxu0 0.0
        %469 = vmatpush2.msra.mxu0 0.0
        %470 = vmatprep.subr.mxu0 0.0
        %471 = vmatpush2.msra.mxu0 0.0
        %472 = vmatprep.subr.mxu0 0.0
        %473 = vmatpush2.msra.mxu0 0.0
        %474 = vmatprep.mubr.f32.mxu0 0.0
        %475 = vmatmul.mubr.f32.gmra.mxu0 %v383
        %v476 = vpop.f32.mrf.mxu0
        %v477 = vadd.f32 %v408, %v476
        %v478 = vpop.f32.mrf.mxu0
        %479 = vmatprep.mubr.f32.mxu0 0.0
        %480 = vmatmul.mubr.f32.gmra.mxu0 %v384
        %v481 = vpop.f32.mrf.mxu0
        %v482 = vadd.f32 %v408, %v481
        %v483 = vpop.f32.mrf.mxu0
        %484 = vmatprep.mubr.f32.mxu0 0.0
        %485 = vmatmul.mubr.f32.gmra.mxu0 %v385
        %v486 = vpop.f32.mrf.mxu0
        %v487 = vadd.f32 %v408, %v486
        %v488 = vpop.f32.mrf.mxu0
        %489 = vmatprep.mubr.f32.mxu0 0.0
        %490 = vmatmul.mubr.f32.gmra.mxu0 %v386
        %v491 = vpop.f32.mrf.mxu0
        %v492 = vadd.f32 %v408, %v491
        %v493 = vpop.f32.mrf.mxu0
        %494 = vdwg.mxu0
        %v495 = vld [vmem:[%s380] sm:$0xff]
        %v496 = vld [vmem:[%s380 + $0x8] sm:$0xff]
        %v497 = vld [vmem:[%s380 + $0x10] sm:$0xff]
        %v498 = vld [vmem:[%s380 + $0x18] sm:$0xff]
        %v499 = vadd.f32 %v477, %v495
        %v500 = vadd.f32 %v482, %v496
        %v501 = vadd.f32 %v487, %v497
        %v502 = vadd.f32 %v492, %v498
        %v503 = vld [vmem:[%s4] sm:$0x1]
        %v504 = vld [vmem:[%s5] sm:$0x1]
        %505 = vadd.xlane.f32.xlu0 %v499
        %v506 = vpop.xlane.xlu0 %505
        %507 = vadd.xlane.f32.xlu0 %v500
        %v508 = vpop.xlane.xlu0 %507
        %509 = vadd.xlane.f32.xlu0 %v501
        %v510 = vpop.xlane.xlu0 %509
        %511 = vadd.xlane.f32.xlu0 %v502
        %v512 = vpop.xlane.xlu0 %511
        %v513 = vrcp.pop 128.0
        %v514 = vmul.f32 %v506, %v513
        %v515 = vmul.f32 %v508, %v513
        %v516 = vmul.f32 %v510, %v513
        %v517 = vmul.f32 %v512, %v513
        %v518 = vsub.f32 %v499, %v514
        %v519 = vsub.f32 %v500, %v515
        %v520 = vsub.f32 %v501, %v516
        %v521 = vsub.f32 %v502, %v517
        %v522 = vmul.f32 %v518, %v518
        %v523 = vmul.f32 %v519, %v519
        %v524 = vmul.f32 %v520, %v520
        %v525 = vmul.f32 %v521, %v521
        %526 = vadd.xlane.f32.xlu0 %v522
        %v527 = vpop.xlane.xlu0 %526
        %528 = vadd.xlane.f32.xlu0 %v523
        %v529 = vpop.xlane.xlu0 %528
        %530 = vadd.xlane.f32.xlu0 %v524
        %v531 = vpop.xlane.xlu0 %530
        %532 = vadd.xlane.f32.xlu0 %v525
        %v533 = vpop.xlane.xlu0 %532
        %v534 = vmul.f32 %v527, %v513
        %v535 = vmul.f32 %v529, %v513
        %v536 = vmul.f32 %v531, %v513
        %v537 = vmul.f32 %v533, %v513
        %v538 = vadd.f32 %v534, 1e-05
        %v539 = vadd.f32 %v535, 1e-05
        %v540 = vadd.f32 %v536, 1e-05
        %v541 = vadd.f32 %v537, 1e-05
        %v542 = vrsqrt.pop %v538
        %v543 = vrsqrt.pop %v539
        %v544 = vrsqrt.pop %v540
        %v545 = vrsqrt.pop %v541
        %v546 = vmul.f32 %v518, %v542
        %v547 = vmul.f32 %v519, %v543
        %v548 = vmul.f32 %v520, %v544
        %v549 = vmul.f32 %v521, %v545
        %v551 = vlaneseq
        %v552 = vshrl.u32 %v551, 7
        %v553 = vsub.s32 0, %v552
        %v554 = vrot.slane %v503, %v553
        %v556 = vmul.f32 %v546, %v554
        %v557 = vmul.f32 %v547, %v554
        %v558 = vmul.f32 %v548, %v554
        %v559 = vmul.f32 %v549, %v554
        %v561 = vlaneseq
        %v562 = vshrl.u32 %v561, 7
        %v563 = vsub.s32 0, %v562
        %v564 = vrot.slane %v504, %v563
        %v566 = vadd.f32 %v556, %v564
        %v567 = vadd.f32 %v557, %v564
        %v568 = vadd.f32 %v558, %v564
        %v569 = vadd.f32 %v559, %v564
        %v570 = vld [vmem:[%s6] sm:$0xff]
        %v571 = vld [vmem:[%s6 + $0x8] sm:$0xff]
        %v572 = vld [vmem:[%s6 + $0x10] sm:$0xff]
        %v573 = vld [vmem:[%s6 + $0x18] sm:$0xff]
        %v574 = vld [vmem:[%s6 + $0x20] sm:$0xff]
        %v575 = vld [vmem:[%s6 + $0x28] sm:$0xff]
        %v576 = vld [vmem:[%s6 + $0x30] sm:$0xff]
        %v577 = vld [vmem:[%s6 + $0x38] sm:$0xff]
        %v578 = vld [vmem:[%s6 + $0x40] sm:$0xff]
        %v579 = vld [vmem:[%s6 + $0x48] sm:$0xff]
        %v580 = vld [vmem:[%s6 + $0x50] sm:$0xff]
        %v581 = vld [vmem:[%s6 + $0x58] sm:$0xff]
        %v582 = vld [vmem:[%s6 + $0x60] sm:$0xff]
        %v583 = vld [vmem:[%s6 + $0x68] sm:$0xff]
        %v584 = vld [vmem:[%s6 + $0x70] sm:$0xff]
        %v585 = vld [vmem:[%s6 + $0x78] sm:$0xff]
        %v586 = vld [vmem:[%s6 + $0x80] sm:$0xff]
        %v587 = vld [vmem:[%s6 + $0x88] sm:$0xff]
        %v588 = vld [vmem:[%s6 + $0x90] sm:$0xff]
        %v589 = vld [vmem:[%s6 + $0x98] sm:$0xff]
        %v590 = vld [vmem:[%s6 + $0xa0] sm:$0xff]
        %v591 = vld [vmem:[%s6 + $0xa8] sm:$0xff]
        %v592 = vld [vmem:[%s6 + $0xb0] sm:$0xff]
        %v593 = vld [vmem:[%s6 + $0xb8] sm:$0xff]
        %v594 = vld [vmem:[%s6 + $0xc0] sm:$0xff]
        %v595 = vld [vmem:[%s6 + $0xc8] sm:$0xff]
        %v596 = vld [vmem:[%s6 + $0xd0] sm:$0xff]
        %v597 = vld [vmem:[%s6 + $0xd8] sm:$0xff]
        %v598 = vld [vmem:[%s6 + $0xe0] sm:$0xff]
        %v599 = vld [vmem:[%s6 + $0xe8] sm:$0xff]
        %v600 = vld [vmem:[%s6 + $0xf0] sm:$0xff]
        %v601 = vld [vmem:[%s6 + $0xf8] sm:$0xff]
        %v602 = vld [vmem:[%s7] sm:$0x3]
        %v604 = vlaneseq
        %v605 = vshrl.u32 %v604, 7
        %v606 = vsub.s32 0, %v605
        %v607 = vrot.slane %v602, %v606
        %v608 = vlaneseq
        %v609 = vshrl.u32 %v608, 7
        %v610 = vsub.s32 1, %v609
        %v611 = vrot.slane %v602, %v610
        %614 = vmatprep.subr.mxu0 %v601
        %615 = vmatpush1.msra.mxu0 %v600
        %616 = vmatprep.subr.mxu0 %v599
        %617 = vmatpush1.msra.mxu0 %v598
        %618 = vmatprep.subr.mxu0 %v597
        %619 = vmatpush1.msra.mxu0 %v596
        %620 = vmatprep.subr.mxu0 %v595
        %621 = vmatpush1.msra.mxu0 %v594
        %622 = vmatprep.subr.mxu0 %v593
        %623 = vmatpush1.msra.mxu0 %v592
        %624 = vmatprep.subr.mxu0 %v591
        %625 = vmatpush1.msra.mxu0 %v590
        %626 = vmatprep.subr.mxu0 %v589
        %627 = vmatpush1.msra.mxu0 %v588
        %628 = vmatprep.subr.mxu0 %v587
        %629 = vmatpush1.msra.mxu0 %v586
        %630 = vmatprep.subr.mxu0 %v585
        %631 = vmatpush1.msra.mxu0 %v584
        %632 = vmatprep.subr.mxu0 %v583
        %633 = vmatpush1.msra.mxu0 %v582
        %634 = vmatprep.subr.mxu0 %v581
        %635 = vmatpush1.msra.mxu0 %v580
        %636 = vmatprep.subr.mxu0 %v579
        %637 = vmatpush1.msra.mxu0 %v578
        %638 = vmatprep.subr.mxu0 %v577
        %639 = vmatpush1.msra.mxu0 %v576
        %640 = vmatprep.subr.mxu0 %v575
        %641 = vmatpush1.msra.mxu0 %v574
        %642 = vmatprep.subr.mxu0 %v573
        %643 = vmatpush1.msra.mxu0 %v572
        %644 = vmatprep.subr.mxu0 %v571
        %645 = vmatpush1.msra.mxu0 %v570
        %646 = vmatprep.subr.mxu0 0.0
        %647 = vmatpush2.msra.mxu0 0.0
        %648 = vmatprep.subr.mxu0 0.0
        %649 = vmatpush2.msra.mxu0 0.0
        %650 = vmatprep.subr.mxu0 0.0
        %651 = vmatpush2.msra.mxu0 0.0
        %652 = vmatprep.subr.mxu0 0.0
        %653 = vmatpush2.msra.mxu0 0.0
        %654 = vmatprep.subr.mxu0 0.0
        %655 = vmatpush2.msra.mxu0 0.0
        %656 = vmatprep.subr.mxu0 0.0
        %657 = vmatpush2.msra.mxu0 0.0
        %658 = vmatprep.subr.mxu0 0.0
        %659 = vmatpush2.msra.mxu0 0.0
        %660 = vmatprep.subr.mxu0 0.0
        %661 = vmatpush2.msra.mxu0 0.0
        %662 = vmatprep.subr.mxu0 0.0
        %663 = vmatpush2.msra.mxu0 0.0
        %664 = vmatprep.subr.mxu0 0.0
        %665 = vmatpush2.msra.mxu0 0.0
        %666 = vmatprep.subr.mxu0 0.0
        %667 = vmatpush2.msra.mxu0 0.0
        %668 = vmatprep.subr.mxu0 0.0
        %669 = vmatpush2.msra.mxu0 0.0
        %670 = vmatprep.subr.mxu0 0.0
        %671 = vmatpush2.msra.mxu0 0.0
        %672 = vmatprep.subr.mxu0 0.0
        %673 = vmatpush2.msra.mxu0 0.0
        %674 = vmatprep.subr.mxu0 0.0
        %675 = vmatpush2.msra.mxu0 0.0
        %676 = vmatprep.subr.mxu0 0.0
        %677 = vmatpush2.msra.mxu0 0.0
        %678 = vmatprep.mubr.f32.mxu0 0.0
        %679 = vmatmul.mubr.f32.gmra.mxu0 %v566
        %v680 = vpop.f32.mrf.mxu0
        %v681 = vadd.f32 %v607, %v680
        %v682 = vpop.f32.mrf.mxu0
        %v683 = vadd.f32 %v611, %v682
        %684 = vmatprep.mubr.f32.mxu0 0.0
        %685 = vmatmul.mubr.f32.gmra.mxu0 %v567
        %v686 = vpop.f32.mrf.mxu0
        %v687 = vadd.f32 %v607, %v686
        %v688 = vpop.f32.mrf.mxu0
        %v689 = vadd.f32 %v611, %v688
        %690 = vmatprep.mubr.f32.mxu0 0.0
        %691 = vmatmul.mubr.f32.gmra.mxu0 %v568
        %v692 = vpop.f32.mrf.mxu0
        %v693 = vadd.f32 %v607, %v692
        %v694 = vpop.f32.mrf.mxu0
        %v695 = vadd.f32 %v611, %v694
        %696 = vmatprep.mubr.f32.mxu0 0.0
        %697 = vmatmul.mubr.f32.gmra.mxu0 %v569
        %v698 = vpop.f32.mrf.mxu0
        %v699 = vadd.f32 %v607, %v698
        %v700 = vpop.f32.mrf.mxu0
        %v701 = vadd.f32 %v611, %v700
        %702 = vdwg.mxu0
        %v703 = vmax.f32 %v681, 0.0
        %v704 = vmax.f32 %v683, 0.0
        %v705 = vmax.f32 %v687, 0.0
        %v706 = vmax.f32 %v689, 0.0
        %v707 = vmax.f32 %v693, 0.0
        %v708 = vmax.f32 %v695, 0.0
        %v709 = vmax.f32 %v699, 0.0
        %v710 = vmax.f32 %v701, 0.0
        %v711 = vld [vmem:[%s8] sm:$0xff]
        %v712 = vld [vmem:[%s8 + $0x8] sm:$0xff]
        %v713 = vld [vmem:[%s8 + $0x10] sm:$0xff]
        %v714 = vld [vmem:[%s8 + $0x18] sm:$0xff]
        %v715 = vld [vmem:[%s8 + $0x20] sm:$0xff]
        %v716 = vld [vmem:[%s8 + $0x28] sm:$0xff]
        %v717 = vld [vmem:[%s8 + $0x30] sm:$0xff]
        %v718 = vld [vmem:[%s8 + $0x38] sm:$0xff]
        %v719 = vld [vmem:[%s8 + $0x40] sm:$0xff]
        %v720 = vld [vmem:[%s8 + $0x48] sm:$0xff]
        %v721 = vld [vmem:[%s8 + $0x50] sm:$0xff]
        %v722 = vld [vmem:[%s8 + $0x58] sm:$0xff]
        %v723 = vld [vmem:[%s8 + $0x60] sm:$0xff]
        %v724 = vld [vmem:[%s8 + $0x68] sm:$0xff]
        %v725 = vld [vmem:[%s8 + $0x70] sm:$0xff]
        %v726 = vld [vmem:[%s8 + $0x78] sm:$0xff]
        %v727 = vld [vmem:[%s8 + $0x80] sm:$0xff]
        %v728 = vld [vmem:[%s8 + $0x88] sm:$0xff]
        %v729 = vld [vmem:[%s8 + $0x90] sm:$0xff]
        %v730 = vld [vmem:[%s8 + $0x98] sm:$0xff]
        %v731 = vld [vmem:[%s8 + $0xa0] sm:$0xff]
        %v732 = vld [vmem:[%s8 + $0xa8] sm:$0xff]
        %v733 = vld [vmem:[%s8 + $0xb0] sm:$0xff]
        %v734 = vld [vmem:[%s8 + $0xb8] sm:$0xff]
        %v735 = vld [vmem:[%s8 + $0xc0] sm:$0xff]
        %v736 = vld [vmem:[%s8 + $0xc8] sm:$0xff]
        %v737 = vld [vmem:[%s8 + $0xd0] sm:$0xff]
        %v738 = vld [vmem:[%s8 + $0xd8] sm:$0xff]
        %v739 = vld [vmem:[%s8 + $0xe0] sm:$0xff]
        %v740 = vld [vmem:[%s8 + $0xe8] sm:$0xff]
        %v741 = vld [vmem:[%s8 + $0xf0] sm:$0xff]
        %v742 = vld [vmem:[%s8 + $0xf8] sm:$0xff]
        %v743 = vld [vmem:[%s9] sm:$0x1]
        %v745 = vlaneseq
        %v746 = vshrl.u32 %v745, 7
        %v747 = vsub.s32 0, %v746
        %v748 = vrot.slane %v743, %v747
        %750 = vmatprep.subr.mxu0 0.0
        %751 = vmatpush1.msra.mxu0 %v726
        %752 = vmatprep.subr.mxu0 0.0
        %753 = vmatpush1.msra.mxu0 %v725
        %754 = vmatprep.subr.mxu0 0.0
        %755 = vmatpush1.msra.mxu0 %v724
        %756 = vmatprep.subr.mxu0 0.0
        %757 = vmatpush1.msra.mxu0 %v723
        %758 = vmatprep.subr.mxu0 0.0
        %759 = vmatpush1.msra.mxu0 %v722
        %760 = vmatprep.subr.mxu0 0.0
        %761 = vmatpush1.msra.mxu0 %v721
        %762 = vmatprep.subr.mxu0 0.0
        %763 = vmatpush1.msra.mxu0 %v720
        %764 = vmatprep.subr.mxu0 0.0
        %765 = vmatpush1.msra.mxu0 %v719
        %766 = vmatprep.subr.mxu0 0.0
        %767 = vmatpush1.msra.mxu0 %v718
        %768 = vmatprep.subr.mxu0 0.0
        %769 = vmatpush1.msra.mxu0 %v717
        %770 = vmatprep.subr.mxu0 0.0
        %771 = vmatpush1.msra.mxu0 %v716
        %772 = vmatprep.subr.mxu0 0.0
        %773 = vmatpush1.msra.mxu0 %v715
        %774 = vmatprep.subr.mxu0 0.0
        %775 = vmatpush1.msra.mxu0 %v714
        %776 = vmatprep.subr.mxu0 0.0
        %777 = vmatpush1.msra.mxu0 %v713
        %778 = vmatprep.subr.mxu0 0.0
        %779 = vmatpush1.msra.mxu0 %v712
        %780 = vmatprep.subr.mxu0 0.0
        %781 = vmatpush1.msra.mxu0 %v711
        %782 = vmatprep.subr.mxu0 0.0
        %783 = vmatpush2.msra.mxu0 %v742
        %784 = vmatprep.subr.mxu0 0.0
        %785 = vmatpush2.msra.mxu0 %v741
        %786 = vmatprep.subr.mxu0 0.0
        %787 = vmatpush2.msra.mxu0 %v740
        %788 = vmatprep.subr.mxu0 0.0
        %789 = vmatpush2.msra.mxu0 %v739
        %790 = vmatprep.subr.mxu0 0.0
        %791 = vmatpush2.msra.mxu0 %v738
        %792 = vmatprep.subr.mxu0 0.0
        %793 = vmatpush2.msra.mxu0 %v737
        %794 = vmatprep.subr.mxu0 0.0
        %795 = vmatpush2.msra.mxu0 %v736
        %796 = vmatprep.subr.mxu0 0.0
        %797 = vmatpush2.msra.mxu0 %v735
        %798 = vmatprep.subr.mxu0 0.0
        %799 = vmatpush2.msra.mxu0 %v734
        %800 = vmatprep.subr.mxu0 0.0
        %801 = vmatpush2.msra.mxu0 %v733
        %802 = vmatprep.subr.mxu0 0.0
        %803 = vmatpush2.msra.mxu0 %v732
        %804 = vmatprep.subr.mxu0 0.0
        %805 = vmatpush2.msra.mxu0 %v731
        %806 = vmatprep.subr.mxu0 0.0
        %807 = vmatpush2.msra.mxu0 %v730
        %808 = vmatprep.subr.mxu0 0.0
        %809 = vmatpush2.msra.mxu0 %v729
        %810 = vmatprep.subr.mxu0 0.0
        %811 = vmatpush2.msra.mxu0 %v728
        %812 = vmatprep.subr.mxu0 0.0
        %813 = vmatpush2.msra.mxu0 %v727
        %814 = vmatprep.mubr.f32.mxu0 %v704
        %815 = vmatmul.mubr.f32.gmra.mxu0 %v703
        %v816 = vpop.f32.mrf.mxu0
        %v817 = vadd.f32 %v748, %v816
        %v818 = vpop.f32.mrf.mxu0
        %819 = vmatprep.mubr.f32.mxu0 %v706
        %820 = vmatmul.mubr.f32.gmra.mxu0 %v705
        %v821 = vpop.f32.mrf.mxu0
        %v822 = vadd.f32 %v748, %v821
        %v823 = vpop.f32.mrf.mxu0
        %824 = vmatprep.mubr.f32.mxu0 %v708
        %825 = vmatmul.mubr.f32.gmra.mxu0 %v707
        %v826 = vpop.f32.mrf.mxu0
        %v827 = vadd.f32 %v748, %v826
        %v828 = vpop.f32.mrf.mxu0
        %829 = vmatprep.mubr.f32.mxu0 %v710
        %830 = vmatmul.mubr.f32.gmra.mxu0 %v709
        %v831 = vpop.f32.mrf.mxu0
        %v832 = vadd.f32 %v748, %v831
        %v833 = vpop.f32.mrf.mxu0
        %834 = vdwg.mxu0
        %v835 = vadd.f32 %v817, %v499
        %v836 = vadd.f32 %v822, %v500
        %v837 = vadd.f32 %v827, %v501
        %v838 = vadd.f32 %v832, %v502
        %839 = vst [vmem:[%s369] sm:$0xff] %v835
        %840 = vst [vmem:[%s369 + $0x8] sm:$0xff] %v836
        %841 = vst [vmem:[%s369 + $0x10] sm:$0xff] %v837
        %842 = vst [vmem:[%s369 + $0x18] sm:$0xff] %v838
        %s843 = sand.u32 %s252, 1
        %s844 = scalar_lea.sflag [#allocation3], %s843
        %s845 = sand.u32 %s252, 1
        %s846 = smul.addr %s845, 32
        %s847 = scalar_lea.vmem [#allocation2], %s846
        // Predicated region
        $region61: #{encoder_block.5} parent=59 // pred_check
          %p848 = pneg %p262
        $region62: #{encoder_block.5} parent=59 // pred_check_branch
          %850 = sbr.rel (%p848) target = $region64
        $region63: #{encoder_block.5} parent=59 // pred_region
          %s851 = smul.u32 4, %s24
          %s853 = ssub.s32 512, 512
          %854 = vsyncadd %s844, %s853
          %s855 = smul.addr %s851, 128
          %s856 = scalar_lea.hbm %s10, %s855
          %s857 = sshll.u32 %s847, 4
          %s858 = int_to_ptr.vmem [resolvable:$true] %s857
          %863 = dma.vmem_to_hbm [thread:$0]  %s858, 512, %s856, %s844, 128, 128, 8
        $region64: #{encoder_block.5} parent=59 // pred_fallthru
          _
      $region60: #{encoder_block.5} parent=5 // pred_fallthru
        _
      %p864 = scmp.le.s32.totalorder 2, %s19
      // Predicated region
      $region65: #{encoder_block.5} parent=5 // pred_check
        %p865 = pneg %p864
      $region66: #{encoder_block.5} parent=5 // pred_check_branch
        %867 = sbr.rel (%p865) target = $region68
      $region67: #{encoder_block.5} parent=5 // pred_region
        %s868 = ssub.s32 %s19, 2
        // Predicated region
        $region69: #{encoder_block.5} parent=67 // pred_check
          %p869 = pneg %p268
        $region70: #{encoder_block.5} parent=67 // pred_check_branch
          %871 = sbr.rel (%p869) target = $region72
        $region71: #{encoder_block.5} parent=67 // pred_region
          %s872 = sand.u32 %s253, 1
          %s873 = scalar_lea.sflag [#allocation3], %s872
          %s874 = sand.u32 %s253, 1
          %s875 = smul.addr %s874, 32
          %s876 = scalar_lea.vmem [#allocation2], %s875
          %877 = dma.done %s873, 512
        $region72: #{encoder_block.5} parent=67 // pred_fallthru
          _
      $region68: #{encoder_block.5} parent=5 // pred_fallthru
        _
    $region6: #{encoder_block.5} parent=1 // loop_footer
      %s23 = sadd.s32 1, %s19
    $region7: #{encoder_block.5} parent=1 // loop_footer_branch
      %18 = sbr.rel target = $region3
    $region8: #{encoder_block.5} parent=1 // loop_exit
      _
    %878 = vsyncpa [#allocation3], 1
    %s879 = scalar_lea.sflag [#allocation3], 1
    %880 = vsyncpa %s879, 1

</llo_original>
